<compile_context>
chip_gen: v7x
topology: tpu7x:2x2x1
jax: 0.10.0
libtpu: 0.0.40
codegen_flags: <defaults>
</compile_context>

<pallas_src>
import jax
import jax.numpy as jnp
from jax.experimental import pallas as pl
from jax.experimental.pallas import tpu as pltpu

N_HAND = 778                 # MANO hand vertices
N_JOINTS = 21                # MANO hand joints
PN_IN = 3 + 1 + N_JOINTS * 3            # 67 features per point
PN_H1, PN_H2, PN_OUT = 64, 128, 1024    # PointNetEncoder(67, 1024) shared MLP
TOK_DIM = 512                            # backbone token width
HEAD_H1, HEAD_H2, HEAD_OUT = 256, 128, 3

N_PAD = 784                  # 778 rounded up to a multiple of 8 (pad rows = row 0 copies)

_CompilerParams = (getattr(pltpu, "CompilerParams", None)
                   or getattr(pltpu, "TPUCompilerParams", None))
_CostEstimate = getattr(pl, "CostEstimate", None)
_Buffered = getattr(pl, "Buffered", None)


# ------------------------------------------------------------------ params ---
def _linear_init(key, fan_in, fan_out):
    """Deterministic PyTorch-style Linear init: U(-1/sqrt(fan_in), 1/sqrt(fan_in))."""
    bound = 1.0 / float(fan_in) ** 0.5
    kw, kb = jax.random.split(key)
    w = jax.random.uniform(kw, (fan_in, fan_out), jnp.float32, -bound, bound)
    b = jax.random.uniform(kb, (1, fan_out), jnp.float32, -bound, bound)
    return w, b


def init_params(key):
    ks = jax.random.split(key, 6)
    # PointNetEncoder(67, 1024): shared per-point MLP 67 -> 64 -> 128 -> 1024, max-pool.
    # TODO(synk): exact HORT PointNetEncoder internals (BatchNorm/extra layers) are not
    # in this file; a standard PointNet shared-MLP + max-pool encoder is implemented.
    pn = (*_linear_init(ks[0], PN_IN, PN_H1),
          *_linear_init(ks[1], PN_H1, PN_H2),
          *_linear_init(ks[2], PN_H2, PN_OUT))
    # post_processor_trans: Linear(512,256)+ReLU -> Linear(256,128)+ReLU -> Linear(128,3)
    head = (*_linear_init(ks[3], TOK_DIM, HEAD_H1),
            *_linear_init(ks[4], HEAD_H1, HEAD_H2),
            *_linear_init(ks[5], HEAD_H2, HEAD_OUT))
    return pn, head


# --------------------------------------------------------- pointnet kernel ---
def hort_pointnet_kernel(v_ref, cb_ref, w14_ref, w2_ref, b2_ref, w3_ref, b3_ref,
                         feats_ref):
    # Layer 1 (folded feature construction): single K=4 MXU dot, f32.
    h = jnp.dot(v_ref[0], w14_ref[...], preferred_element_type=jnp.float32) + cb_ref[0]
    h = jnp.maximum(h, 0.0)                                           # (784, 64)
    # Layers 2/3: bf16 MXU operands, f32 accumulation; elementwise stays f32.
    h = jnp.dot(h.astype(jnp.bfloat16), w2_ref[...],
                preferred_element_type=jnp.float32) + b2_ref[...]
    h = jnp.maximum(h, 0.0)                                           # (784, 128)
    h = jnp.dot(h.astype(jnp.bfloat16), w3_ref[...],
                preferred_element_type=jnp.float32) + b3_ref[...]     # (784, 1024)
    # Max-pool over all (padded) points; pad rows duplicate row 0, so no mask needed.
    feats_ref[0] = jnp.max(h, axis=0, keepdims=True)                  # (1, 1024)


def _resident_spec(shape):
    """Grid-invariant weight/bias block: constant index_map, single-buffered."""
    kwargs = {}
    if _Buffered is not None:
        kwargs["pipeline_mode"] = _Buffered(1)
    return pl.BlockSpec(shape, lambda b: (0,) * len(shape), **kwargs)


def hort_pointnet_call(verts4, cbias, w14, w2, b2, w3, b3):
    B = verts4.shape[0]
    weights = (w14, w2, b2, w3, b3)

    cost = None
    if _CostEstimate is not None:
        flops = 2 * B * N_PAD * (4 * PN_H1 + PN_H1 * PN_H2 + PN_H2 * PN_OUT)
        bytes_accessed = (int(verts4.size) * 4 + int(cbias.size) * 4
                          + sum(int(w.size) * w.dtype.itemsize for w in weights)
                          + B * PN_OUT * 4)
        cost = _CostEstimate(flops=flops, transcendentals=0,
                             bytes_accessed=bytes_accessed)

    kwargs = {}
    if _CompilerParams is not None:
        # B is the only grid axis and is "parallel", so v7x's two TensorCores both
        # get work when B >= 2.
        # TODO(synk): for B == 1 on v7x, split the point axis into two parallel
        # halves (per-core partial max) and combine with jnp.maximum in the wrapper.
        kwargs["compiler_params"] = _CompilerParams(
            dimension_semantics=("parallel",))

    feats = pl.pallas_call(
        hort_pointnet_kernel,
        grid=(B,),
        in_specs=[pl.BlockSpec((1, N_PAD, 4), lambda b: (b, 0, 0)),     # [verts | idx]
                  pl.BlockSpec((1, 1, PN_H1), lambda b: (b, 0, 0)),     # folded layer-1 bias
                  ] + [_resident_spec(w.shape) for w in weights],
        out_specs=pl.BlockSpec((1, 1, PN_OUT), lambda b: (b, 0, 0)),
        out_shape=jax.ShapeDtypeStruct((B, 1, PN_OUT), jnp.float32),
        cost_estimate=cost,
        **kwargs,
    )(verts4, cbias, *weights)
    return feats[:, 0, :]                                              # (B, 1024)


# -------------------------------------------------------------- head kernel --
def hort_head_kernel(tok_ref, w1_ref, b1_ref, w2_ref, b2_ref, w3_ref, b3_ref,
                     out_ref):
    # post_processor_trans, batched over all B rows at once, f32 end-to-end.
    g = jnp.dot(tok_ref[...], w1_ref[...],
                preferred_element_type=jnp.float32) + b1_ref[...]
    g = jnp.maximum(g, 0.0)
    g = jnp.dot(g, w2_ref[...], preferred_element_type=jnp.float32) + b2_ref[...]
    g = jnp.maximum(g, 0.0)
    out_ref[...] = jnp.dot(g, w3_ref[...],
                           preferred_element_type=jnp.float32) + b3_ref[...]


def hort_head_call(tok, hw1, hb1, hw2, hb2, hw3, hb3):
    B = tok.shape[0]
    args = (tok, hw1, hb1, hw2, hb2, hw3, hb3)
    cost = None
    if _CostEstimate is not None:
        flops = 2 * B * (TOK_DIM * HEAD_H1 + HEAD_H1 * HEAD_H2 + HEAD_H2 * HEAD_OUT)
        bytes_accessed = (sum(int(a.size) * a.dtype.itemsize for a in args)
                          + B * HEAD_OUT * 4)
        cost = _CostEstimate(flops=flops, transcendentals=0,
                             bytes_accessed=bytes_accessed)
    return pl.pallas_call(
        hort_head_kernel,
        out_shape=jax.ShapeDtypeStruct((B, HEAD_OUT), jnp.float32),
        cost_estimate=cost,
    )(*args)                                                           # (B, 3)


# ----------------------------------------------------------------- forward ---
@jax.jit
def hort_forward(input_img, metas, tokens, pn_params, head_params):
    B = input_img.shape[0]
    verts = metas['right_hand_verts_3d']            # (B, 778, 3)
    palm = metas['right_hand_palm']                 # (B, 3)
    joints = metas['right_hand_joints_3d']          # (B, 21, 3)

    # TODO(synk): self.image_tokenizer / self.tokenizer / self.backbone /
    # self.post_processor / self.pointcloud_upsampler come from the tgs config
    # registry (architectures undefined in this file); the 512-wide
    # backbone+detokenize output is therefore supplied as `tokens`.

    w1, b1, w2, b2, w3, b3 = pn_params
    hw1, hb1, hw2, hb2, hw3, hb3 = head_params

    # Fold the HORT feature construction (palm-norm(3) | point-idx(1) | tip-norm(63))
    # into the first PointNet layer:
    #   feat @ W1 + b1  ==  [verts | idx] @ W14  +  cbias(batch)
    w1_tip = w1[4:4 + N_JOINTS * 3]                                    # (63, 64)
    w1v = w1[0:3] + w1_tip.reshape(N_JOINTS, 3, PN_H1).sum(axis=0)     # (3, 64)
    w14 = jnp.concatenate([w1v, w1[3:4]], axis=0)                      # (4, 64)
    cbias = b1 - palm @ w1[0:3] - joints.reshape(B, N_JOINTS * 3) @ w1_tip
    cbias = cbias.reshape(B, 1, PN_H1)                                 # (B, 1, 64)

    # [verts | point-idx/778]; pad rows 778..783 duplicate row 0 (coords AND idx)
    # so the max-pool result is unchanged without any in-kernel masking.
    idx = jnp.broadcast_to(
        (jnp.arange(N_HAND, dtype=jnp.float32) / float(N_HAND))[None, :, None],
        (B, N_HAND, 1))
    verts4 = jnp.concatenate([verts, idx], axis=-1)                    # (B, 778, 4)
    verts4 = jnp.concatenate(
        [verts4, jnp.broadcast_to(verts4[:, :1, :], (B, N_PAD - N_HAND, 4))],
        axis=1)                                                        # (B, 784, 4)

    hand_feats = hort_pointnet_call(
        verts4, cbias, w14,
        w2.astype(jnp.bfloat16), b2, w3.astype(jnp.bfloat16), b3)      # (B, 1024)

    # post_processor_trans on the last backbone token, one batched M=B launch.
    tok_last = tokens[:, -1, :]                                        # (B, 512) f32
    pred_obj_trans = hort_head_call(tok_last, hw1, hb1, hw2, hb2, hw3, hb3)

    return {
        'objtrans': pred_obj_trans,     # (B, 3)
        'handpalm': palm,               # (B, 3)
        'hand_feats': hand_feats,       # (B, 1024)
        # TODO(synk): 'pointclouds' / 'pointclouds_up' need the registry
        # post_processor / pointcloud_upsampler and are not produced here.
    }


# --------------------------------------------------------------- reference ---
def reference_forward(verts, palm, joints, tokens, pn_params, head_params):
    """Pure-JAX f32 reference mirroring the PyTorch forward (sanity check)."""
    B = verts.shape[0]
    w1, b1, w2, b2, w3, b3 = pn_params
    palm_norm = verts - palm[:, None, :]
    idx = (jnp.arange(N_HAND, dtype=jnp.float32) / float(N_HAND))[None, :, None]
    idx = jnp.broadcast_to(idx, (B, N_HAND, 1))
    tip = (verts[:, :, None, :] - joints[:, None, :, :]).reshape(B, N_HAND, -1)
    feat = jnp.concatenate([palm_norm, idx, tip], axis=-1)             # (B, 778, 67)
    h = jax.nn.relu(feat @ w1 + b1)
    h = jax.nn.relu(h @ w2 + b2)
    h = h @ w3 + b3
    hand_feats = jnp.max(h, axis=1)
    hw1, hb1, hw2, hb2, hw3, hb3 = head_params
    t = tokens[:, -1, :]
    g = jax.nn.relu(t @ hw1 + hb1)
    g = jax.nn.relu(g @ hw2 + hb2)
    trans = g @ hw3 + hb3
    return hand_feats, trans


# -------------------------------------------------------------------- main ---
if __name__ == "__main__":
    key = jax.random.PRNGKey(0)
    k_param, k_img, k_v, k_j, k_p, k_t, k_c = jax.random.split(key, 7)

    B, T = 2, 8
    pn_params, head_params = init_params(k_param)

    input_img = jax.random.normal(k_img, (B, 3, 16, 16), jnp.float32)   # NCHW (batch only used)
    metas = {
        'right_hand_verts_3d': jax.random.normal(k_v, (B, N_HAND, 3), jnp.float32) * 0.1,
        'right_hand_joints_3d': jax.random.normal(k_j, (B, N_JOINTS, 3), jnp.float32) * 0.1,
        'right_hand_palm': jax.random.normal(k_p, (B, 3), jnp.float32) * 0.1,
        'cam_intr': jax.random.normal(k_c, (B, 3, 3), jnp.float32),
    }
    tokens = jax.random.normal(k_t, (B, T, TOK_DIM), jnp.float32)

    out = hort_forward(input_img, metas, tokens, pn_params, head_params)
    jax.block_until_ready(out)

    assert out['objtrans'].shape == (B, HEAD_OUT)
    assert out['hand_feats'].shape == (B, PN_OUT)
    assert out['handpalm'].shape == (B, 3)

    # Numerical sanity check vs. f32 reference (PointNet layers 2/3 run in bf16).
    ref_feats, ref_trans = reference_forward(
        metas['right_hand_verts_3d'], metas['right_hand_palm'],
        metas['right_hand_joints_3d'], tokens, pn_params, head_params)
    err_f = float(jnp.max(jnp.abs(out['hand_feats'] - ref_feats)))
    err_t = float(jnp.max(jnp.abs(out['objtrans'] - ref_trans)))
    tol_f = 0.05 * float(jnp.max(jnp.abs(ref_feats))) + 0.05
    tol_t = 0.02 * float(jnp.max(jnp.abs(ref_trans))) + 0.02
    assert err_f <= tol_f, f"hand_feats mismatch: {err_f} > {tol_f}"
    assert err_t <= tol_t, f"objtrans mismatch: {err_t} > {tol_t}"

    print("KERNEL_OK")
</pallas_src>

<mosaic_0001>
module attributes {stable_mosaic.version = 11 : i64} {
  func.func @hort_head_kernel(%arg0: memref<2x512xf32, #tpu.memory_space<vmem>>, %arg1: memref<512x256xf32, #tpu.memory_space<vmem>>, %arg2: memref<1x256xf32, #tpu.memory_space<vmem>>, %arg3: memref<256x128xf32, #tpu.memory_space<vmem>>, %arg4: memref<1x128xf32, #tpu.memory_space<vmem>>, %arg5: memref<128x3xf32, #tpu.memory_space<vmem>>, %arg6: memref<1x3xf32, #tpu.memory_space<vmem>>, %arg7: memref<2x3xf32, #tpu.memory_space<vmem>>) attributes {dimension_semantics = [], scalar_prefetch = 0 : i64, scratch_operands = 0 : i64, tpu.core_type = #tpu.core_type<tc>} {
    %c0 = arith.constant 0 : index
    %c0_0 = arith.constant 0 : index
    %0 = vector.load %arg0[%c0, %c0_0] : memref<2x512xf32, #tpu.memory_space<vmem>>, vector<2x512xf32>
    %c0_1 = arith.constant 0 : index
    %c0_2 = arith.constant 0 : index
    %1 = vector.load %arg1[%c0_1, %c0_2] : memref<512x256xf32, #tpu.memory_space<vmem>>, vector<512x256xf32>
    %cst = arith.constant dense<0.000000e+00> : vector<2x256xf32>
    %2 = tpu.matmul %0, %1, %cst {dimension_numbers = #tpu.dot_dimension_numbers<[1], [0], [0], [1], [0, 0, 1, 1], [], []>} : vector<2x512xf32>, vector<512x256xf32>, vector<2x256xf32> -> vector<2x256xf32>
    %c0_3 = arith.constant 0 : index
    %c0_4 = arith.constant 0 : index
    %3 = vector.load %arg2[%c0_3, %c0_4] : memref<1x256xf32, #tpu.memory_space<vmem>>, vector<1x256xf32>
    %4 = vector.broadcast %3 : vector<1x256xf32> to vector<2x256xf32>
    %5 = arith.addf %2, %4 : vector<2x256xf32>
    %cst_5 = arith.constant 0.000000e+00 : f32
    %6 = vector.broadcast %cst_5 : f32 to vector<2x256xf32>
    %7 = arith.maximumf %5, %6 : vector<2x256xf32>
    %c0_6 = arith.constant 0 : index
    %c0_7 = arith.constant 0 : index
    %8 = vector.load %arg3[%c0_6, %c0_7] : memref<256x128xf32, #tpu.memory_space<vmem>>, vector<256x128xf32>
    %cst_8 = arith.constant dense<0.000000e+00> : vector<2x128xf32>
    %9 = tpu.matmul %7, %8, %cst_8 {dimension_numbers = #tpu.dot_dimension_numbers<[1], [0], [0], [1], [0, 0, 1, 1], [], []>} : vector<2x256xf32>, vector<256x128xf32>, vector<2x128xf32> -> vector<2x128xf32>
    %c0_9 = arith.constant 0 : index
    %c0_10 = arith.constant 0 : index
    %10 = vector.load %arg4[%c0_9, %c0_10] : memref<1x128xf32, #tpu.memory_space<vmem>>, vector<1x128xf32>
    %11 = vector.broadcast %10 : vector<1x128xf32> to vector<2x128xf32>
    %12 = arith.addf %9, %11 : vector<2x128xf32>
    %cst_11 = arith.constant 0.000000e+00 : f32
    %13 = vector.broadcast %cst_11 : f32 to vector<2x128xf32>
    %14 = arith.maximumf %12, %13 : vector<2x128xf32>
    %c0_12 = arith.constant 0 : index
    %c0_13 = arith.constant 0 : index
    %15 = vector.load %arg5[%c0_12, %c0_13] : memref<128x3xf32, #tpu.memory_space<vmem>>, vector<128x3xf32>
    %cst_14 = arith.constant dense<0.000000e+00> : vector<2x3xf32>
    %16 = tpu.matmul %14, %15, %cst_14 {dimension_numbers = #tpu.dot_dimension_numbers<[1], [0], [0], [1], [0, 0, 1, 1], [], []>} : vector<2x128xf32>, vector<128x3xf32>, vector<2x3xf32> -> vector<2x3xf32>
    %c0_15 = arith.constant 0 : index
    %c0_16 = arith.constant 0 : index
    %17 = vector.load %arg6[%c0_15, %c0_16] : memref<1x3xf32, #tpu.memory_space<vmem>>, vector<1x3xf32>
    %18 = vector.broadcast %17 : vector<1x3xf32> to vector<2x3xf32>
    %19 = arith.addf %16, %18 : vector<2x3xf32>
    %c0_17 = arith.constant 0 : index
    %c0_18 = arith.constant 0 : index
    %20 = vector.load %arg7[%c0_17, %c0_18] : memref<2x3xf32, #tpu.memory_space<vmem>>, vector<2x3xf32>
    tpu.vector_store %arg7[%c0_17, %c0_18], %19 {strides = array<i32>} : memref<2x3xf32, #tpu.memory_space<vmem>>, vector<2x3xf32>,
    return
  }
}

module attributes {stable_mosaic.version = 11 : i64} {
  func.func @hort_pointnet_kernel(%arg0: i32, %arg1: memref<1x784x4xf32, #tpu.memory_space<vmem>>, %arg2: memref<1x1x64xf32, #tpu.memory_space<vmem>>, %arg3: memref<4x64xf32, #tpu.memory_space<vmem>>, %arg4: memref<64x128xbf16, #tpu.memory_space<vmem>>, %arg5: memref<1x128xf32, #tpu.memory_space<vmem>>, %arg6: memref<128x1024xbf16, #tpu.memory_space<vmem>>, %arg7: memref<1x1024xf32, #tpu.memory_space<vmem>>, %arg8: memref<1x1x1024xf32, #tpu.memory_space<vmem>>) attributes {dimension_semantics = [#tpu.dimension_semantics<parallel>], iteration_bounds = array<i64: 2>, scalar_prefetch = 0 : i64, scratch_operands = 0 : i64, tpu.core_type = #tpu.core_type<tc>, window_params = [{transform_indices = @transform_0, window_bounds = array<i64: 1, 784, 4>}, {transform_indices = @transform_1, window_bounds = array<i64: 1, 1, 64>}, {pipeline_mode = #tpu.pipeline_mode<synchronous>, transform_indices = @transform_2, window_bounds = array<i64: 4, 64>}, {pipeline_mode = #tpu.pipeline_mode<synchronous>, transform_indices = @transform_3, window_bounds = array<i64: 64, 128>}, {pipeline_mode = #tpu.pipeline_mode<synchronous>, transform_indices = @transform_4, window_bounds = array<i64: 1, 128>}, {pipeline_mode = #tpu.pipeline_mode<synchronous>, transform_indices = @transform_5, window_bounds = array<i64: 128, 1024>}, {pipeline_mode = #tpu.pipeline_mode<synchronous>, transform_indices = @transform_6, window_bounds = array<i64: 1, 1024>}, {transform_indices = @transform_7, window_bounds = array<i64: 1, 1, 1024>}]} {
    %c0 = arith.constant 0 : index
    %c0_0 = arith.constant 0 : index
    %c0_1 = arith.constant 0 : index
    %0 = vector.load %arg1[%c0, %c0_0, %c0_1] : memref<1x784x4xf32, #tpu.memory_space<vmem>>, vector<1x784x4xf32>
    %1 = vector.shape_cast %0 : vector<1x784x4xf32> to vector<784x4xf32>
    %c0_2 = arith.constant 0 : index
    %c0_3 = arith.constant 0 : index
    %2 = vector.load %arg3[%c0_2, %c0_3] : memref<4x64xf32, #tpu.memory_space<vmem>>, vector<4x64xf32>
    %cst = arith.constant dense<0.000000e+00> : vector<784x64xf32>
    %3 = tpu.matmul %1, %2, %cst {dimension_numbers = #tpu.dot_dimension_numbers<[1], [0], [0], [1], [0, 0, 1, 1], [], []>} : vector<784x4xf32>, vector<4x64xf32>, vector<784x64xf32> -> vector<784x64xf32>
    %c0_4 = arith.constant 0 : index
    %c0_5 = arith.constant 0 : index
    %c0_6 = arith.constant 0 : index
    %4 = vector.load %arg2[%c0_4, %c0_5, %c0_6] : memref<1x1x64xf32, #tpu.memory_space<vmem>>, vector<1x1x64xf32>
    %5 = vector.shape_cast %4 : vector<1x1x64xf32> to vector<1x64xf32>
    %6 = vector.broadcast %5 : vector<1x64xf32> to vector<784x64xf32>
    %7 = arith.addf %3, %6 : vector<784x64xf32>
    %cst_7 = arith.constant 0.000000e+00 : f32
    %8 = vector.broadcast %cst_7 : f32 to vector<784x64xf32>
    %9 = arith.maximumf %7, %8 : vector<784x64xf32>
    %10 = arith.truncf %9 : vector<784x64xf32> to vector<784x64xbf16>
    %c0_8 = arith.constant 0 : index
    %c0_9 = arith.constant 0 : index
    %11 = vector.load %arg4[%c0_8, %c0_9] : memref<64x128xbf16, #tpu.memory_space<vmem>>, vector<64x128xbf16>
    %cst_10 = arith.constant dense<0.000000e+00> : vector<784x128xf32>
    %12 = tpu.matmul %10, %11, %cst_10 {dimension_numbers = #tpu.dot_dimension_numbers<[1], [0], [0], [1], [0, 0, 1, 1], [], []>} : vector<784x64xbf16>, vector<64x128xbf16>, vector<784x128xf32> -> vector<784x128xf32>
    %c0_11 = arith.constant 0 : index
    %c0_12 = arith.constant 0 : index
    %13 = vector.load %arg5[%c0_11, %c0_12] : memref<1x128xf32, #tpu.memory_space<vmem>>, vector<1x128xf32>
    %14 = vector.broadcast %13 : vector<1x128xf32> to vector<784x128xf32>
    %15 = arith.addf %12, %14 : vector<784x128xf32>
    %cst_13 = arith.constant 0.000000e+00 : f32
    %16 = vector.broadcast %cst_13 : f32 to vector<784x128xf32>
    %17 = arith.maximumf %15, %16 : vector<784x128xf32>
    %18 = arith.truncf %17 : vector<784x128xf32> to vector<784x128xbf16>
    %c0_14 = arith.constant 0 : index
    %c0_15 = arith.constant 0 : index
    %19 = vector.load %arg6[%c0_14, %c0_15] : memref<128x1024xbf16, #tpu.memory_space<vmem>>, vector<128x1024xbf16>
    %cst_16 = arith.constant dense<0.000000e+00> : vector<784x1024xf32>
    %20 = tpu.matmul %18, %19, %cst_16 {dimension_numbers = #tpu.dot_dimension_numbers<[1], [0], [0], [1], [0, 0, 1, 1], [], []>} : vector<784x128xbf16>, vector<128x1024xbf16>, vector<784x1024xf32> -> vector<784x1024xf32>
    %c0_17 = arith.constant 0 : index
    %c0_18 = arith.constant 0 : index
    %21 = vector.load %arg7[%c0_17, %c0_18] : memref<1x1024xf32, #tpu.memory_space<vmem>>, vector<1x1024xf32>
    %22 = vector.broadcast %21 : vector<1x1024xf32> to vector<784x1024xf32>
    %23 = arith.addf %20, %22 : vector<784x1024xf32>
    %cst_19 = arith.constant dense<0xFF800000> : vector<1024xf32>
    %24 = vector.multi_reduction <maximumf>, %23, %cst_19 [0] : vector<784x1024xf32> to vector<1024xf32>
    %25 = vector.shape_cast %24 : vector<1024xf32> to vector<1x1024xf32>
    %c0_20 = arith.constant 0 : index
    %c0_21 = arith.constant 0 : index
    %c0_22 = arith.constant 0 : index
    %26 = vector.load %arg8[%c0_20, %c0_21, %c0_22] : memref<1x1x1024xf32, #tpu.memory_space<vmem>>, vector<1x1x1024xf32>
    %27 = vector.shape_cast %26 : vector<1x1x1024xf32> to vector<1x1024xf32>
    %28 = vector.shape_cast %25 : vector<1x1024xf32> to vector<1x1x1024xf32>
    tpu.vector_store %arg8[%c0_20, %c0_21, %c0_22], %28 {strides = array<i32>} : memref<1x1x1024xf32, #tpu.memory_space<vmem>>, vector<1x1x1024xf32>,
    return
  }
  func.func @transform_0(%arg0: i32) -> (i32, i32, i32) {
    %c0_i32 = arith.constant 0 : i32
    %c0_i32_0 = arith.constant 0 : i32
    %c0_i32_1 = arith.constant 0 : i32
    return %arg0, %c0_i32, %c0_i32_0 : i32, i32, i32
  }
  func.func @transform_1(%arg0: i32) -> (i32, i32, i32) {
    %c0_i32 = arith.constant 0 : i32
    %c0_i32_0 = arith.constant 0 : i32
    %c0_i32_1 = arith.constant 0 : i32
    return %arg0, %c0_i32, %c0_i32_0 : i32, i32, i32
  }
  func.func @transform_2(%arg0: i32) -> (i32, i32) {
    %c0_i32 = arith.constant 0 : i32
    %c0_i32_0 = arith.constant 0 : i32
    %c0_i32_1 = arith.constant 0 : i32
    return %c0_i32, %c0_i32_0 : i32, i32
  }
  func.func @transform_3(%arg0: i32) -> (i32, i32) {
    %c0_i32 = arith.constant 0 : i32
    %c0_i32_0 = arith.constant 0 : i32
    %c0_i32_1 = arith.constant 0 : i32
    return %c0_i32, %c0_i32_0 : i32, i32
  }
  func.func @transform_4(%arg0: i32) -> (i32, i32) {
    %c0_i32 = arith.constant 0 : i32
    %c0_i32_0 = arith.constant 0 : i32
    %c0_i32_1 = arith.constant 0 : i32
    return %c0_i32, %c0_i32_0 : i32, i32
  }
  func.func @transform_5(%arg0: i32) -> (i32, i32) {
    %c0_i32 = arith.constant 0 : i32
    %c0_i32_0 = arith.constant 0 : i32
    %c0_i32_1 = arith.constant 0 : i32
    return %c0_i32, %c0_i32_0 : i32, i32
  }
  func.func @transform_6(%arg0: i32) -> (i32, i32) {
    %c0_i32 = arith.constant 0 : i32
    %c0_i32_0 = arith.constant 0 : i32
    %c0_i32_1 = arith.constant 0 : i32
    return %c0_i32, %c0_i32_0 : i32, i32
  }
  func.func @transform_7(%arg0: i32) -> (i32, i32, i32) {
    %c0_i32 = arith.constant 0 : i32
    %c0_i32_0 = arith.constant 0 : i32
    %c0_i32_1 = arith.constant 0 : i32
    return %arg0, %c0_i32, %c0_i32_0 : i32, i32, i32
  }
}

</mosaic_0001>

<llo_original>
// kernel: hort_forward.3
$region0: #{hort_forward.3}
  #allocation0 [shape = 'u32[]', space=smem, size = 0x4, offset = 0x4, fixed_abs, tag = 'smem constant byte address 0x4 - core index']
  #allocation1 [shape = 'u32[144,128]{1,0:T(1,128)}', space=vmem, size = 0x12000, scoped, tag = 'internal scratch']
  %s0 = inlined_call_operand.vmem [shape: f32[2,512], index: 0, kind: input, shape index: {}]
  %s1 = inlined_call_operand.vmem [shape: f32[512,256], index: 1, kind: input, shape index: {}]
  %s2 = inlined_call_operand.vmem [shape: f32[1,256], index: 2, kind: input, shape index: {}]
  %s3 = inlined_call_operand.vmem [shape: f32[256,128], index: 3, kind: input, shape index: {}]
  %s4 = inlined_call_operand.vmem [shape: f32[1,128], index: 4, kind: input, shape index: {}]
  %s5 = inlined_call_operand.vmem [shape: f32[128,3], index: 5, kind: input, shape index: {}]
  %s6 = inlined_call_operand.vmem [shape: f32[1,3], index: 6, kind: input, shape index: {}]
  %s7 = inlined_call_operand.hbm [shape: f32[2,3], index: 7, kind: output, shape index: {}]
  %s8 = sld [smem:[#allocation0]]
  $region38: #{hort_forward.3} parent=0
    _
  %s10 = ssub.s32 1, %s8
  %s11 = scalar_select 0, %s10, %s8
  $region1: #{hort_forward.3} parent=0
    #allocation2 [shape = 'u8[1024]{0}', space=vmem, size = 0x400, scoped, tag = 'output window, operand 0, single buffered']
    #allocation3 [shape = 's32[1]{0}', space=sflag, size = 0x4, scoped, tag = 'scoped memory for hort_forward.3']
    %12 = vsyncpa [#allocation3], 0
    // Predicated region
    $region2: #{hort_forward.3} parent=1 // pred_check
      _
    $region3: #{hort_forward.3} parent=1 // pred_check_branch
      %14 = sbr.rel (0) target = $region5
    $region4: #{hort_forward.3} parent=1 // pred_region
      _
    $region5: #{hort_forward.3} parent=1 // pred_fallthru
      _
    // Predicated region
    $region6: #{hort_forward.3} parent=1 // pred_check
      _
    $region7: #{hort_forward.3} parent=1 // pred_check_branch
      %16 = sbr.rel (0) target = $region9
    $region8: #{hort_forward.3} parent=1 // pred_region
      _
    $region9: #{hort_forward.3} parent=1 // pred_fallthru
      _
    // Predicated region
    $region10: #{hort_forward.3} parent=1 // pred_check
      _
    $region11: #{hort_forward.3} parent=1 // pred_check_branch
      %18 = sbr.rel (0) target = $region13
    $region12: #{hort_forward.3} parent=1 // pred_region
      _
    $region13: #{hort_forward.3} parent=1 // pred_fallthru
      _
    // Predicated region
    $region14: #{hort_forward.3} parent=1 // pred_check
      _
    $region15: #{hort_forward.3} parent=1 // pred_check_branch
      %20 = sbr.rel (0) target = $region17
    $region16: #{hort_forward.3} parent=1 // pred_region
      _
    $region17: #{hort_forward.3} parent=1 // pred_fallthru
      _
    // Predicated region
    $region18: #{hort_forward.3} parent=1 // pred_check
      _
    $region19: #{hort_forward.3} parent=1 // pred_check_branch
      %22 = sbr.rel (0) target = $region21
    $region20: #{hort_forward.3} parent=1 // pred_region
      _
    $region21: #{hort_forward.3} parent=1 // pred_fallthru
      _
    // Predicated region
    $region22: #{hort_forward.3} parent=1 // pred_check
      _
    $region23: #{hort_forward.3} parent=1 // pred_check_branch
      %24 = sbr.rel (0) target = $region25
    $region24: #{hort_forward.3} parent=1 // pred_region
      _
    $region25: #{hort_forward.3} parent=1 // pred_fallthru
      _
    // Predicated region
    $region26: #{hort_forward.3} parent=1 // pred_check
      _
    $region27: #{hort_forward.3} parent=1 // pred_check_branch
      %26 = sbr.rel (0) target = $region29
    $region28: #{hort_forward.3} parent=1 // pred_region
      _
    $region29: #{hort_forward.3} parent=1 // pred_fallthru
      _
    %v27 = vld [vmem:[%s0] sm:$0xff]
    %v28 = vld [vmem:[%s1] sm:$0xff]
    %v29 = vld [vmem:[%s1 + $0x8] sm:$0xff]
    %v30 = vld [vmem:[%s1 + $0x10] sm:$0xff]
    %v31 = vld [vmem:[%s1 + $0x18] sm:$0xff]
    %v32 = vld [vmem:[%s1 + $0x20] sm:$0xff]
    %v33 = vld [vmem:[%s1 + $0x28] sm:$0xff]
    %v34 = vld [vmem:[%s1 + $0x30] sm:$0xff]
    %v35 = vld [vmem:[%s1 + $0x38] sm:$0xff]
    %v36 = vld [vmem:[%s1 + $0x40] sm:$0xff]
    %v37 = vld [vmem:[%s1 + $0x48] sm:$0xff]
    %v38 = vld [vmem:[%s1 + $0x50] sm:$0xff]
    %v39 = vld [vmem:[%s1 + $0x58] sm:$0xff]
    %v40 = vld [vmem:[%s1 + $0x60] sm:$0xff]
    %v41 = vld [vmem:[%s1 + $0x68] sm:$0xff]
    %v42 = vld [vmem:[%s1 + $0x70] sm:$0xff]
    %v43 = vld [vmem:[%s1 + $0x78] sm:$0xff]
    %v44 = vld [vmem:[%s1 + $0x80] sm:$0xff]
    %v45 = vld [vmem:[%s1 + $0x88] sm:$0xff]
    %v46 = vld [vmem:[%s1 + $0x90] sm:$0xff]
    %v47 = vld [vmem:[%s1 + $0x98] sm:$0xff]
    %v48 = vld [vmem:[%s1 + $0xa0] sm:$0xff]
    %v49 = vld [vmem:[%s1 + $0xa8] sm:$0xff]
    %v50 = vld [vmem:[%s1 + $0xb0] sm:$0xff]
    %v51 = vld [vmem:[%s1 + $0xb8] sm:$0xff]
    %v52 = vld [vmem:[%s1 + $0xc0] sm:$0xff]
    %v53 = vld [vmem:[%s1 + $0xc8] sm:$0xff]
    %v54 = vld [vmem:[%s1 + $0xd0] sm:$0xff]
    %v55 = vld [vmem:[%s1 + $0xd8] sm:$0xff]
    %v56 = vld [vmem:[%s1 + $0xe0] sm:$0xff]
    %v57 = vld [vmem:[%s1 + $0xe8] sm:$0xff]
    %v58 = vld [vmem:[%s1 + $0xf0] sm:$0xff]
    %v59 = vld [vmem:[%s1 + $0xf8] sm:$0xff]
    %v60 = vld [vmem:[%s1 + $0x100] sm:$0xff]
    %v61 = vld [vmem:[%s1 + $0x108] sm:$0xff]
    %v62 = vld [vmem:[%s1 + $0x110] sm:$0xff]
    %v63 = vld [vmem:[%s1 + $0x118] sm:$0xff]
    %v64 = vld [vmem:[%s1 + $0x120] sm:$0xff]
    %v65 = vld [vmem:[%s1 + $0x128] sm:$0xff]
    %v66 = vld [vmem:[%s1 + $0x130] sm:$0xff]
    %v67 = vld [vmem:[%s1 + $0x138] sm:$0xff]
    %v68 = vld [vmem:[%s1 + $0x140] sm:$0xff]
    %v69 = vld [vmem:[%s1 + $0x148] sm:$0xff]
    %v70 = vld [vmem:[%s1 + $0x150] sm:$0xff]
    %v71 = vld [vmem:[%s1 + $0x158] sm:$0xff]
    %v72 = vld [vmem:[%s1 + $0x160] sm:$0xff]
    %v73 = vld [vmem:[%s1 + $0x168] sm:$0xff]
    %v74 = vld [vmem:[%s1 + $0x170] sm:$0xff]
    %v75 = vld [vmem:[%s1 + $0x178] sm:$0xff]
    %v76 = vld [vmem:[%s1 + $0x180] sm:$0xff]
    %v77 = vld [vmem:[%s1 + $0x188] sm:$0xff]
    %v78 = vld [vmem:[%s1 + $0x190] sm:$0xff]
    %v79 = vld [vmem:[%s1 + $0x198] sm:$0xff]
    %v80 = vld [vmem:[%s1 + $0x1a0] sm:$0xff]
    %v81 = vld [vmem:[%s1 + $0x1a8] sm:$0xff]
    %v82 = vld [vmem:[%s1 + $0x1b0] sm:$0xff]
    %v83 = vld [vmem:[%s1 + $0x1b8] sm:$0xff]
    %v84 = vld [vmem:[%s1 + $0x1c0] sm:$0xff]
    %v85 = vld [vmem:[%s1 + $0x1c8] sm:$0xff]
    %v86 = vld [vmem:[%s1 + $0x1d0] sm:$0xff]
    %v87 = vld [vmem:[%s1 + $0x1d8] sm:$0xff]
    %v88 = vld [vmem:[%s1 + $0x1e0] sm:$0xff]
    %v89 = vld [vmem:[%s1 + $0x1e8] sm:$0xff]
    %v90 = vld [vmem:[%s1 + $0x1f0] sm:$0xff]
    %v91 = vld [vmem:[%s1 + $0x1f8] sm:$0xff]
    %v92 = vld [vmem:[%s1 + $0x200] sm:$0xff]
    %v93 = vld [vmem:[%s1 + $0x208] sm:$0xff]
    %v94 = vld [vmem:[%s1 + $0x210] sm:$0xff]
    %v95 = vld [vmem:[%s1 + $0x218] sm:$0xff]
    %v96 = vld [vmem:[%s1 + $0x220] sm:$0xff]
    %v97 = vld [vmem:[%s1 + $0x228] sm:$0xff]
    %v98 = vld [vmem:[%s1 + $0x230] sm:$0xff]
    %v99 = vld [vmem:[%s1 + $0x238] sm:$0xff]
    %v100 = vld [vmem:[%s1 + $0x240] sm:$0xff]
    %v101 = vld [vmem:[%s1 + $0x248] sm:$0xff]
    %v102 = vld [vmem:[%s1 + $0x250] sm:$0xff]
    %v103 = vld [vmem:[%s1 + $0x258] sm:$0xff]
    %v104 = vld [vmem:[%s1 + $0x260] sm:$0xff]
    %v105 = vld [vmem:[%s1 + $0x268] sm:$0xff]
    %v106 = vld [vmem:[%s1 + $0x270] sm:$0xff]
    %v107 = vld [vmem:[%s1 + $0x278] sm:$0xff]
    %v108 = vld [vmem:[%s1 + $0x280] sm:$0xff]
    %v109 = vld [vmem:[%s1 + $0x288] sm:$0xff]
    %v110 = vld [vmem:[%s1 + $0x290] sm:$0xff]
    %v111 = vld [vmem:[%s1 + $0x298] sm:$0xff]
    %v112 = vld [vmem:[%s1 + $0x2a0] sm:$0xff]
    %v113 = vld [vmem:[%s1 + $0x2a8] sm:$0xff]
    %v114 = vld [vmem:[%s1 + $0x2b0] sm:$0xff]
    %v115 = vld [vmem:[%s1 + $0x2b8] sm:$0xff]
    %v116 = vld [vmem:[%s1 + $0x2c0] sm:$0xff]
    %v117 = vld [vmem:[%s1 + $0x2c8] sm:$0xff]
    %v118 = vld [vmem:[%s1 + $0x2d0] sm:$0xff]
    %v119 = vld [vmem:[%s1 + $0x2d8] sm:$0xff]
    %v120 = vld [vmem:[%s1 + $0x2e0] sm:$0xff]
    %v121 = vld [vmem:[%s1 + $0x2e8] sm:$0xff]
    %v122 = vld [vmem:[%s1 + $0x2f0] sm:$0xff]
    %v123 = vld [vmem:[%s1 + $0x2f8] sm:$0xff]
    %v124 = vld [vmem:[%s1 + $0x300] sm:$0xff]
    %v125 = vld [vmem:[%s1 + $0x308] sm:$0xff]
    %v126 = vld [vmem:[%s1 + $0x310] sm:$0xff]
    %v127 = vld [vmem:[%s1 + $0x318] sm:$0xff]
    %v128 = vld [vmem:[%s1 + $0x320] sm:$0xff]
    %v129 = vld [vmem:[%s1 + $0x328] sm:$0xff]
    %v130 = vld [vmem:[%s1 + $0x330] sm:$0xff]
    %v131 = vld [vmem:[%s1 + $0x338] sm:$0xff]
    %v132 = vld [vmem:[%s1 + $0x340] sm:$0xff]
    %v133 = vld [vmem:[%s1 + $0x348] sm:$0xff]
    %v134 = vld [vmem:[%s1 + $0x350] sm:$0xff]
    %v135 = vld [vmem:[%s1 + $0x358] sm:$0xff]
    %v136 = vld [vmem:[%s1 + $0x360] sm:$0xff]
    %v137 = vld [vmem:[%s1 + $0x368] sm:$0xff]
    %v138 = vld [vmem:[%s1 + $0x370] sm:$0xff]
    %v139 = vld [vmem:[%s1 + $0x378] sm:$0xff]
    %v140 = vld [vmem:[%s1 + $0x380] sm:$0xff]
    %v141 = vld [vmem:[%s1 + $0x388] sm:$0xff]
    %v142 = vld [vmem:[%s1 + $0x390] sm:$0xff]
    %v143 = vld [vmem:[%s1 + $0x398] sm:$0xff]
    %v144 = vld [vmem:[%s1 + $0x3a0] sm:$0xff]
    %v145 = vld [vmem:[%s1 + $0x3a8] sm:$0xff]
    %v146 = vld [vmem:[%s1 + $0x3b0] sm:$0xff]
    %v147 = vld [vmem:[%s1 + $0x3b8] sm:$0xff]
    %v148 = vld [vmem:[%s1 + $0x3c0] sm:$0xff]
    %v149 = vld [vmem:[%s1 + $0x3c8] sm:$0xff]
    %v150 = vld [vmem:[%s1 + $0x3d0] sm:$0xff]
    %v151 = vld [vmem:[%s1 + $0x3d8] sm:$0xff]
    %v152 = vld [vmem:[%s1 + $0x3e0] sm:$0xff]
    %v153 = vld [vmem:[%s1 + $0x3e8] sm:$0xff]
    %v154 = vld [vmem:[%s1 + $0x3f0] sm:$0xff]
    %v155 = vld [vmem:[%s1 + $0x3f8] sm:$0xff]
    %v156 = vld [vmem:[%s2] sm:$0x3]
    %v158 = vlaneseq
    %v159 = vshrl.u32 %v158, 7
    %v160 = vsub.s32 0, %v159
    %v161 = vrot.slane %v156, %v160
    %v162 = vlaneseq
    %v163 = vshrl.u32 %v162, 7
    %v164 = vsub.s32 1, %v163
    %v165 = vrot.slane %v156, %v164
    %v169 = vcombine.high %v27, %v27
    %v171 = vunpack.c.l.s4 1983009808
    %v172 = vunpack.c.0.s8 %v171
    %v173 = vlaneseq
    %v174 = vshrl.u32 %v173, 7
    %v175 = vsub.s32 %v172, %v174
    %v176 = vrot.slane %v27, %v175
    %v178 = vunpack.c.l.s4 1983009808
    %v179 = vunpack.c.0.s8 %v178
    %v180 = vlaneseq
    %v181 = vshrl.u32 %v180, 7
    %v182 = vsub.s32 %v179, %v181
    %v183 = vrot.slane %v169, %v182
    %v184 = vcombine.high %v176, %v176
    %v185 = vcombine.high %v183, %v183
    %190 = vmatprep.subr.mxu0 %v29
    %191 = vmatpush1.msra.mxu0 %v28
    %192 = vmatprep.subr.mxu0 %v31
    %193 = vmatpush1.msra.mxu0 %v30
    %194 = vmatprep.subr.mxu0 %v33
    %195 = vmatpush1.msra.mxu0 %v32
    %196 = vmatprep.subr.mxu0 %v35
    %197 = vmatpush1.msra.mxu0 %v34
    %198 = vmatprep.subr.mxu0 %v37
    %199 = vmatpush1.msra.mxu0 %v36
    %200 = vmatprep.subr.mxu0 %v39
    %201 = vmatpush1.msra.mxu0 %v38
    %202 = vmatprep.subr.mxu0 %v41
    %203 = vmatpush1.msra.mxu0 %v40
    %204 = vmatprep.subr.mxu0 %v43
    %205 = vmatpush1.msra.mxu0 %v42
    %206 = vmatprep.subr.mxu0 %v45
    %207 = vmatpush1.msra.mxu0 %v44
    %208 = vmatprep.subr.mxu0 %v47
    %209 = vmatpush1.msra.mxu0 %v46
    %210 = vmatprep.subr.mxu0 %v49
    %211 = vmatpush1.msra.mxu0 %v48
    %212 = vmatprep.subr.mxu0 %v51
    %213 = vmatpush1.msra.mxu0 %v50
    %214 = vmatprep.subr.mxu0 %v53
    %215 = vmatpush1.msra.mxu0 %v52
    %216 = vmatprep.subr.mxu0 %v55
    %217 = vmatpush1.msra.mxu0 %v54
    %218 = vmatprep.subr.mxu0 %v57
    %219 = vmatpush1.msra.mxu0 %v56
    %220 = vmatprep.subr.mxu0 %v59
    %221 = vmatpush1.msra.mxu0 %v58
    %222 = vmatprep.subr.mxu0 %v61
    %223 = vmatpush1.msra.mxu0 %v60
    %224 = vmatprep.subr.mxu0 %v63
    %225 = vmatpush1.msra.mxu0 %v62
    %226 = vmatprep.subr.mxu0 %v65
    %227 = vmatpush1.msra.mxu0 %v64
    %228 = vmatprep.subr.mxu0 %v67
    %229 = vmatpush1.msra.mxu0 %v66
    %230 = vmatprep.subr.mxu0 %v69
    %231 = vmatpush1.msra.mxu0 %v68
    %232 = vmatprep.subr.mxu0 %v71
    %233 = vmatpush1.msra.mxu0 %v70
    %234 = vmatprep.subr.mxu0 %v73
    %235 = vmatpush1.msra.mxu0 %v72
    %236 = vmatprep.subr.mxu0 %v75
    %237 = vmatpush1.msra.mxu0 %v74
    %238 = vmatprep.subr.mxu0 %v77
    %239 = vmatpush1.msra.mxu0 %v76
    %240 = vmatprep.subr.mxu0 %v79
    %241 = vmatpush1.msra.mxu0 %v78
    %242 = vmatprep.subr.mxu0 %v81
    %243 = vmatpush1.msra.mxu0 %v80
    %244 = vmatprep.subr.mxu0 %v83
    %245 = vmatpush1.msra.mxu0 %v82
    %246 = vmatprep.subr.mxu0 %v85
    %247 = vmatpush1.msra.mxu0 %v84
    %248 = vmatprep.subr.mxu0 %v87
    %249 = vmatpush1.msra.mxu0 %v86
    %250 = vmatprep.subr.mxu0 %v89
    %251 = vmatpush1.msra.mxu0 %v88
    %252 = vmatprep.subr.mxu0 %v91
    %253 = vmatpush1.msra.mxu0 %v90
    %254 = vmatprep.mubr.f32.mxu0 %v184
    %255 = vmatmul.mubr.f32.gmra.mrb[0].mxu0 %v176
    %v256 = vpop.f32.mrb[0].mxu0
    %v257 = vadd.f32 %v161, %v256
    %v258 = vpop.f32.mrb[0].mxu0
    %v259 = vadd.f32 %v165, %v258
    %260 = vdwg.mxu0
    %261 = vmatprep.subr.mxu0 %v93
    %262 = vmatpush1.msra.mxu0 %v92
    %263 = vmatprep.subr.mxu0 %v95
    %264 = vmatpush1.msra.mxu0 %v94
    %265 = vmatprep.subr.mxu0 %v97
    %266 = vmatpush1.msra.mxu0 %v96
    %267 = vmatprep.subr.mxu0 %v99
    %268 = vmatpush1.msra.mxu0 %v98
    %269 = vmatprep.subr.mxu0 %v101
    %270 = vmatpush1.msra.mxu0 %v100
    %271 = vmatprep.subr.mxu0 %v103
    %272 = vmatpush1.msra.mxu0 %v102
    %273 = vmatprep.subr.mxu0 %v105
    %274 = vmatpush1.msra.mxu0 %v104
    %275 = vmatprep.subr.mxu0 %v107
    %276 = vmatpush1.msra.mxu0 %v106
    %277 = vmatprep.subr.mxu0 %v109
    %278 = vmatpush1.msra.mxu0 %v108
    %279 = vmatprep.subr.mxu0 %v111
    %280 = vmatpush1.msra.mxu0 %v110
    %281 = vmatprep.subr.mxu0 %v113
    %282 = vmatpush1.msra.mxu0 %v112
    %283 = vmatprep.subr.mxu0 %v115
    %284 = vmatpush1.msra.mxu0 %v114
    %285 = vmatprep.subr.mxu0 %v117
    %286 = vmatpush1.msra.mxu0 %v116
    %287 = vmatprep.subr.mxu0 %v119
    %288 = vmatpush1.msra.mxu0 %v118
    %289 = vmatprep.subr.mxu0 %v121
    %290 = vmatpush1.msra.mxu0 %v120
    %291 = vmatprep.subr.mxu0 %v123
    %292 = vmatpush1.msra.mxu0 %v122
    %293 = vmatprep.subr.mxu0 %v125
    %294 = vmatpush1.msra.mxu0 %v124
    %295 = vmatprep.subr.mxu0 %v127
    %296 = vmatpush1.msra.mxu0 %v126
    %297 = vmatprep.subr.mxu0 %v129
    %298 = vmatpush1.msra.mxu0 %v128
    %299 = vmatprep.subr.mxu0 %v131
    %300 = vmatpush1.msra.mxu0 %v130
    %301 = vmatprep.subr.mxu0 %v133
    %302 = vmatpush1.msra.mxu0 %v132
    %303 = vmatprep.subr.mxu0 %v135
    %304 = vmatpush1.msra.mxu0 %v134
    %305 = vmatprep.subr.mxu0 %v137
    %306 = vmatpush1.msra.mxu0 %v136
    %307 = vmatprep.subr.mxu0 %v139
    %308 = vmatpush1.msra.mxu0 %v138
    %309 = vmatprep.subr.mxu0 %v141
    %310 = vmatpush1.msra.mxu0 %v140
    %311 = vmatprep.subr.mxu0 %v143
    %312 = vmatpush1.msra.mxu0 %v142
    %313 = vmatprep.subr.mxu0 %v145
    %314 = vmatpush1.msra.mxu0 %v144
    %315 = vmatprep.subr.mxu0 %v147
    %316 = vmatpush1.msra.mxu0 %v146
    %317 = vmatprep.subr.mxu0 %v149
    %318 = vmatpush1.msra.mxu0 %v148
    %319 = vmatprep.subr.mxu0 %v151
    %320 = vmatpush1.msra.mxu0 %v150
    %321 = vmatprep.subr.mxu0 %v153
    %322 = vmatpush1.msra.mxu0 %v152
    %323 = vmatprep.subr.mxu0 %v155
    %324 = vmatpush1.msra.mxu0 %v154
    %325 = vmatprep.mubr.f32.mxu0 %v185
    %326 = vmatmul.mubr.f32.gmra.mrb[0].mxu0 %v183
    %v327 = vpop.f32.mrb[0].mxu0
    %v328 = vadd.f32 %v257, %v327
    %v329 = vpop.f32.mrb[0].mxu0
    %v330 = vadd.f32 %v259, %v329
    %331 = vdwg.mxu0
    %v332 = vmax.f32 %v328, 0.0
    %v333 = vmax.f32 %v330, 0.0
    %v334 = vld [vmem:[%s3] sm:$0xff]
    %v335 = vld [vmem:[%s3 + $0x8] sm:$0xff]
    %v336 = vld [vmem:[%s3 + $0x10] sm:$0xff]
    %v337 = vld [vmem:[%s3 + $0x18] sm:$0xff]
    %v338 = vld [vmem:[%s3 + $0x20] sm:$0xff]
    %v339 = vld [vmem:[%s3 + $0x28] sm:$0xff]
    %v340 = vld [vmem:[%s3 + $0x30] sm:$0xff]
    %v341 = vld [vmem:[%s3 + $0x38] sm:$0xff]
    %v342 = vld [vmem:[%s3 + $0x40] sm:$0xff]
    %v343 = vld [vmem:[%s3 + $0x48] sm:$0xff]
    %v344 = vld [vmem:[%s3 + $0x50] sm:$0xff]
    %v345 = vld [vmem:[%s3 + $0x58] sm:$0xff]
    %v346 = vld [vmem:[%s3 + $0x60] sm:$0xff]
    %v347 = vld [vmem:[%s3 + $0x68] sm:$0xff]
    %v348 = vld [vmem:[%s3 + $0x70] sm:$0xff]
    %v349 = vld [vmem:[%s3 + $0x78] sm:$0xff]
    %v350 = vld [vmem:[%s3 + $0x80] sm:$0xff]
    %v351 = vld [vmem:[%s3 + $0x88] sm:$0xff]
    %v352 = vld [vmem:[%s3 + $0x90] sm:$0xff]
    %v353 = vld [vmem:[%s3 + $0x98] sm:$0xff]
    %v354 = vld [vmem:[%s3 + $0xa0] sm:$0xff]
    %v355 = vld [vmem:[%s3 + $0xa8] sm:$0xff]
    %v356 = vld [vmem:[%s3 + $0xb0] sm:$0xff]
    %v357 = vld [vmem:[%s3 + $0xb8] sm:$0xff]
    %v358 = vld [vmem:[%s3 + $0xc0] sm:$0xff]
    %v359 = vld [vmem:[%s3 + $0xc8] sm:$0xff]
    %v360 = vld [vmem:[%s3 + $0xd0] sm:$0xff]
    %v361 = vld [vmem:[%s3 + $0xd8] sm:$0xff]
    %v362 = vld [vmem:[%s3 + $0xe0] sm:$0xff]
    %v363 = vld [vmem:[%s3 + $0xe8] sm:$0xff]
    %v364 = vld [vmem:[%s3 + $0xf0] sm:$0xff]
    %v365 = vld [vmem:[%s3 + $0xf8] sm:$0xff]
    %v366 = vld [vmem:[%s4] sm:$0x1]
    %v368 = vlaneseq
    %v369 = vshrl.u32 %v368, 7
    %v370 = vsub.s32 0, %v369
    %v371 = vrot.slane %v366, %v370
    %373 = vmatprep.subr.mxu0 0.0
    %374 = vmatpush1.msra.mxu0 %v334
    %375 = vmatprep.subr.mxu0 0.0
    %376 = vmatpush1.msra.mxu0 %v335
    %377 = vmatprep.subr.mxu0 0.0
    %378 = vmatpush1.msra.mxu0 %v336
    %379 = vmatprep.subr.mxu0 0.0
    %380 = vmatpush1.msra.mxu0 %v337
    %381 = vmatprep.subr.mxu0 0.0
    %382 = vmatpush1.msra.mxu0 %v338
    %383 = vmatprep.subr.mxu0 0.0
    %384 = vmatpush1.msra.mxu0 %v339
    %385 = vmatprep.subr.mxu0 0.0
    %386 = vmatpush1.msra.mxu0 %v340
    %387 = vmatprep.subr.mxu0 0.0
    %388 = vmatpush1.msra.mxu0 %v341
    %389 = vmatprep.subr.mxu0 0.0
    %390 = vmatpush1.msra.mxu0 %v342
    %391 = vmatprep.subr.mxu0 0.0
    %392 = vmatpush1.msra.mxu0 %v343
    %393 = vmatprep.subr.mxu0 0.0
    %394 = vmatpush1.msra.mxu0 %v344
    %395 = vmatprep.subr.mxu0 0.0
    %396 = vmatpush1.msra.mxu0 %v345
    %397 = vmatprep.subr.mxu0 0.0
    %398 = vmatpush1.msra.mxu0 %v346
    %399 = vmatprep.subr.mxu0 0.0
    %400 = vmatpush1.msra.mxu0 %v347
    %401 = vmatprep.subr.mxu0 0.0
    %402 = vmatpush1.msra.mxu0 %v348
    %403 = vmatprep.subr.mxu0 0.0
    %404 = vmatpush1.msra.mxu0 %v349
    %405 = vmatprep.subr.mxu0 0.0
    %406 = vmatpush1.msra.mxu0 %v350
    %407 = vmatprep.subr.mxu0 0.0
    %408 = vmatpush1.msra.mxu0 %v351
    %409 = vmatprep.subr.mxu0 0.0
    %410 = vmatpush1.msra.mxu0 %v352
    %411 = vmatprep.subr.mxu0 0.0
    %412 = vmatpush1.msra.mxu0 %v353
    %413 = vmatprep.subr.mxu0 0.0
    %414 = vmatpush1.msra.mxu0 %v354
    %415 = vmatprep.subr.mxu0 0.0
    %416 = vmatpush1.msra.mxu0 %v355
    %417 = vmatprep.subr.mxu0 0.0
    %418 = vmatpush1.msra.mxu0 %v356
    %419 = vmatprep.subr.mxu0 0.0
    %420 = vmatpush1.msra.mxu0 %v357
    %421 = vmatprep.subr.mxu0 0.0
    %422 = vmatpush1.msra.mxu0 %v358
    %423 = vmatprep.subr.mxu0 0.0
    %424 = vmatpush1.msra.mxu0 %v359
    %425 = vmatprep.subr.mxu0 0.0
    %426 = vmatpush1.msra.mxu0 %v360
    %427 = vmatprep.subr.mxu0 0.0
    %428 = vmatpush1.msra.mxu0 %v361
    %429 = vmatprep.subr.mxu0 0.0
    %430 = vmatpush1.msra.mxu0 %v362
    %431 = vmatprep.subr.mxu0 0.0
    %432 = vmatpush1.msra.mxu0 %v363
    %433 = vmatprep.subr.mxu0 0.0
    %434 = vmatpush1.msra.mxu0 %v364
    %435 = vmatprep.subr.mxu0 0.0
    %436 = vmatpush1.msra.mxu0 %v365
    %437 = vmatprep.mubr.f32.mxu0 %v333
    %438 = vmatmul.mubr.f32.gmra.mrb[0].mxu0 %v332
    %v439 = vpop.f32.mrb[0].mxu0
    %v440 = vadd.f32 %v371, %v439
    %v441 = vpop.f32.mrb[0].mxu0
    %442 = vdwg.mxu0
    %v443 = vmax.f32 %v440, 0.0
    %v444 = vld [vmem:[%s5] sm:$0xff]
    %v445 = vld [vmem:[%s5 + $0x8] sm:$0xff]
    %v446 = vld [vmem:[%s5 + $0x10] sm:$0xff]
    %v447 = vld [vmem:[%s5 + $0x18] sm:$0xff]
    %v448 = vld [vmem:[%s5 + $0x20] sm:$0xff]
    %v449 = vld [vmem:[%s5 + $0x28] sm:$0xff]
    %v450 = vld [vmem:[%s5 + $0x30] sm:$0xff]
    %v451 = vld [vmem:[%s5 + $0x38] sm:$0xff]
    %v452 = vld [vmem:[%s5 + $0x40] sm:$0xff]
    %v453 = vld [vmem:[%s5 + $0x48] sm:$0xff]
    %v454 = vld [vmem:[%s5 + $0x50] sm:$0xff]
    %v455 = vld [vmem:[%s5 + $0x58] sm:$0xff]
    %v456 = vld [vmem:[%s5 + $0x60] sm:$0xff]
    %v457 = vld [vmem:[%s5 + $0x68] sm:$0xff]
    %v458 = vld [vmem:[%s5 + $0x70] sm:$0xff]
    %v459 = vld [vmem:[%s5 + $0x78] sm:$0xff]
    %v460 = vld [vmem:[%s6] sm:$0x1]
    %v462 = vlaneseq
    %v463 = vshrl.u32 %v462, 7
    %v464 = vsub.s32 0, %v463
    %v465 = vrot.slane %v460, %v464
    %467 = vmatprep.subr.mxu0 0.0
    %468 = vmatpush1.msra.mxu0 %v444
    %469 = vmatprep.subr.mxu0 0.0
    %470 = vmatpush1.msra.mxu0 %v445
    %471 = vmatprep.subr.mxu0 0.0
    %472 = vmatpush1.msra.mxu0 %v446
    %473 = vmatprep.subr.mxu0 0.0
    %474 = vmatpush1.msra.mxu0 %v447
    %475 = vmatprep.subr.mxu0 0.0
    %476 = vmatpush1.msra.mxu0 %v448
    %477 = vmatprep.subr.mxu0 0.0
    %478 = vmatpush1.msra.mxu0 %v449
    %479 = vmatprep.subr.mxu0 0.0
    %480 = vmatpush1.msra.mxu0 %v450
    %481 = vmatprep.subr.mxu0 0.0
    %482 = vmatpush1.msra.mxu0 %v451
    %483 = vmatprep.subr.mxu0 0.0
    %484 = vmatpush1.msra.mxu0 %v452
    %485 = vmatprep.subr.mxu0 0.0
    %486 = vmatpush1.msra.mxu0 %v453
    %487 = vmatprep.subr.mxu0 0.0
    %488 = vmatpush1.msra.mxu0 %v454
    %489 = vmatprep.subr.mxu0 0.0
    %490 = vmatpush1.msra.mxu0 %v455
    %491 = vmatprep.subr.mxu0 0.0
    %492 = vmatpush1.msra.mxu0 %v456
    %493 = vmatprep.subr.mxu0 0.0
    %494 = vmatpush1.msra.mxu0 %v457
    %495 = vmatprep.subr.mxu0 0.0
    %496 = vmatpush1.msra.mxu0 %v458
    %497 = vmatprep.subr.mxu0 0.0
    %498 = vmatpush1.msra.mxu0 %v459
    %499 = vmatprep.subr.mxu0 0.0
    %500 = vmatpush1.msra.mxu0 0.0
    %501 = vmatprep.subr.mxu0 0.0
    %502 = vmatpush1.msra.mxu0 0.0
    %503 = vmatprep.subr.mxu0 0.0
    %504 = vmatpush1.msra.mxu0 0.0
    %505 = vmatprep.subr.mxu0 0.0
    %506 = vmatpush1.msra.mxu0 0.0
    %507 = vmatprep.subr.mxu0 0.0
    %508 = vmatpush1.msra.mxu0 0.0
    %509 = vmatprep.subr.mxu0 0.0
    %510 = vmatpush1.msra.mxu0 0.0
    %511 = vmatprep.subr.mxu0 0.0
    %512 = vmatpush1.msra.mxu0 0.0
    %513 = vmatprep.subr.mxu0 0.0
    %514 = vmatpush1.msra.mxu0 0.0
    %515 = vmatprep.subr.mxu0 0.0
    %516 = vmatpush1.msra.mxu0 0.0
    %517 = vmatprep.subr.mxu0 0.0
    %518 = vmatpush1.msra.mxu0 0.0
    %519 = vmatprep.subr.mxu0 0.0
    %520 = vmatpush1.msra.mxu0 0.0
    %521 = vmatprep.subr.mxu0 0.0
    %522 = vmatpush1.msra.mxu0 0.0
    %523 = vmatprep.subr.mxu0 0.0
    %524 = vmatpush1.msra.mxu0 0.0
    %525 = vmatprep.subr.mxu0 0.0
    %526 = vmatpush1.msra.mxu0 0.0
    %527 = vmatprep.subr.mxu0 0.0
    %528 = vmatpush1.msra.mxu0 0.0
    %529 = vmatprep.subr.mxu0 0.0
    %530 = vmatpush1.msra.mxu0 0.0
    %531 = vmatprep.mubr.f32.mxu0 0.0
    %532 = vmatmul.mubr.f32.gmra.mrb[0].mxu0 %v443
    %v533 = vpop.f32.mrb[0].mxu0
    %v534 = vadd.f32 %v465, %v533
    %v535 = vpop.f32.mrb[0].mxu0
    %536 = vdwg.mxu0
    %vm537 = vcmask 17408
    %538 = vst.msk [vmem:[#allocation2] sm:$0x3] %vm537, %v534
    // Predicated region
    $region30: #{hort_forward.3} parent=1 // pred_check
      _
    $region31: #{hort_forward.3} parent=1 // pred_check_branch
      %540 = sbr.rel (0) target = $region33
    $region32: #{hort_forward.3} parent=1 // pred_region
      %s542 = ssub.s32 32, 32
      %543 = vsyncadd [#allocation3], %s542
      %s545 = sshll.u32 [#allocation2], 4
      %s546 = int_to_ptr.vmem [resolvable:$true] %s545
      %548 = dma.vmem_to_hbm [thread:$0]  %s546, 32, %s7, [#allocation3]
    $region33: #{hort_forward.3} parent=1 // pred_fallthru
      _
    // Predicated region
    $region34: #{hort_forward.3} parent=1 // pred_check
      _
    $region35: #{hort_forward.3} parent=1 // pred_check_branch
      %550 = sbr.rel (0) target = $region37
    $region36: #{hort_forward.3} parent=1 // pred_region
      %551 = dma.done [#allocation3], 32
    $region37: #{hort_forward.3} parent=1 // pred_fallthru
      _
    %552 = vsyncpa [#allocation3], 1

// kernel: hort_forward.2
$region0: #{hort_forward.2}
  #allocation0 [shape = 'u32[]', space=smem, size = 0x4, offset = 0x4, fixed_abs, tag = 'smem constant byte address 0x4 - core index']
  #allocation1 [shape = 'u32[144,128]{1,0:T(1,128)}', space=vmem, size = 0x12000, scoped, tag = 'internal scratch']
  %s0 = inlined_call_operand.vmem [shape: f32[2,784,4], index: 0, kind: input, shape index: {}]
  %s1 = inlined_call_operand.vmem [shape: f32[2,1,64], index: 1, kind: input, shape index: {}]
  %s2 = inlined_call_operand.vmem [shape: f32[4,64], index: 2, kind: input, shape index: {}]
  %s3 = inlined_call_operand.vmem [shape: bf16[64,128], index: 3, kind: input, shape index: {}]
  %s4 = inlined_call_operand.vmem [shape: f32[1,128], index: 4, kind: input, shape index: {}]
  %s5 = inlined_call_operand.vmem [shape: bf16[128,1024], index: 5, kind: input, shape index: {}]
  %s6 = inlined_call_operand.vmem [shape: f32[1,1024], index: 6, kind: input, shape index: {}]
  %s7 = inlined_call_operand.vmem [shape: f32[2,1,1024], index: 7, kind: output, shape index: {}]
  %s8 = sld [smem:[#allocation0]]
  $region61: #{hort_forward.2} parent=0
    _
  %s10 = ssub.s32 1, %s8
  %s11 = scalar_select 0, %s10, %s8
  loop: start=0, step=1, limit=4
  $region2: #{hort_forward.2} parent=0 // loop_pre_header
    _
  $region3: #{hort_forward.2} parent=0 // loop_header
    %s13 = sphi 0, %s17
    %p14 = scmp.ge.s32.totalorder %s13, 4
    %s23 = sphi 0, %s25
    %s26 = sphi 0, %s23
    %s27 = sphi 0, %s26
    %s43 = sphi 0, %s27
    %s49 = sphi 0, %s51
    %s52 = sphi 0, %s49
    %s53 = sphi 0, %s52
    %s69 = sphi 0, %s53
    %s73 = sphi 0, %s73
    %s75 = sphi 0, %s73
    %s76 = sphi 0, %s75
    %s90 = sphi 0, %s76
    %s94 = sphi 0, %s94
    %s96 = sphi 0, %s94
    %s97 = sphi 0, %s96
    %s111 = sphi 0, %s97
    %s115 = sphi 0, %s115
    %s117 = sphi 0, %s115
    %s118 = sphi 0, %s117
    %s132 = sphi 0, %s118
    %s136 = sphi 0, %s136
    %s138 = sphi 0, %s136
    %s139 = sphi 0, %s138
    %s153 = sphi 0, %s139
    %s157 = sphi 0, %s157
    %s159 = sphi 0, %s157
    %s160 = sphi 0, %s159
    %s174 = sphi 0, %s160
    %s180 = sphi 0, %s182
    %s183 = sphi 0, %s180
    %s184 = sphi 0, %s183
    %s200 = sphi 0, %s184
  $region4: #{hort_forward.2} parent=0 // loop_header_branch
    %16 = sbr.rel (%p14) target = $region8
  $region5: #{hort_forward.2} parent=0 // loop_body
    %s18 = ssub.s32 %s13, 1
    %s19 = ssub.s32 %s13, 2
    %s20 = sadd.s32 %s13, 1
    %s21 = ssub.s32 %s13, %s20
    %p22 = scmp.eq.s32.totalorder %s21, 0
    %s24 = sadd.s32 %s23, 1
    %s25 = scalar_select %p22, %s23, %s24
    %p28 = pneg %p22
    %p29 = scmp.eq.s32.totalorder %s13, 1
    %p30 = por %p28, %p29
    %p31 = scmp.ne.s32.totalorder %s23, %s26
    %p32 = scmp.eq.s32.totalorder %s13, 0
    %p33 = por %p31, %p32
    %p34 = scmp.ne.s32.totalorder %s23, %s26
    %p35 = scmp.eq.s32.totalorder %s18, 1
    %p36 = por %p34, %p35
    %p37 = scmp.ne.s32.totalorder %s26, %s27
    %p38 = scmp.eq.s32.totalorder %s18, 0
    %p39 = por %p37, %p38
    %p40 = scmp.ne.s32.totalorder %s26, %s27
    %p41 = scmp.eq.s32.totalorder %s19, 1
    %p42 = por %p40, %p41
    %p44 = scmp.ne.s32.totalorder %s27, %s43
    %p45 = scmp.eq.s32.totalorder %s19, 0
    %p46 = por %p44, %p45
    %s47 = ssub.s32 %s13, %s20
    %p48 = scmp.eq.s32.totalorder %s47, 0
    %s50 = sadd.s32 %s49, 1
    %s51 = scalar_select %p48, %s49, %s50
    %p54 = pneg %p48
    %p55 = scmp.eq.s32.totalorder %s13, 1
    %p56 = por %p54, %p55
    %p57 = scmp.ne.s32.totalorder %s49, %s52
    %p58 = scmp.eq.s32.totalorder %s13, 0
    %p59 = por %p57, %p58
    %p60 = scmp.ne.s32.totalorder %s49, %s52
    %p61 = scmp.eq.s32.totalorder %s18, 1
    %p62 = por %p60, %p61
    %p63 = scmp.ne.s32.totalorder %s52, %s53
    %p64 = scmp.eq.s32.totalorder %s18, 0
    %p65 = por %p63, %p64
    %p66 = scmp.ne.s32.totalorder %s52, %s53
    %p67 = scmp.eq.s32.totalorder %s19, 1
    %p68 = por %p66, %p67
    %p70 = scmp.ne.s32.totalorder %s53, %s69
    %p71 = scmp.eq.s32.totalorder %s19, 0
    %p72 = por %p70, %p71
    %s74 = sadd.s32 %s73, 1
    %p77 = scmp.eq.s32.totalorder %s13, 1
    %p78 = scmp.ne.s32.totalorder %s73, %s75
    %p79 = scmp.eq.s32.totalorder %s13, 0
    %p80 = por %p78, %p79
    %p81 = scmp.ne.s32.totalorder %s73, %s75
    %p82 = scmp.eq.s32.totalorder %s18, 1
    %p83 = por %p81, %p82
    %p84 = scmp.ne.s32.totalorder %s75, %s76
    %p85 = scmp.eq.s32.totalorder %s18, 0
    %p86 = por %p84, %p85
    %p87 = scmp.ne.s32.totalorder %s75, %s76
    %p88 = scmp.eq.s32.totalorder %s19, 1
    %p89 = por %p87, %p88
    %p91 = scmp.ne.s32.totalorder %s76, %s90
    %p92 = scmp.eq.s32.totalorder %s19, 0
    %p93 = por %p91, %p92
    %s95 = sadd.s32 %s94, 1
    %p98 = scmp.eq.s32.totalorder %s13, 1
    %p99 = scmp.ne.s32.totalorder %s94, %s96
    %p100 = scmp.eq.s32.totalorder %s13, 0
    %p101 = por %p99, %p100
    %p102 = scmp.ne.s32.totalorder %s94, %s96
    %p103 = scmp.eq.s32.totalorder %s18, 1
    %p104 = por %p102, %p103
    %p105 = scmp.ne.s32.totalorder %s96, %s97
    %p106 = scmp.eq.s32.totalorder %s18, 0
    %p107 = por %p105, %p106
    %p108 = scmp.ne.s32.totalorder %s96, %s97
    %p109 = scmp.eq.s32.totalorder %s19, 1
    %p110 = por %p108, %p109
    %p112 = scmp.ne.s32.totalorder %s97, %s111
    %p113 = scmp.eq.s32.totalorder %s19, 0
    %p114 = por %p112, %p113
    %s116 = sadd.s32 %s115, 1
    %p119 = scmp.eq.s32.totalorder %s13, 1
    %p120 = scmp.ne.s32.totalorder %s115, %s117
    %p121 = scmp.eq.s32.totalorder %s13, 0
    %p122 = por %p120, %p121
    %p123 = scmp.ne.s32.totalorder %s115, %s117
    %p124 = scmp.eq.s32.totalorder %s18, 1
    %p125 = por %p123, %p124
    %p126 = scmp.ne.s32.totalorder %s117, %s118
    %p127 = scmp.eq.s32.totalorder %s18, 0
    %p128 = por %p126, %p127
    %p129 = scmp.ne.s32.totalorder %s117, %s118
    %p130 = scmp.eq.s32.totalorder %s19, 1
    %p131 = por %p129, %p130
    %p133 = scmp.ne.s32.totalorder %s118, %s132
    %p134 = scmp.eq.s32.totalorder %s19, 0
    %p135 = por %p133, %p134
    %s137 = sadd.s32 %s136, 1
    %p140 = scmp.eq.s32.totalorder %s13, 1
    %p141 = scmp.ne.s32.totalorder %s136, %s138
    %p142 = scmp.eq.s32.totalorder %s13, 0
    %p143 = por %p141, %p142
    %p144 = scmp.ne.s32.totalorder %s136, %s138
    %p145 = scmp.eq.s32.totalorder %s18, 1
    %p146 = por %p144, %p145
    %p147 = scmp.ne.s32.totalorder %s138, %s139
    %p148 = scmp.eq.s32.totalorder %s18, 0
    %p149 = por %p147, %p148
    %p150 = scmp.ne.s32.totalorder %s138, %s139
    %p151 = scmp.eq.s32.totalorder %s19, 1
    %p152 = por %p150, %p151
    %p154 = scmp.ne.s32.totalorder %s139, %s153
    %p155 = scmp.eq.s32.totalorder %s19, 0
    %p156 = por %p154, %p155
    %s158 = sadd.s32 %s157, 1
    %p161 = scmp.eq.s32.totalorder %s13, 1
    %p162 = scmp.ne.s32.totalorder %s157, %s159
    %p163 = scmp.eq.s32.totalorder %s13, 0
    %p164 = por %p162, %p163
    %p165 = scmp.ne.s32.totalorder %s157, %s159
    %p166 = scmp.eq.s32.totalorder %s18, 1
    %p167 = por %p165, %p166
    %p168 = scmp.ne.s32.totalorder %s159, %s160
    %p169 = scmp.eq.s32.totalorder %s18, 0
    %p170 = por %p168, %p169
    %p171 = scmp.ne.s32.totalorder %s159, %s160
    %p172 = scmp.eq.s32.totalorder %s19, 1
    %p173 = por %p171, %p172
    %p175 = scmp.ne.s32.totalorder %s160, %s174
    %p176 = scmp.eq.s32.totalorder %s19, 0
    %p177 = por %p175, %p176
    %s178 = ssub.s32 %s13, %s20
    %p179 = scmp.eq.s32.totalorder %s178, 0
    %s181 = sadd.s32 %s180, 1
    %s182 = scalar_select %p179, %s180, %s181
    %p185 = pneg %p179
    %p186 = scmp.eq.s32.totalorder %s13, 1
    %p187 = por %p185, %p186
    %p188 = scmp.ne.s32.totalorder %s180, %s183
    %p189 = scmp.eq.s32.totalorder %s13, 0
    %p190 = por %p188, %p189
    %p191 = scmp.ne.s32.totalorder %s180, %s183
    %p192 = scmp.eq.s32.totalorder %s18, 1
    %p193 = por %p191, %p192
    %p194 = scmp.ne.s32.totalorder %s183, %s184
    %p195 = scmp.eq.s32.totalorder %s18, 0
    %p196 = por %p194, %p195
    %p197 = scmp.ne.s32.totalorder %s183, %s184
    %p198 = scmp.eq.s32.totalorder %s19, 1
    %p199 = por %p197, %p198
    %p201 = scmp.ne.s32.totalorder %s184, %s200
    %p202 = scmp.eq.s32.totalorder %s19, 0
    %p203 = por %p201, %p202
    %p204 = scmp.le.s32.totalorder 1, %s13
    %p205 = scmp.lt.s32.totalorder %s13, 3
    %p206 = pnand %p204, %p205
    %p207 = pneg %p206
    // Predicated region
    $region9: #{hort_forward.2} parent=5 // pred_check
      _
    $region10: #{hort_forward.2} parent=5 // pred_check_branch
      %209 = sbr.rel (%p206) target = $region12
    $region11: #{hort_forward.2} parent=5 // pred_region
      %s210 = ssub.s32 %s13, 1
      // Predicated region
      $region13: #{hort_forward.2} parent=11 // pred_check
        %p211 = pneg %p86
      $region14: #{hort_forward.2} parent=11 // pred_check_branch
        %213 = sbr.rel (%p211) target = $region16
      $region15: #{hort_forward.2} parent=11 // pred_region
        _
      $region16: #{hort_forward.2} parent=11 // pred_fallthru
        _
      // Predicated region
      $region17: #{hort_forward.2} parent=11 // pred_check
        %p214 = pneg %p107
      $region18: #{hort_forward.2} parent=11 // pred_check_branch
        %216 = sbr.rel (%p214) target = $region20
      $region19: #{hort_forward.2} parent=11 // pred_region
        _
      $region20: #{hort_forward.2} parent=11 // pred_fallthru
        _
      // Predicated region
      $region21: #{hort_forward.2} parent=11 // pred_check
        %p217 = pneg %p128
      $region22: #{hort_forward.2} parent=11 // pred_check_branch
        %219 = sbr.rel (%p217) target = $region24
      $region23: #{hort_forward.2} parent=11 // pred_region
        _
      $region24: #{hort_forward.2} parent=11 // pred_fallthru
        _
      // Predicated region
      $region25: #{hort_forward.2} parent=11 // pred_check
        %p220 = pneg %p149
      $region26: #{hort_forward.2} parent=11 // pred_check_branch
        %222 = sbr.rel (%p220) target = $region28
      $region27: #{hort_forward.2} parent=11 // pred_region
        _
      $region28: #{hort_forward.2} parent=11 // pred_fallthru
        _
      // Predicated region
      $region29: #{hort_forward.2} parent=11 // pred_check
        %p223 = pneg %p170
      $region30: #{hort_forward.2} parent=11 // pred_check_branch
        %225 = sbr.rel (%p223) target = $region32
      $region31: #{hort_forward.2} parent=11 // pred_region
        _
      $region32: #{hort_forward.2} parent=11 // pred_fallthru
        _
    $region12: #{hort_forward.2} parent=5 // pred_fallthru
      _
    %p226 = scmp.lt.s32.totalorder %s13, 2
    // Predicated region
    $region33: #{hort_forward.2} parent=5 // pred_check
      %p227 = pneg %p226
    $region34: #{hort_forward.2} parent=5 // pred_check_branch
      %229 = sbr.rel (%p227) target = $region36
    $region35: #{hort_forward.2} parent=5 // pred_region
      // Predicated region
      $region37: #{hort_forward.2} parent=35 // pred_check
        %p230 = pneg %p33
      $region38: #{hort_forward.2} parent=35 // pred_check_branch
        %232 = sbr.rel (%p230) target = $region40
      $region39: #{hort_forward.2} parent=35 // pred_region
        %p233 = scmp.lt.s32.totalorder %s13, 1
        %s234 = scalar_select %p233, %s13, 1
        %s235 = smul.addr %s234, 98
        %s236 = smul.addr %s235, 8
        %s237 = scalar_lea.vmem %s0, %s236
      $region40: #{hort_forward.2} parent=35 // pred_fallthru
        _
      // Predicated region
      $region41: #{hort_forward.2} parent=35 // pred_check
        %p238 = pneg %p59
      $region42: #{hort_forward.2} parent=35 // pred_check_branch
        %240 = sbr.rel (%p238) target = $region44
      $region43: #{hort_forward.2} parent=35 // pred_region
        %p241 = scmp.lt.s32.totalorder %s13, 1
        %s242 = scalar_select %p241, %s13, 1
        %s243 = scalar_lea.vmem %s1, %s242
      $region44: #{hort_forward.2} parent=35 // pred_fallthru
        _
    $region36: #{hort_forward.2} parent=5 // pred_fallthru
      _
    %p244 = scmp.le.s32.totalorder 1, %s13
    %p245 = scmp.lt.s32.totalorder %s13, 3
    %p246 = pnand %p244, %p245
    %p247 = pneg %p246
    // Predicated region
    $region45: #{hort_forward.2} parent=5 // pred_check
      _
    $region46: #{hort_forward.2} parent=5 // pred_check_branch
      %249 = sbr.rel (%p246) target = $region48
    $region47: #{hort_forward.2} parent=5 // pred_region
      %s250 = ssub.s32 %s13, 1
      %p251 = scmp.lt.s32.totalorder %s18, 1
      %s252 = scalar_select %p251, %s18, 1
      %s253 = smul.addr %s252, 98
      %s254 = smul.addr %s253, 8
      %s255 = scalar_lea.vmem %s0, %s254
      %p256 = pneg %p39
      %p257 = pneg %p36
      %p258 = scmp.lt.s32.totalorder %s18, 1
      %s259 = scalar_select %p258, %s18, 1
      %s260 = scalar_lea.vmem %s1, %s259
      %p261 = pneg %p65
      %p262 = pneg %p62
      %p263 = pneg %p86
      %p264 = pneg %p83
      %p265 = pneg %p107
      %p266 = pneg %p104
      %p267 = pneg %p128
      %p268 = pneg %p125
      %p269 = pneg %p149
      %p270 = pneg %p146
      %p271 = pneg %p170
      %p272 = pneg %p167
      %p273 = pneg %p196
      %p274 = pneg %p193
      %p275 = scmp.lt.s32.totalorder %s18, 1
      %s276 = scalar_select %p275, %s18, 1
      %s277 = smul.addr %s276, 8
      %s278 = scalar_lea.vmem %s7, %s277
      %p279 = scmp.lt.s32.totalorder %s18, 1
      %s280 = scalar_select %p279, %s18, 1
      %s281 = smul.addr %s280, 98
      %s282 = smul.addr %s281, 8
      %s283 = scalar_lea.vmem %s0, %s282
      %p284 = scmp.lt.s32.totalorder %s18, 1
      %s285 = scalar_select %p284, %s18, 1
      %s286 = scalar_lea.vmem %s1, %s285
      %p287 = scmp.lt.s32.totalorder %s18, 1
      %s288 = scalar_select %p287, %s18, 1
      %s289 = smul.addr %s288, 8
      %s290 = scalar_lea.vmem %s7, %s289
      %v292 = vld [vmem:[%s283] sm:$0xff]
      %v293 = vld [vmem:[%s283 + $0x8] sm:$0xff]
      %v294 = vld [vmem:[%s283 + $0x10] sm:$0xff]
      %v295 = vld [vmem:[%s283 + $0x18] sm:$0xff]
      %v296 = vld [vmem:[%s283 + $0x20] sm:$0xff]
      %v297 = vld [vmem:[%s283 + $0x28] sm:$0xff]
      %v298 = vld [vmem:[%s283 + $0x30] sm:$0xff]
      %v299 = vld [vmem:[%s283 + $0x38] sm:$0xff]
      %v300 = vld [vmem:[%s283 + $0x40] sm:$0xff]
      %v301 = vld [vmem:[%s283 + $0x48] sm:$0xff]
      %v302 = vld [vmem:[%s283 + $0x50] sm:$0xff]
      %v303 = vld [vmem:[%s283 + $0x58] sm:$0xff]
      %v304 = vld [vmem:[%s283 + $0x60] sm:$0xff]
      %v305 = vld [vmem:[%s283 + $0x68] sm:$0xff]
      %v306 = vld [vmem:[%s283 + $0x70] sm:$0xff]
      %v307 = vld [vmem:[%s283 + $0x78] sm:$0xff]
      %v308 = vld [vmem:[%s283 + $0x80] sm:$0xff]
      %v309 = vld [vmem:[%s283 + $0x88] sm:$0xff]
      %v310 = vld [vmem:[%s283 + $0x90] sm:$0xff]
      %v311 = vld [vmem:[%s283 + $0x98] sm:$0xff]
      %v312 = vld [vmem:[%s283 + $0xa0] sm:$0xff]
      %v313 = vld [vmem:[%s283 + $0xa8] sm:$0xff]
      %v314 = vld [vmem:[%s283 + $0xb0] sm:$0xff]
      %v315 = vld [vmem:[%s283 + $0xb8] sm:$0xff]
      %v316 = vld [vmem:[%s283 + $0xc0] sm:$0xff]
      %v317 = vld [vmem:[%s283 + $0xc8] sm:$0xff]
      %v318 = vld [vmem:[%s283 + $0xd0] sm:$0xff]
      %v319 = vld [vmem:[%s283 + $0xd8] sm:$0xff]
      %v320 = vld [vmem:[%s283 + $0xe0] sm:$0xff]
      %v321 = vld [vmem:[%s283 + $0xe8] sm:$0xff]
      %v322 = vld [vmem:[%s283 + $0xf0] sm:$0xff]
      %v323 = vld [vmem:[%s283 + $0xf8] sm:$0xff]
      %v324 = vld [vmem:[%s283 + $0x100] sm:$0xff]
      %v325 = vld [vmem:[%s283 + $0x108] sm:$0xff]
      %v326 = vld [vmem:[%s283 + $0x110] sm:$0xff]
      %v327 = vld [vmem:[%s283 + $0x118] sm:$0xff]
      %v328 = vld [vmem:[%s283 + $0x120] sm:$0xff]
      %v329 = vld [vmem:[%s283 + $0x128] sm:$0xff]
      %v330 = vld [vmem:[%s283 + $0x130] sm:$0xff]
      %v331 = vld [vmem:[%s283 + $0x138] sm:$0xff]
      %v332 = vld [vmem:[%s283 + $0x140] sm:$0xff]
      %v333 = vld [vmem:[%s283 + $0x148] sm:$0xff]
      %v334 = vld [vmem:[%s283 + $0x150] sm:$0xff]
      %v335 = vld [vmem:[%s283 + $0x158] sm:$0xff]
      %v336 = vld [vmem:[%s283 + $0x160] sm:$0xff]
      %v337 = vld [vmem:[%s283 + $0x168] sm:$0xff]
      %v338 = vld [vmem:[%s283 + $0x170] sm:$0xff]
      %v339 = vld [vmem:[%s283 + $0x178] sm:$0xff]
      %v340 = vld [vmem:[%s283 + $0x180] sm:$0xff]
      %v341 = vld [vmem:[%s283 + $0x188] sm:$0xff]
      %v342 = vld [vmem:[%s283 + $0x190] sm:$0xff]
      %v343 = vld [vmem:[%s283 + $0x198] sm:$0xff]
      %v344 = vld [vmem:[%s283 + $0x1a0] sm:$0xff]
      %v345 = vld [vmem:[%s283 + $0x1a8] sm:$0xff]
      %v346 = vld [vmem:[%s283 + $0x1b0] sm:$0xff]
      %v347 = vld [vmem:[%s283 + $0x1b8] sm:$0xff]
      %v348 = vld [vmem:[%s283 + $0x1c0] sm:$0xff]
      %v349 = vld [vmem:[%s283 + $0x1c8] sm:$0xff]
      %v350 = vld [vmem:[%s283 + $0x1d0] sm:$0xff]
      %v351 = vld [vmem:[%s283 + $0x1d8] sm:$0xff]
      %v352 = vld [vmem:[%s283 + $0x1e0] sm:$0xff]
      %v353 = vld [vmem:[%s283 + $0x1e8] sm:$0xff]
      %v354 = vld [vmem:[%s283 + $0x1f0] sm:$0xff]
      %v355 = vld [vmem:[%s283 + $0x1f8] sm:$0xff]
      %v356 = vld [vmem:[%s283 + $0x200] sm:$0xff]
      %v357 = vld [vmem:[%s283 + $0x208] sm:$0xff]
      %v358 = vld [vmem:[%s283 + $0x210] sm:$0xff]
      %v359 = vld [vmem:[%s283 + $0x218] sm:$0xff]
      %v360 = vld [vmem:[%s283 + $0x220] sm:$0xff]
      %v361 = vld [vmem:[%s283 + $0x228] sm:$0xff]
      %v362 = vld [vmem:[%s283 + $0x230] sm:$0xff]
      %v363 = vld [vmem:[%s283 + $0x238] sm:$0xff]
      %v364 = vld [vmem:[%s283 + $0x240] sm:$0xff]
      %v365 = vld [vmem:[%s283 + $0x248] sm:$0xff]
      %v366 = vld [vmem:[%s283 + $0x250] sm:$0xff]
      %v367 = vld [vmem:[%s283 + $0x258] sm:$0xff]
      %v368 = vld [vmem:[%s283 + $0x260] sm:$0xff]
      %v369 = vld [vmem:[%s283 + $0x268] sm:$0xff]
      %v370 = vld [vmem:[%s283 + $0x270] sm:$0xff]
      %v371 = vld [vmem:[%s283 + $0x278] sm:$0xff]
      %v372 = vld [vmem:[%s283 + $0x280] sm:$0xff]
      %v373 = vld [vmem:[%s283 + $0x288] sm:$0xff]
      %v374 = vld [vmem:[%s283 + $0x290] sm:$0xff]
      %v375 = vld [vmem:[%s283 + $0x298] sm:$0xff]
      %v376 = vld [vmem:[%s283 + $0x2a0] sm:$0xff]
      %v377 = vld [vmem:[%s283 + $0x2a8] sm:$0xff]
      %v378 = vld [vmem:[%s283 + $0x2b0] sm:$0xff]
      %v379 = vld [vmem:[%s283 + $0x2b8] sm:$0xff]
      %v380 = vld [vmem:[%s283 + $0x2c0] sm:$0xff]
      %v381 = vld [vmem:[%s283 + $0x2c8] sm:$0xff]
      %v382 = vld [vmem:[%s283 + $0x2d0] sm:$0xff]
      %v383 = vld [vmem:[%s283 + $0x2d8] sm:$0xff]
      %v384 = vld [vmem:[%s283 + $0x2e0] sm:$0xff]
      %v385 = vld [vmem:[%s283 + $0x2e8] sm:$0xff]
      %v386 = vld [vmem:[%s283 + $0x2f0] sm:$0xff]
      %v387 = vld [vmem:[%s283 + $0x2f8] sm:$0xff]
      %v388 = vld [vmem:[%s283 + $0x300] sm:$0xff]
      %v389 = vld [vmem:[%s283 + $0x308] sm:$0xff]
      %v390 = vld [vmem:[%s2] sm:$0xf]
      %v391 = vld [vmem:[%s286] sm:$0x1]
      %v393 = vlaneseq
      %v394 = vshrl.u32 %v393, 7
      %v395 = vsub.s32 0, %v394
      %v396 = vrot.slane %v391, %v395
      %vm398 = vcmask 31744
      %v400 = vsel %vm398, %v292, 0
      %v403 = vsel %vm398, %v293, 0
      %v406 = vsel %vm398, %v294, 0
      %v409 = vsel %vm398, %v295, 0
      %v412 = vsel %vm398, %v296, 0
      %v415 = vsel %vm398, %v297, 0
      %v418 = vsel %vm398, %v298, 0
      %v421 = vsel %vm398, %v299, 0
      %v424 = vsel %vm398, %v300, 0
      %v427 = vsel %vm398, %v301, 0
      %v430 = vsel %vm398, %v302, 0
      %v433 = vsel %vm398, %v303, 0
      %v436 = vsel %vm398, %v304, 0
      %v439 = vsel %vm398, %v305, 0
      %v442 = vsel %vm398, %v306, 0
      %v445 = vsel %vm398, %v307, 0
      %v448 = vsel %vm398, %v308, 0
      %v451 = vsel %vm398, %v309, 0
      %v454 = vsel %vm398, %v310, 0
      %v457 = vsel %vm398, %v311, 0
      %v460 = vsel %vm398, %v312, 0
      %v463 = vsel %vm398, %v313, 0
      %v466 = vsel %vm398, %v314, 0
      %v469 = vsel %vm398, %v315, 0
      %v472 = vsel %vm398, %v316, 0
      %v475 = vsel %vm398, %v317, 0
      %v478 = vsel %vm398, %v318, 0
      %v481 = vsel %vm398, %v319, 0
      %v484 = vsel %vm398, %v320, 0
      %v487 = vsel %vm398, %v321, 0
      %v490 = vsel %vm398, %v322, 0
      %v493 = vsel %vm398, %v323, 0
      %v496 = vsel %vm398, %v324, 0
      %v499 = vsel %vm398, %v325, 0
      %v502 = vsel %vm398, %v326, 0
      %v505 = vsel %vm398, %v327, 0
      %v508 = vsel %vm398, %v328, 0
      %v511 = vsel %vm398, %v329, 0
      %v514 = vsel %vm398, %v330, 0
      %v517 = vsel %vm398, %v331, 0
      %v520 = vsel %vm398, %v332, 0
      %v523 = vsel %vm398, %v333, 0
      %v526 = vsel %vm398, %v334, 0
      %v529 = vsel %vm398, %v335, 0
      %v532 = vsel %vm398, %v336, 0
      %v535 = vsel %vm398, %v337, 0
      %v538 = vsel %vm398, %v338, 0
      %v541 = vsel %vm398, %v339, 0
      %v544 = vsel %vm398, %v340, 0
      %v547 = vsel %vm398, %v341, 0
      %v550 = vsel %vm398, %v342, 0
      %v553 = vsel %vm398, %v343, 0
      %v556 = vsel %vm398, %v344, 0
      %v559 = vsel %vm398, %v345, 0
      %v562 = vsel %vm398, %v346, 0
      %v565 = vsel %vm398, %v347, 0
      %v568 = vsel %vm398, %v348, 0
      %v571 = vsel %vm398, %v349, 0
      %v574 = vsel %vm398, %v350, 0
      %v577 = vsel %vm398, %v351, 0
      %v580 = vsel %vm398, %v352, 0
      %v583 = vsel %vm398, %v353, 0
      %v586 = vsel %vm398, %v354, 0
      %v589 = vsel %vm398, %v355, 0
      %v592 = vsel %vm398, %v356, 0
      %v595 = vsel %vm398, %v357, 0
      %v598 = vsel %vm398, %v358, 0
      %v601 = vsel %vm398, %v359, 0
      %v604 = vsel %vm398, %v360, 0
      %v607 = vsel %vm398, %v361, 0
      %v610 = vsel %vm398, %v362, 0
      %v613 = vsel %vm398, %v363, 0
      %v616 = vsel %vm398, %v364, 0
      %v619 = vsel %vm398, %v365, 0
      %v622 = vsel %vm398, %v366, 0
      %v625 = vsel %vm398, %v367, 0
      %v628 = vsel %vm398, %v368, 0
      %v631 = vsel %vm398, %v369, 0
      %v634 = vsel %vm398, %v370, 0
      %v637 = vsel %vm398, %v371, 0
      %v640 = vsel %vm398, %v372, 0
      %v643 = vsel %vm398, %v373, 0
      %v646 = vsel %vm398, %v374, 0
      %v649 = vsel %vm398, %v375, 0
      %v652 = vsel %vm398, %v376, 0
      %v655 = vsel %vm398, %v377, 0
      %v658 = vsel %vm398, %v378, 0
      %v661 = vsel %vm398, %v379, 0
      %v664 = vsel %vm398, %v380, 0
      %v667 = vsel %vm398, %v381, 0
      %v670 = vsel %vm398, %v382, 0
      %v673 = vsel %vm398, %v383, 0
      %v676 = vsel %vm398, %v384, 0
      %v679 = vsel %vm398, %v385, 0
      %v682 = vsel %vm398, %v386, 0
      %v685 = vsel %vm398, %v387, 0
      %v688 = vsel %vm398, %v388, 0
      %v691 = vsel %vm398, %v389, 0
      %vm693 = vcmask 1043456
      %v695 = vsel %vm693, %v390, 0
      %697 = vmatprep.subr.mxu0 0.0
      %698 = vmatpush1.msra.mxu0 %v695
      %699 = vmatprep.subr.mxu0 0.0
      %700 = vmatpush1.msra.mxu0 0.0
      %701 = vmatprep.subr.mxu0 0.0
      %702 = vmatpush1.msra.mxu0 0.0
      %703 = vmatprep.subr.mxu0 0.0
      %704 = vmatpush1.msra.mxu0 0.0
      %705 = vmatprep.subr.mxu0 0.0
      %706 = vmatpush1.msra.mxu0 0.0
      %707 = vmatprep.subr.mxu0 0.0
      %708 = vmatpush1.msra.mxu0 0.0
      %709 = vmatprep.subr.mxu0 0.0
      %710 = vmatpush1.msra.mxu0 0.0
      %711 = vmatprep.subr.mxu0 0.0
      %712 = vmatpush1.msra.mxu0 0.0
      %713 = vmatprep.subr.mxu0 0.0
      %714 = vmatpush1.msra.mxu0 0.0
      %715 = vmatprep.subr.mxu0 0.0
      %716 = vmatpush1.msra.mxu0 0.0
      %717 = vmatprep.subr.mxu0 0.0
      %718 = vmatpush1.msra.mxu0 0.0
      %719 = vmatprep.subr.mxu0 0.0
      %720 = vmatpush1.msra.mxu0 0.0
      %721 = vmatprep.subr.mxu0 0.0
      %722 = vmatpush1.msra.mxu0 0.0
      %723 = vmatprep.subr.mxu0 0.0
      %724 = vmatpush1.msra.mxu0 0.0
      %725 = vmatprep.subr.mxu0 0.0
      %726 = vmatpush1.msra.mxu0 0.0
      %727 = vmatprep.subr.mxu0 0.0
      %728 = vmatpush1.msra.mxu0 0.0
      %729 = vmatprep.subr.mxu0 0.0
      %730 = vmatpush1.msra.mxu0 0.0
      %731 = vmatprep.subr.mxu0 0.0
      %732 = vmatpush1.msra.mxu0 0.0
      %733 = vmatprep.subr.mxu0 0.0
      %734 = vmatpush1.msra.mxu0 0.0
      %735 = vmatprep.subr.mxu0 0.0
      %736 = vmatpush1.msra.mxu0 0.0
      %737 = vmatprep.subr.mxu0 0.0
      %738 = vmatpush1.msra.mxu0 0.0
      %739 = vmatprep.subr.mxu0 0.0
      %740 = vmatpush1.msra.mxu0 0.0
      %741 = vmatprep.subr.mxu0 0.0
      %742 = vmatpush1.msra.mxu0 0.0
      %743 = vmatprep.subr.mxu0 0.0
      %744 = vmatpush1.msra.mxu0 0.0
      %745 = vmatprep.subr.mxu0 0.0
      %746 = vmatpush1.msra.mxu0 0.0
      %747 = vmatprep.subr.mxu0 0.0
      %748 = vmatpush1.msra.mxu0 0.0
      %749 = vmatprep.subr.mxu0 0.0
      %750 = vmatpush1.msra.mxu0 0.0
      %751 = vmatprep.subr.mxu0 0.0
      %752 = vmatpush1.msra.mxu0 0.0
      %753 = vmatprep.subr.mxu0 0.0
      %754 = vmatpush1.msra.mxu0 0.0
      %755 = vmatprep.subr.mxu0 0.0
      %756 = vmatpush1.msra.mxu0 0.0
      %757 = vmatprep.subr.mxu0 0.0
      %758 = vmatpush1.msra.mxu0 0.0
      %759 = vmatprep.subr.mxu0 0.0
      %760 = vmatpush1.msra.mxu0 0.0
      %761 = vmatprep.mubr.f32.mxu0 0.0
      %762 = vmatmul.mubr.f32.gmra.mrb[0].mxu0 %v400
      %v763 = vpop.f32.mrb[0].mxu0
      %v764 = vadd.f32 %v396, %v763
      %v765 = vpop.f32.mrb[0].mxu0
      %766 = vmatprep.mubr.f32.mxu0 0.0
      %767 = vmatmul.mubr.f32.gmra.mrb[0].mxu0 %v403
      %v768 = vpop.f32.mrb[0].mxu0
      %v769 = vadd.f32 %v396, %v768
      %v770 = vpop.f32.mrb[0].mxu0
      %771 = vmatprep.mubr.f32.mxu0 0.0
      %772 = vmatmul.mubr.f32.gmra.mrb[0].mxu0 %v406
      %v773 = vpop.f32.mrb[0].mxu0
      %v774 = vadd.f32 %v396, %v773
      %v775 = vpop.f32.mrb[0].mxu0
      %776 = vmatprep.mubr.f32.mxu0 0.0
      %777 = vmatmul.mubr.f32.gmra.mrb[0].mxu0 %v409
      %v778 = vpop.f32.mrb[0].mxu0
      %v779 = vadd.f32 %v396, %v778
      %v780 = vpop.f32.mrb[0].mxu0
      %781 = vmatprep.mubr.f32.mxu0 0.0
      %782 = vmatmul.mubr.f32.gmra.mrb[0].mxu0 %v412
      %v783 = vpop.f32.mrb[0].mxu0
      %v784 = vadd.f32 %v396, %v783
      %v785 = vpop.f32.mrb[0].mxu0
      %786 = vmatprep.mubr.f32.mxu0 0.0
      %787 = vmatmul.mubr.f32.gmra.mrb[0].mxu0 %v415
      %v788 = vpop.f32.mrb[0].mxu0
      %v789 = vadd.f32 %v396, %v788
      %v790 = vpop.f32.mrb[0].mxu0
      %791 = vmatprep.mubr.f32.mxu0 0.0
      %792 = vmatmul.mubr.f32.gmra.mrb[0].mxu0 %v418
      %v793 = vpop.f32.mrb[0].mxu0
      %v794 = vadd.f32 %v396, %v793
      %v795 = vpop.f32.mrb[0].mxu0
      %796 = vmatprep.mubr.f32.mxu0 0.0
      %797 = vmatmul.mubr.f32.gmra.mrb[0].mxu0 %v421
      %v798 = vpop.f32.mrb[0].mxu0
      %v799 = vadd.f32 %v396, %v798
      %v800 = vpop.f32.mrb[0].mxu0
      %801 = vmatprep.mubr.f32.mxu0 0.0
      %802 = vmatmul.mubr.f32.gmra.mrb[0].mxu0 %v424
      %v803 = vpop.f32.mrb[0].mxu0
      %v804 = vadd.f32 %v396, %v803
      %v805 = vpop.f32.mrb[0].mxu0
      %806 = vmatprep.mubr.f32.mxu0 0.0
      %807 = vmatmul.mubr.f32.gmra.mrb[0].mxu0 %v427
      %v808 = vpop.f32.mrb[0].mxu0
      %v809 = vadd.f32 %v396, %v808
      %v810 = vpop.f32.mrb[0].mxu0
      %811 = vmatprep.mubr.f32.mxu0 0.0
      %812 = vmatmul.mubr.f32.gmra.mrb[0].mxu0 %v430
      %v813 = vpop.f32.mrb[0].mxu0
      %v814 = vadd.f32 %v396, %v813
      %v815 = vpop.f32.mrb[0].mxu0
      %816 = vmatprep.mubr.f32.mxu0 0.0
      %817 = vmatmul.mubr.f32.gmra.mrb[0].mxu0 %v433
      %v818 = vpop.f32.mrb[0].mxu0
      %v819 = vadd.f32 %v396, %v818
      %v820 = vpop.f32.mrb[0].mxu0
      %821 = vmatprep.mubr.f32.mxu0 0.0
      %822 = vmatmul.mubr.f32.gmra.mrb[0].mxu0 %v436
      %v823 = vpop.f32.mrb[0].mxu0
      %v824 = vadd.f32 %v396, %v823
      %v825 = vpop.f32.mrb[0].mxu0
      %826 = vmatprep.mubr.f32.mxu0 0.0
      %827 = vmatmul.mubr.f32.gmra.mrb[0].mxu0 %v439
      %v828 = vpop.f32.mrb[0].mxu0
      %v829 = vadd.f32 %v396, %v828
      %v830 = vpop.f32.mrb[0].mxu0
      %831 = vmatprep.mubr.f32.mxu0 0.0
      %832 = vmatmul.mubr.f32.gmra.mrb[0].mxu0 %v442
      %v833 = vpop.f32.mrb[0].mxu0
      %v834 = vadd.f32 %v396, %v833
      %v835 = vpop.f32.mrb[0].mxu0
      %836 = vmatprep.mubr.f32.mxu0 0.0
      %837 = vmatmul.mubr.f32.gmra.mrb[0].mxu0 %v445
      %v838 = vpop.f32.mrb[0].mxu0
      %v839 = vadd.f32 %v396, %v838
      %v840 = vpop.f32.mrb[0].mxu0
      %841 = vmatprep.mubr.f32.mxu0 0.0
      %842 = vmatmul.mubr.f32.gmra.mrb[0].mxu0 %v448
      %v843 = vpop.f32.mrb[0].mxu0
      %v844 = vadd.f32 %v396, %v843
      %v845 = vpop.f32.mrb[0].mxu0
      %846 = vmatprep.mubr.f32.mxu0 0.0
      %847 = vmatmul.mubr.f32.gmra.mrb[0].mxu0 %v451
      %v848 = vpop.f32.mrb[0].mxu0
      %v849 = vadd.f32 %v396, %v848
      %v850 = vpop.f32.mrb[0].mxu0
      %851 = vmatprep.mubr.f32.mxu0 0.0
      %852 = vmatmul.mubr.f32.gmra.mrb[0].mxu0 %v454
      %v853 = vpop.f32.mrb[0].mxu0
      %v854 = vadd.f32 %v396, %v853
      %v855 = vpop.f32.mrb[0].mxu0
      %856 = vmatprep.mubr.f32.mxu0 0.0
      %857 = vmatmul.mubr.f32.gmra.mrb[0].mxu0 %v457
      %v858 = vpop.f32.mrb[0].mxu0
      %v859 = vadd.f32 %v396, %v858
      %v860 = vpop.f32.mrb[0].mxu0
      %861 = vmatprep.mubr.f32.mxu0 0.0
      %862 = vmatmul.mubr.f32.gmra.mrb[0].mxu0 %v460
      %v863 = vpop.f32.mrb[0].mxu0
      %v864 = vadd.f32 %v396, %v863
      %v865 = vpop.f32.mrb[0].mxu0
      %866 = vmatprep.mubr.f32.mxu0 0.0
      %867 = vmatmul.mubr.f32.gmra.mrb[0].mxu0 %v463
      %v868 = vpop.f32.mrb[0].mxu0
      %v869 = vadd.f32 %v396, %v868
      %v870 = vpop.f32.mrb[0].mxu0
      %871 = vmatprep.mubr.f32.mxu0 0.0
      %872 = vmatmul.mubr.f32.gmra.mrb[0].mxu0 %v466
      %v873 = vpop.f32.mrb[0].mxu0
      %v874 = vadd.f32 %v396, %v873
      %v875 = vpop.f32.mrb[0].mxu0
      %876 = vmatprep.mubr.f32.mxu0 0.0
      %877 = vmatmul.mubr.f32.gmra.mrb[0].mxu0 %v469
      %v878 = vpop.f32.mrb[0].mxu0
      %v879 = vadd.f32 %v396, %v878
      %v880 = vpop.f32.mrb[0].mxu0
      %881 = vmatprep.mubr.f32.mxu0 0.0
      %882 = vmatmul.mubr.f32.gmra.mrb[0].mxu0 %v472
      %v883 = vpop.f32.mrb[0].mxu0
      %v884 = vadd.f32 %v396, %v883
      %v885 = vpop.f32.mrb[0].mxu0
      %886 = vmatprep.mubr.f32.mxu0 0.0
      %887 = vmatmul.mubr.f32.gmra.mrb[0].mxu0 %v475
      %v888 = vpop.f32.mrb[0].mxu0
      %v889 = vadd.f32 %v396, %v888
      %v890 = vpop.f32.mrb[0].mxu0
      %891 = vmatprep.mubr.f32.mxu0 0.0
      %892 = vmatmul.mubr.f32.gmra.mrb[0].mxu0 %v478
      %v893 = vpop.f32.mrb[0].mxu0
      %v894 = vadd.f32 %v396, %v893
      %v895 = vpop.f32.mrb[0].mxu0
      %896 = vmatprep.mubr.f32.mxu0 0.0
      %897 = vmatmul.mubr.f32.gmra.mrb[0].mxu0 %v481
      %v898 = vpop.f32.mrb[0].mxu0
      %v899 = vadd.f32 %v396, %v898
      %v900 = vpop.f32.mrb[0].mxu0
      %901 = vmatprep.mubr.f32.mxu0 0.0
      %902 = vmatmul.mubr.f32.gmra.mrb[0].mxu0 %v484
      %v903 = vpop.f32.mrb[0].mxu0
      %v904 = vadd.f32 %v396, %v903
      %v905 = vpop.f32.mrb[0].mxu0
      %906 = vmatprep.mubr.f32.mxu0 0.0
      %907 = vmatmul.mubr.f32.gmra.mrb[0].mxu0 %v487
      %v908 = vpop.f32.mrb[0].mxu0
      %v909 = vadd.f32 %v396, %v908
      %v910 = vpop.f32.mrb[0].mxu0
      %911 = vmatprep.mubr.f32.mxu0 0.0
      %912 = vmatmul.mubr.f32.gmra.mrb[0].mxu0 %v490
      %v913 = vpop.f32.mrb[0].mxu0
      %v914 = vadd.f32 %v396, %v913
      %v915 = vpop.f32.mrb[0].mxu0
      %916 = vmatprep.mubr.f32.mxu0 0.0
      %917 = vmatmul.mubr.f32.gmra.mrb[0].mxu0 %v493
      %v918 = vpop.f32.mrb[0].mxu0
      %v919 = vadd.f32 %v396, %v918
      %v920 = vpop.f32.mrb[0].mxu0
      %921 = vmatprep.mubr.f32.mxu0 0.0
      %922 = vmatmul.mubr.f32.gmra.mrb[0].mxu0 %v496
      %v923 = vpop.f32.mrb[0].mxu0
      %v924 = vadd.f32 %v396, %v923
      %v925 = vpop.f32.mrb[0].mxu0
      %926 = vmatprep.mubr.f32.mxu0 0.0
      %927 = vmatmul.mubr.f32.gmra.mrb[0].mxu0 %v499
      %v928 = vpop.f32.mrb[0].mxu0
      %v929 = vadd.f32 %v396, %v928
      %v930 = vpop.f32.mrb[0].mxu0
      %931 = vmatprep.mubr.f32.mxu0 0.0
      %932 = vmatmul.mubr.f32.gmra.mrb[0].mxu0 %v502
      %v933 = vpop.f32.mrb[0].mxu0
      %v934 = vadd.f32 %v396, %v933
      %v935 = vpop.f32.mrb[0].mxu0
      %936 = vmatprep.mubr.f32.mxu0 0.0
      %937 = vmatmul.mubr.f32.gmra.mrb[0].mxu0 %v505
      %v938 = vpop.f32.mrb[0].mxu0
      %v939 = vadd.f32 %v396, %v938
      %v940 = vpop.f32.mrb[0].mxu0
      %941 = vmatprep.mubr.f32.mxu0 0.0
      %942 = vmatmul.mubr.f32.gmra.mrb[0].mxu0 %v508
      %v943 = vpop.f32.mrb[0].mxu0
      %v944 = vadd.f32 %v396, %v943
      %v945 = vpop.f32.mrb[0].mxu0
      %946 = vmatprep.mubr.f32.mxu0 0.0
      %947 = vmatmul.mubr.f32.gmra.mrb[0].mxu0 %v511
      %v948 = vpop.f32.mrb[0].mxu0
      %v949 = vadd.f32 %v396, %v948
      %v950 = vpop.f32.mrb[0].mxu0
      %951 = vmatprep.mubr.f32.mxu0 0.0
      %952 = vmatmul.mubr.f32.gmra.mrb[0].mxu0 %v514
      %v953 = vpop.f32.mrb[0].mxu0
      %v954 = vadd.f32 %v396, %v953
      %v955 = vpop.f32.mrb[0].mxu0
      %956 = vmatprep.mubr.f32.mxu0 0.0
      %957 = vmatmul.mubr.f32.gmra.mrb[0].mxu0 %v517
      %v958 = vpop.f32.mrb[0].mxu0
      %v959 = vadd.f32 %v396, %v958
      %v960 = vpop.f32.mrb[0].mxu0
      %961 = vmatprep.mubr.f32.mxu0 0.0
      %962 = vmatmul.mubr.f32.gmra.mrb[0].mxu0 %v520
      %v963 = vpop.f32.mrb[0].mxu0
      %v964 = vadd.f32 %v396, %v963
      %v965 = vpop.f32.mrb[0].mxu0
      %966 = vmatprep.mubr.f32.mxu0 0.0
      %967 = vmatmul.mubr.f32.gmra.mrb[0].mxu0 %v523
      %v968 = vpop.f32.mrb[0].mxu0
      %v969 = vadd.f32 %v396, %v968
      %v970 = vpop.f32.mrb[0].mxu0
      %971 = vmatprep.mubr.f32.mxu0 0.0
      %972 = vmatmul.mubr.f32.gmra.mrb[0].mxu0 %v526
      %v973 = vpop.f32.mrb[0].mxu0
      %v974 = vadd.f32 %v396, %v973
      %v975 = vpop.f32.mrb[0].mxu0
      %976 = vmatprep.mubr.f32.mxu0 0.0
      %977 = vmatmul.mubr.f32.gmra.mrb[0].mxu0 %v529
      %v978 = vpop.f32.mrb[0].mxu0
      %v979 = vadd.f32 %v396, %v978
      %v980 = vpop.f32.mrb[0].mxu0
      %981 = vmatprep.mubr.f32.mxu0 0.0
      %982 = vmatmul.mubr.f32.gmra.mrb[0].mxu0 %v532
      %v983 = vpop.f32.mrb[0].mxu0
      %v984 = vadd.f32 %v396, %v983
      %v985 = vpop.f32.mrb[0].mxu0
      %986 = vmatprep.mubr.f32.mxu0 0.0
      %987 = vmatmul.mubr.f32.gmra.mrb[0].mxu0 %v535
      %v988 = vpop.f32.mrb[0].mxu0
      %v989 = vadd.f32 %v396, %v988
      %v990 = vpop.f32.mrb[0].mxu0
      %991 = vmatprep.mubr.f32.mxu0 0.0
      %992 = vmatmul.mubr.f32.gmra.mrb[0].mxu0 %v538
      %v993 = vpop.f32.mrb[0].mxu0
      %v994 = vadd.f32 %v396, %v993
      %v995 = vpop.f32.mrb[0].mxu0
      %996 = vmatprep.mubr.f32.mxu0 0.0
      %997 = vmatmul.mubr.f32.gmra.mrb[0].mxu0 %v541
      %v998 = vpop.f32.mrb[0].mxu0
      %v999 = vadd.f32 %v396, %v998
      %v1000 = vpop.f32.mrb[0].mxu0
      %1001 = vmatprep.mubr.f32.mxu0 0.0
      %1002 = vmatmul.mubr.f32.gmra.mrb[0].mxu0 %v544
      %v1003 = vpop.f32.mrb[0].mxu0
      %v1004 = vadd.f32 %v396, %v1003
      %v1005 = vpop.f32.mrb[0].mxu0
      %1006 = vmatprep.mubr.f32.mxu0 0.0
      %1007 = vmatmul.mubr.f32.gmra.mrb[0].mxu0 %v547
      %v1008 = vpop.f32.mrb[0].mxu0
      %v1009 = vadd.f32 %v396, %v1008
      %v1010 = vpop.f32.mrb[0].mxu0
      %1011 = vmatprep.mubr.f32.mxu0 0.0
      %1012 = vmatmul.mubr.f32.gmra.mrb[0].mxu0 %v550
      %v1013 = vpop.f32.mrb[0].mxu0
      %v1014 = vadd.f32 %v396, %v1013
      %v1015 = vpop.f32.mrb[0].mxu0
      %1016 = vmatprep.mubr.f32.mxu0 0.0
      %1017 = vmatmul.mubr.f32.gmra.mrb[0].mxu0 %v553
      %v1018 = vpop.f32.mrb[0].mxu0
      %v1019 = vadd.f32 %v396, %v1018
      %v1020 = vpop.f32.mrb[0].mxu0
      %1021 = vmatprep.mubr.f32.mxu0 0.0
      %1022 = vmatmul.mubr.f32.gmra.mrb[0].mxu0 %v556
      %v1023 = vpop.f32.mrb[0].mxu0
      %v1024 = vadd.f32 %v396, %v1023
      %v1025 = vpop.f32.mrb[0].mxu0
      %1026 = vmatprep.mubr.f32.mxu0 0.0
      %1027 = vmatmul.mubr.f32.gmra.mrb[0].mxu0 %v559
      %v1028 = vpop.f32.mrb[0].mxu0
      %v1029 = vadd.f32 %v396, %v1028
      %v1030 = vpop.f32.mrb[0].mxu0
      %1031 = vmatprep.mubr.f32.mxu0 0.0
      %1032 = vmatmul.mubr.f32.gmra.mrb[0].mxu0 %v562
      %v1033 = vpop.f32.mrb[0].mxu0
      %v1034 = vadd.f32 %v396, %v1033
      %v1035 = vpop.f32.mrb[0].mxu0
      %1036 = vmatprep.mubr.f32.mxu0 0.0
      %1037 = vmatmul.mubr.f32.gmra.mrb[0].mxu0 %v565
      %v1038 = vpop.f32.mrb[0].mxu0
      %v1039 = vadd.f32 %v396, %v1038
      %v1040 = vpop.f32.mrb[0].mxu0
      %1041 = vmatprep.mubr.f32.mxu0 0.0
      %1042 = vmatmul.mubr.f32.gmra.mrb[0].mxu0 %v568
      %v1043 = vpop.f32.mrb[0].mxu0
      %v1044 = vadd.f32 %v396, %v1043
      %v1045 = vpop.f32.mrb[0].mxu0
      %1046 = vmatprep.mubr.f32.mxu0 0.0
      %1047 = vmatmul.mubr.f32.gmra.mrb[0].mxu0 %v571
      %v1048 = vpop.f32.mrb[0].mxu0
      %v1049 = vadd.f32 %v396, %v1048
      %v1050 = vpop.f32.mrb[0].mxu0
      %1051 = vmatprep.mubr.f32.mxu0 0.0
      %1052 = vmatmul.mubr.f32.gmra.mrb[0].mxu0 %v574
      %v1053 = vpop.f32.mrb[0].mxu0
      %v1054 = vadd.f32 %v396, %v1053
      %v1055 = vpop.f32.mrb[0].mxu0
      %1056 = vmatprep.mubr.f32.mxu0 0.0
      %1057 = vmatmul.mubr.f32.gmra.mrb[0].mxu0 %v577
      %v1058 = vpop.f32.mrb[0].mxu0
      %v1059 = vadd.f32 %v396, %v1058
      %v1060 = vpop.f32.mrb[0].mxu0
      %1061 = vmatprep.mubr.f32.mxu0 0.0
      %1062 = vmatmul.mubr.f32.gmra.mrb[0].mxu0 %v580
      %v1063 = vpop.f32.mrb[0].mxu0
      %v1064 = vadd.f32 %v396, %v1063
      %v1065 = vpop.f32.mrb[0].mxu0
      %1066 = vmatprep.mubr.f32.mxu0 0.0
      %1067 = vmatmul.mubr.f32.gmra.mrb[0].mxu0 %v583
      %v1068 = vpop.f32.mrb[0].mxu0
      %v1069 = vadd.f32 %v396, %v1068
      %v1070 = vpop.f32.mrb[0].mxu0
      %1071 = vmatprep.mubr.f32.mxu0 0.0
      %1072 = vmatmul.mubr.f32.gmra.mrb[0].mxu0 %v586
      %v1073 = vpop.f32.mrb[0].mxu0
      %v1074 = vadd.f32 %v396, %v1073
      %v1075 = vpop.f32.mrb[0].mxu0
      %1076 = vmatprep.mubr.f32.mxu0 0.0
      %1077 = vmatmul.mubr.f32.gmra.mrb[0].mxu0 %v589
      %v1078 = vpop.f32.mrb[0].mxu0
      %v1079 = vadd.f32 %v396, %v1078
      %v1080 = vpop.f32.mrb[0].mxu0
      %1081 = vmatprep.mubr.f32.mxu0 0.0
      %1082 = vmatmul.mubr.f32.gmra.mrb[0].mxu0 %v592
      %v1083 = vpop.f32.mrb[0].mxu0
      %v1084 = vadd.f32 %v396, %v1083
      %v1085 = vpop.f32.mrb[0].mxu0
      %1086 = vmatprep.mubr.f32.mxu0 0.0
      %1087 = vmatmul.mubr.f32.gmra.mrb[0].mxu0 %v595
      %v1088 = vpop.f32.mrb[0].mxu0
      %v1089 = vadd.f32 %v396, %v1088
      %v1090 = vpop.f32.mrb[0].mxu0
      %1091 = vmatprep.mubr.f32.mxu0 0.0
      %1092 = vmatmul.mubr.f32.gmra.mrb[0].mxu0 %v598
      %v1093 = vpop.f32.mrb[0].mxu0
      %v1094 = vadd.f32 %v396, %v1093
      %v1095 = vpop.f32.mrb[0].mxu0
      %1096 = vmatprep.mubr.f32.mxu0 0.0
      %1097 = vmatmul.mubr.f32.gmra.mrb[0].mxu0 %v601
      %v1098 = vpop.f32.mrb[0].mxu0
      %v1099 = vadd.f32 %v396, %v1098
      %v1100 = vpop.f32.mrb[0].mxu0
      %1101 = vmatprep.mubr.f32.mxu0 0.0
      %1102 = vmatmul.mubr.f32.gmra.mrb[0].mxu0 %v604
      %v1103 = vpop.f32.mrb[0].mxu0
      %v1104 = vadd.f32 %v396, %v1103
      %v1105 = vpop.f32.mrb[0].mxu0
      %1106 = vmatprep.mubr.f32.mxu0 0.0
      %1107 = vmatmul.mubr.f32.gmra.mrb[0].mxu0 %v607
      %v1108 = vpop.f32.mrb[0].mxu0
      %v1109 = vadd.f32 %v396, %v1108
      %v1110 = vpop.f32.mrb[0].mxu0
      %1111 = vmatprep.mubr.f32.mxu0 0.0
      %1112 = vmatmul.mubr.f32.gmra.mrb[0].mxu0 %v610
      %v1113 = vpop.f32.mrb[0].mxu0
      %v1114 = vadd.f32 %v396, %v1113
      %v1115 = vpop.f32.mrb[0].mxu0
      %1116 = vmatprep.mubr.f32.mxu0 0.0
      %1117 = vmatmul.mubr.f32.gmra.mrb[0].mxu0 %v613
      %v1118 = vpop.f32.mrb[0].mxu0
      %v1119 = vadd.f32 %v396, %v1118
      %v1120 = vpop.f32.mrb[0].mxu0
      %1121 = vmatprep.mubr.f32.mxu0 0.0
      %1122 = vmatmul.mubr.f32.gmra.mrb[0].mxu0 %v616
      %v1123 = vpop.f32.mrb[0].mxu0
      %v1124 = vadd.f32 %v396, %v1123
      %v1125 = vpop.f32.mrb[0].mxu0
      %1126 = vmatprep.mubr.f32.mxu0 0.0
      %1127 = vmatmul.mubr.f32.gmra.mrb[0].mxu0 %v619
      %v1128 = vpop.f32.mrb[0].mxu0
      %v1129 = vadd.f32 %v396, %v1128
      %v1130 = vpop.f32.mrb[0].mxu0
      %1131 = vmatprep.mubr.f32.mxu0 0.0
      %1132 = vmatmul.mubr.f32.gmra.mrb[0].mxu0 %v622
      %v1133 = vpop.f32.mrb[0].mxu0
      %v1134 = vadd.f32 %v396, %v1133
      %v1135 = vpop.f32.mrb[0].mxu0
      %1136 = vmatprep.mubr.f32.mxu0 0.0
      %1137 = vmatmul.mubr.f32.gmra.mrb[0].mxu0 %v625
      %v1138 = vpop.f32.mrb[0].mxu0
      %v1139 = vadd.f32 %v396, %v1138
      %v1140 = vpop.f32.mrb[0].mxu0
      %1141 = vmatprep.mubr.f32.mxu0 0.0
      %1142 = vmatmul.mubr.f32.gmra.mrb[0].mxu0 %v628
      %v1143 = vpop.f32.mrb[0].mxu0
      %v1144 = vadd.f32 %v396, %v1143
      %v1145 = vpop.f32.mrb[0].mxu0
      %1146 = vmatprep.mubr.f32.mxu0 0.0
      %1147 = vmatmul.mubr.f32.gmra.mrb[0].mxu0 %v631
      %v1148 = vpop.f32.mrb[0].mxu0
      %v1149 = vadd.f32 %v396, %v1148
      %v1150 = vpop.f32.mrb[0].mxu0
      %1151 = vmatprep.mubr.f32.mxu0 0.0
      %1152 = vmatmul.mubr.f32.gmra.mrb[0].mxu0 %v634
      %v1153 = vpop.f32.mrb[0].mxu0
      %v1154 = vadd.f32 %v396, %v1153
      %v1155 = vpop.f32.mrb[0].mxu0
      %1156 = vmatprep.mubr.f32.mxu0 0.0
      %1157 = vmatmul.mubr.f32.gmra.mrb[0].mxu0 %v637
      %v1158 = vpop.f32.mrb[0].mxu0
      %v1159 = vadd.f32 %v396, %v1158
      %v1160 = vpop.f32.mrb[0].mxu0
      %1161 = vmatprep.mubr.f32.mxu0 0.0
      %1162 = vmatmul.mubr.f32.gmra.mrb[0].mxu0 %v640
      %v1163 = vpop.f32.mrb[0].mxu0
      %v1164 = vadd.f32 %v396, %v1163
      %v1165 = vpop.f32.mrb[0].mxu0
      %1166 = vmatprep.mubr.f32.mxu0 0.0
      %1167 = vmatmul.mubr.f32.gmra.mrb[0].mxu0 %v643
      %v1168 = vpop.f32.mrb[0].mxu0
      %v1169 = vadd.f32 %v396, %v1168
      %v1170 = vpop.f32.mrb[0].mxu0
      %1171 = vmatprep.mubr.f32.mxu0 0.0
      %1172 = vmatmul.mubr.f32.gmra.mrb[0].mxu0 %v646
      %v1173 = vpop.f32.mrb[0].mxu0
      %v1174 = vadd.f32 %v396, %v1173
      %v1175 = vpop.f32.mrb[0].mxu0
      %1176 = vmatprep.mubr.f32.mxu0 0.0
      %1177 = vmatmul.mubr.f32.gmra.mrb[0].mxu0 %v649
      %v1178 = vpop.f32.mrb[0].mxu0
      %v1179 = vadd.f32 %v396, %v1178
      %v1180 = vpop.f32.mrb[0].mxu0
      %1181 = vmatprep.mubr.f32.mxu0 0.0
      %1182 = vmatmul.mubr.f32.gmra.mrb[0].mxu0 %v652
      %v1183 = vpop.f32.mrb[0].mxu0
      %v1184 = vadd.f32 %v396, %v1183
      %v1185 = vpop.f32.mrb[0].mxu0
      %1186 = vmatprep.mubr.f32.mxu0 0.0
      %1187 = vmatmul.mubr.f32.gmra.mrb[0].mxu0 %v655
      %v1188 = vpop.f32.mrb[0].mxu0
      %v1189 = vadd.f32 %v396, %v1188
      %v1190 = vpop.f32.mrb[0].mxu0
      %1191 = vmatprep.mubr.f32.mxu0 0.0
      %1192 = vmatmul.mubr.f32.gmra.mrb[0].mxu0 %v658
      %v1193 = vpop.f32.mrb[0].mxu0
      %v1194 = vadd.f32 %v396, %v1193
      %v1195 = vpop.f32.mrb[0].mxu0
      %1196 = vmatprep.mubr.f32.mxu0 0.0
      %1197 = vmatmul.mubr.f32.gmra.mrb[0].mxu0 %v661
      %v1198 = vpop.f32.mrb[0].mxu0
      %v1199 = vadd.f32 %v396, %v1198
      %v1200 = vpop.f32.mrb[0].mxu0
      %1201 = vmatprep.mubr.f32.mxu0 0.0
      %1202 = vmatmul.mubr.f32.gmra.mrb[0].mxu0 %v664
      %v1203 = vpop.f32.mrb[0].mxu0
      %v1204 = vadd.f32 %v396, %v1203
      %v1205 = vpop.f32.mrb[0].mxu0
      %1206 = vmatprep.mubr.f32.mxu0 0.0
      %1207 = vmatmul.mubr.f32.gmra.mrb[0].mxu0 %v667
      %v1208 = vpop.f32.mrb[0].mxu0
      %v1209 = vadd.f32 %v396, %v1208
      %v1210 = vpop.f32.mrb[0].mxu0
      %1211 = vmatprep.mubr.f32.mxu0 0.0
      %1212 = vmatmul.mubr.f32.gmra.mrb[0].mxu0 %v670
      %v1213 = vpop.f32.mrb[0].mxu0
      %v1214 = vadd.f32 %v396, %v1213
      %v1215 = vpop.f32.mrb[0].mxu0
      %1216 = vmatprep.mubr.f32.mxu0 0.0
      %1217 = vmatmul.mubr.f32.gmra.mrb[0].mxu0 %v673
      %v1218 = vpop.f32.mrb[0].mxu0
      %v1219 = vadd.f32 %v396, %v1218
      %v1220 = vpop.f32.mrb[0].mxu0
      %1221 = vmatprep.mubr.f32.mxu0 0.0
      %1222 = vmatmul.mubr.f32.gmra.mrb[0].mxu0 %v676
      %v1223 = vpop.f32.mrb[0].mxu0
      %v1224 = vadd.f32 %v396, %v1223
      %v1225 = vpop.f32.mrb[0].mxu0
      %1226 = vmatprep.mubr.f32.mxu0 0.0
      %1227 = vmatmul.mubr.f32.gmra.mrb[0].mxu0 %v679
      %v1228 = vpop.f32.mrb[0].mxu0
      %v1229 = vadd.f32 %v396, %v1228
      %v1230 = vpop.f32.mrb[0].mxu0
      %1231 = vmatprep.mubr.f32.mxu0 0.0
      %1232 = vmatmul.mubr.f32.gmra.mrb[0].mxu0 %v682
      %v1233 = vpop.f32.mrb[0].mxu0
      %v1234 = vadd.f32 %v396, %v1233
      %v1235 = vpop.f32.mrb[0].mxu0
      %1236 = vmatprep.mubr.f32.mxu0 0.0
      %1237 = vmatmul.mubr.f32.gmra.mrb[0].mxu0 %v685
      %v1238 = vpop.f32.mrb[0].mxu0
      %v1239 = vadd.f32 %v396, %v1238
      %v1240 = vpop.f32.mrb[0].mxu0
      %1241 = vmatprep.mubr.f32.mxu0 0.0
      %1242 = vmatmul.mubr.f32.gmra.mrb[0].mxu0 %v688
      %v1243 = vpop.f32.mrb[0].mxu0
      %v1244 = vadd.f32 %v396, %v1243
      %v1245 = vpop.f32.mrb[0].mxu0
      %1246 = vmatprep.mubr.f32.mxu0 0.0
      %1247 = vmatmul.mubr.f32.gmra.mrb[0].mxu0 %v691
      %v1248 = vpop.f32.mrb[0].mxu0
      %v1249 = vadd.f32 %v396, %v1248
      %v1250 = vpop.f32.mrb[0].mxu0
      %1251 = vdwg.mxu0
      %v1252 = vmax.f32 %v764, 0.0
      %v1253 = vmax.f32 %v769, 0.0
      %v1254 = vmax.f32 %v774, 0.0
      %v1255 = vmax.f32 %v779, 0.0
      %v1256 = vmax.f32 %v784, 0.0
      %v1257 = vmax.f32 %v789, 0.0
      %v1258 = vmax.f32 %v794, 0.0
      %v1259 = vmax.f32 %v799, 0.0
      %v1260 = vmax.f32 %v804, 0.0
      %v1261 = vmax.f32 %v809, 0.0
      %v1262 = vmax.f32 %v814, 0.0
      %v1263 = vmax.f32 %v819, 0.0
      %v1264 = vmax.f32 %v824, 0.0
      %v1265 = vmax.f32 %v829, 0.0
      %v1266 = vmax.f32 %v834, 0.0
      %v1267 = vmax.f32 %v839, 0.0
      %v1268 = vmax.f32 %v844, 0.0
      %v1269 = vmax.f32 %v849, 0.0
      %v1270 = vmax.f32 %v854, 0.0
      %v1271 = vmax.f32 %v859, 0.0
      %v1272 = vmax.f32 %v864, 0.0
      %v1273 = vmax.f32 %v869, 0.0
      %v1274 = vmax.f32 %v874, 0.0
      %v1275 = vmax.f32 %v879, 0.0
      %v1276 = vmax.f32 %v884, 0.0
      %v1277 = vmax.f32 %v889, 0.0
      %v1278 = vmax.f32 %v894, 0.0
      %v1279 = vmax.f32 %v899, 0.0
      %v1280 = vmax.f32 %v904, 0.0
      %v1281 = vmax.f32 %v909, 0.0
      %v1282 = vmax.f32 %v914, 0.0
      %v1283 = vmax.f32 %v919, 0.0
      %v1284 = vmax.f32 %v924, 0.0
      %v1285 = vmax.f32 %v929, 0.0
      %v1286 = vmax.f32 %v934, 0.0
      %v1287 = vmax.f32 %v939, 0.0
      %v1288 = vmax.f32 %v944, 0.0
      %v1289 = vmax.f32 %v949, 0.0
      %v1290 = vmax.f32 %v954, 0.0
      %v1291 = vmax.f32 %v959, 0.0
      %v1292 = vmax.f32 %v964, 0.0
      %v1293 = vmax.f32 %v969, 0.0
      %v1294 = vmax.f32 %v974, 0.0
      %v1295 = vmax.f32 %v979, 0.0
      %v1296 = vmax.f32 %v984, 0.0
      %v1297 = vmax.f32 %v989, 0.0
      %v1298 = vmax.f32 %v994, 0.0
      %v1299 = vmax.f32 %v999, 0.0
      %v1300 = vmax.f32 %v1004, 0.0
      %v1301 = vmax.f32 %v1009, 0.0
      %v1302 = vmax.f32 %v1014, 0.0
      %v1303 = vmax.f32 %v1019, 0.0
      %v1304 = vmax.f32 %v1024, 0.0
      %v1305 = vmax.f32 %v1029, 0.0
      %v1306 = vmax.f32 %v1034, 0.0
      %v1307 = vmax.f32 %v1039, 0.0
      %v1308 = vmax.f32 %v1044, 0.0
      %v1309 = vmax.f32 %v1049, 0.0
      %v1310 = vmax.f32 %v1054, 0.0
      %v1311 = vmax.f32 %v1059, 0.0
      %v1312 = vmax.f32 %v1064, 0.0
      %v1313 = vmax.f32 %v1069, 0.0
      %v1314 = vmax.f32 %v1074, 0.0
      %v1315 = vmax.f32 %v1079, 0.0
      %v1316 = vmax.f32 %v1084, 0.0
      %v1317 = vmax.f32 %v1089, 0.0
      %v1318 = vmax.f32 %v1094, 0.0
      %v1319 = vmax.f32 %v1099, 0.0
      %v1320 = vmax.f32 %v1104, 0.0
      %v1321 = vmax.f32 %v1109, 0.0
      %v1322 = vmax.f32 %v1114, 0.0
      %v1323 = vmax.f32 %v1119, 0.0
      %v1324 = vmax.f32 %v1124, 0.0
      %v1325 = vmax.f32 %v1129, 0.0
      %v1326 = vmax.f32 %v1134, 0.0
      %v1327 = vmax.f32 %v1139, 0.0
      %v1328 = vmax.f32 %v1144, 0.0
      %v1329 = vmax.f32 %v1149, 0.0
      %v1330 = vmax.f32 %v1154, 0.0
      %v1331 = vmax.f32 %v1159, 0.0
      %v1332 = vmax.f32 %v1164, 0.0
      %v1333 = vmax.f32 %v1169, 0.0
      %v1334 = vmax.f32 %v1174, 0.0
      %v1335 = vmax.f32 %v1179, 0.0
      %v1336 = vmax.f32 %v1184, 0.0
      %v1337 = vmax.f32 %v1189, 0.0
      %v1338 = vmax.f32 %v1194, 0.0
      %v1339 = vmax.f32 %v1199, 0.0
      %v1340 = vmax.f32 %v1204, 0.0
      %v1341 = vmax.f32 %v1209, 0.0
      %v1342 = vmax.f32 %v1214, 0.0
      %v1343 = vmax.f32 %v1219, 0.0
      %v1344 = vmax.f32 %v1224, 0.0
      %v1345 = vmax.f32 %v1229, 0.0
      %v1346 = vmax.f32 %v1234, 0.0
      %v1347 = vmax.f32 %v1239, 0.0
      %v1348 = vmax.f32 %v1244, 0.0
      %v1349 = vmax.f32 %v1249, 0.0
      %v1350 = vpack.c.bf16 %v1253, %v1252
      %v1351 = vpack.c.bf16 %v1255, %v1254
      %v1352 = vpack.c.bf16 %v1257, %v1256
      %v1353 = vpack.c.bf16 %v1259, %v1258
      %v1354 = vpack.c.bf16 %v1261, %v1260
      %v1355 = vpack.c.bf16 %v1263, %v1262
      %v1356 = vpack.c.bf16 %v1265, %v1264
      %v1357 = vpack.c.bf16 %v1267, %v1266
      %v1358 = vpack.c.bf16 %v1269, %v1268
      %v1359 = vpack.c.bf16 %v1271, %v1270
      %v1360 = vpack.c.bf16 %v1273, %v1272
      %v1361 = vpack.c.bf16 %v1275, %v1274
      %v1362 = vpack.c.bf16 %v1277, %v1276
      %v1363 = vpack.c.bf16 %v1279, %v1278
      %v1364 = vpack.c.bf16 %v1281, %v1280
      %v1365 = vpack.c.bf16 %v1283, %v1282
      %v1366 = vpack.c.bf16 %v1285, %v1284
      %v1367 = vpack.c.bf16 %v1287, %v1286
      %v1368 = vpack.c.bf16 %v1289, %v1288
      %v1369 = vpack.c.bf16 %v1291, %v1290
      %v1370 = vpack.c.bf16 %v1293, %v1292
      %v1371 = vpack.c.bf16 %v1295, %v1294
      %v1372 = vpack.c.bf16 %v1297, %v1296
      %v1373 = vpack.c.bf16 %v1299, %v1298
      %v1374 = vpack.c.bf16 %v1301, %v1300
      %v1375 = vpack.c.bf16 %v1303, %v1302
      %v1376 = vpack.c.bf16 %v1305, %v1304
      %v1377 = vpack.c.bf16 %v1307, %v1306
      %v1378 = vpack.c.bf16 %v1309, %v1308
      %v1379 = vpack.c.bf16 %v1311, %v1310
      %v1380 = vpack.c.bf16 %v1313, %v1312
      %v1381 = vpack.c.bf16 %v1315, %v1314
      %v1382 = vpack.c.bf16 %v1317, %v1316
      %v1383 = vpack.c.bf16 %v1319, %v1318
      %v1384 = vpack.c.bf16 %v1321, %v1320
      %v1385 = vpack.c.bf16 %v1323, %v1322
      %v1386 = vpack.c.bf16 %v1325, %v1324
      %v1387 = vpack.c.bf16 %v1327, %v1326
      %v1388 = vpack.c.bf16 %v1329, %v1328
      %v1389 = vpack.c.bf16 %v1331, %v1330
      %v1390 = vpack.c.bf16 %v1333, %v1332
      %v1391 = vpack.c.bf16 %v1335, %v1334
      %v1392 = vpack.c.bf16 %v1337, %v1336
      %v1393 = vpack.c.bf16 %v1339, %v1338
      %v1394 = vpack.c.bf16 %v1341, %v1340
      %v1395 = vpack.c.bf16 %v1343, %v1342
      %v1396 = vpack.c.bf16 %v1345, %v1344
      %v1397 = vpack.c.bf16 %v1347, %v1346
      %v1398 = vpack.c.bf16 %v1349, %v1348
      %v1399 = vld [vmem:[%s3] sm:$0xf]
      %v1400 = vld [vmem:[%s3 + $0x4] sm:$0xf]
      %v1401 = vld [vmem:[%s3 + $0x8] sm:$0xf]
      %v1402 = vld [vmem:[%s3 + $0xc] sm:$0xf]
      %v1403 = vld [vmem:[%s3 + $0x10] sm:$0xf]
      %v1404 = vld [vmem:[%s3 + $0x14] sm:$0xf]
      %v1405 = vld [vmem:[%s3 + $0x18] sm:$0xf]
      %v1406 = vld [vmem:[%s3 + $0x1c] sm:$0xf]
      %v1407 = vld [vmem:[%s4] sm:$0x1]
      %v1409 = vlaneseq
      %v1410 = vshrl.u32 %v1409, 7
      %v1411 = vsub.s32 0, %v1410
      %v1412 = vrot.slane %v1407, %v1411
      %v1422 = vunpack.c.l.b16 %v1399
      %v1423 = vunpack.c.l.b16 %v1400
      %v1424 = vunpack.c.l.b16 %v1401
      %v1425 = vunpack.c.l.b16 %v1402
      %v1426 = vunpack.c.l.b16 %v1403
      %v1427 = vunpack.c.l.b16 %v1404
      %v1428 = vunpack.c.l.b16 %v1405
      %v1429 = vunpack.c.l.b16 %v1406
      %v1430 = vpack.c.b16 %v1423, %v1422
      %v1431 = vpack.c.b16 %v1425, %v1424
      %v1432 = vpack.c.b16 %v1427, %v1426
      %v1433 = vpack.c.b16 %v1429, %v1428
      %vm1438 = vcmask 523264
      %v1440 = vsel %vm1438, %v1350, 0
      %v1443 = vsel %vm1438, %v1351, 0
      %v1446 = vsel %vm1438, %v1352, 0
      %v1449 = vsel %vm1438, %v1353, 0
      %v1452 = vsel %vm1438, %v1354, 0
      %v1455 = vsel %vm1438, %v1355, 0
      %v1458 = vsel %vm1438, %v1356, 0
      %v1461 = vsel %vm1438, %v1357, 0
      %v1464 = vsel %vm1438, %v1358, 0
      %v1467 = vsel %vm1438, %v1359, 0
      %v1470 = vsel %vm1438, %v1360, 0
      %v1473 = vsel %vm1438, %v1361, 0
      %v1476 = vsel %vm1438, %v1362, 0
      %v1479 = vsel %vm1438, %v1363, 0
      %v1482 = vsel %vm1438, %v1364, 0
      %v1485 = vsel %vm1438, %v1365, 0
      %v1488 = vsel %vm1438, %v1366, 0
      %v1491 = vsel %vm1438, %v1367, 0
      %v1494 = vsel %vm1438, %v1368, 0
      %v1497 = vsel %vm1438, %v1369, 0
      %v1500 = vsel %vm1438, %v1370, 0
      %v1503 = vsel %vm1438, %v1371, 0
      %v1506 = vsel %vm1438, %v1372, 0
      %v1509 = vsel %vm1438, %v1373, 0
      %v1512 = vsel %vm1438, %v1374, 0
      %v1515 = vsel %vm1438, %v1375, 0
      %v1518 = vsel %vm1438, %v1376, 0
      %v1521 = vsel %vm1438, %v1377, 0
      %v1524 = vsel %vm1438, %v1378, 0
      %v1527 = vsel %vm1438, %v1379, 0
      %v1530 = vsel %vm1438, %v1380, 0
      %v1533 = vsel %vm1438, %v1381, 0
      %v1536 = vsel %vm1438, %v1382, 0
      %v1539 = vsel %vm1438, %v1383, 0
      %v1542 = vsel %vm1438, %v1384, 0
      %v1545 = vsel %vm1438, %v1385, 0
      %v1548 = vsel %vm1438, %v1386, 0
      %v1551 = vsel %vm1438, %v1387, 0
      %v1554 = vsel %vm1438, %v1388, 0
      %v1557 = vsel %vm1438, %v1389, 0
      %v1560 = vsel %vm1438, %v1390, 0
      %v1563 = vsel %vm1438, %v1391, 0
      %v1566 = vsel %vm1438, %v1392, 0
      %v1569 = vsel %vm1438, %v1393, 0
      %v1572 = vsel %vm1438, %v1394, 0
      %v1575 = vsel %vm1438, %v1395, 0
      %v1578 = vsel %vm1438, %v1396, 0
      %v1581 = vsel %vm1438, %v1397, 0
      %v1584 = vsel %vm1438, %v1398, 0
      %1586 = vmatprep.subr.bf16.mxu0 0
      %1587 = vmatpush1.bf16.msra.mxu0 %v1430
      %1588 = vmatprep.subr.bf16.mxu0 0
      %1589 = vmatpush1.bf16.msra.mxu0 %v1431
      %1590 = vmatprep.subr.bf16.mxu0 0
      %1591 = vmatpush1.bf16.msra.mxu0 %v1432
      %1592 = vmatprep.subr.bf16.mxu0 0
      %1593 = vmatpush1.bf16.msra.mxu0 %v1433
      %1594 = vmatprep.subr.bf16.mxu0 0
      %1595 = vmatpush1.bf16.msra.mxu0 0
      %1596 = vmatprep.subr.bf16.mxu0 0
      %1597 = vmatpush1.bf16.msra.mxu0 0
      %1598 = vmatprep.subr.bf16.mxu0 0
      %1599 = vmatpush1.bf16.msra.mxu0 0
      %1600 = vmatprep.subr.bf16.mxu0 0
      %1601 = vmatpush1.bf16.msra.mxu0 0
      %1602 = vmatprep.subr.bf16.mxu0 0
      %1603 = vmatpush1.bf16.msra.mxu0 0
      %1604 = vmatprep.subr.bf16.mxu0 0
      %1605 = vmatpush1.bf16.msra.mxu0 0
      %1606 = vmatprep.subr.bf16.mxu0 0
      %1607 = vmatpush1.bf16.msra.mxu0 0
      %1608 = vmatprep.subr.bf16.mxu0 0
      %1609 = vmatpush1.bf16.msra.mxu0 0
      %1610 = vmatprep.subr.bf16.mxu0 0
      %1611 = vmatpush1.bf16.msra.mxu0 0
      %1612 = vmatprep.subr.bf16.mxu0 0
      %1613 = vmatpush1.bf16.msra.mxu0 0
      %1614 = vmatprep.subr.bf16.mxu0 0
      %1615 = vmatpush1.bf16.msra.mxu0 0
      %1616 = vmatprep.subr.bf16.mxu0 0
      %1617 = vmatpush1.bf16.msra.mxu0 0
      %1618 = vmatprep.mubr.bf16.mxu0 0
      %1619 = vmatmul.mubr.bf16.gmra.mrb[0].mxu0 %v1440
      %v1620 = vpop.f32.mrb[0].mxu0
      %v1621 = vadd.f32 %v1412, %v1620
      %v1622 = vpop.f32.mrb[0].mxu0
      %v1623 = vpop.f32.mrb[0].mxu0
      %v1624 = vadd.f32 %v1412, %v1623
      %v1625 = vpop.f32.mrb[0].mxu0
      %1626 = vmatprep.mubr.bf16.mxu0 0
      %1627 = vmatmul.mubr.bf16.gmra.mrb[0].mxu0 %v1443
      %v1628 = vpop.f32.mrb[0].mxu0
      %v1629 = vadd.f32 %v1412, %v1628
      %v1630 = vpop.f32.mrb[0].mxu0
      %v1631 = vpop.f32.mrb[0].mxu0
      %v1632 = vadd.f32 %v1412, %v1631
      %v1633 = vpop.f32.mrb[0].mxu0
      %1634 = vmatprep.mubr.bf16.mxu0 0
      %1635 = vmatmul.mubr.bf16.gmra.mrb[0].mxu0 %v1446
      %v1636 = vpop.f32.mrb[0].mxu0
      %v1637 = vadd.f32 %v1412, %v1636
      %v1638 = vpop.f32.mrb[0].mxu0
      %v1639 = vpop.f32.mrb[0].mxu0
      %v1640 = vadd.f32 %v1412, %v1639
      %v1641 = vpop.f32.mrb[0].mxu0
      %1642 = vmatprep.mubr.bf16.mxu0 0
      %1643 = vmatmul.mubr.bf16.gmra.mrb[0].mxu0 %v1449
      %v1644 = vpop.f32.mrb[0].mxu0
      %v1645 = vadd.f32 %v1412, %v1644
      %v1646 = vpop.f32.mrb[0].mxu0
      %v1647 = vpop.f32.mrb[0].mxu0
      %v1648 = vadd.f32 %v1412, %v1647
      %v1649 = vpop.f32.mrb[0].mxu0
      %1650 = vmatprep.mubr.bf16.mxu0 0
      %1651 = vmatmul.mubr.bf16.gmra.mrb[0].mxu0 %v1452
      %v1652 = vpop.f32.mrb[0].mxu0
      %v1653 = vadd.f32 %v1412, %v1652
      %v1654 = vpop.f32.mrb[0].mxu0
      %v1655 = vpop.f32.mrb[0].mxu0
      %v1656 = vadd.f32 %v1412, %v1655
      %v1657 = vpop.f32.mrb[0].mxu0
      %1658 = vmatprep.mubr.bf16.mxu0 0
      %1659 = vmatmul.mubr.bf16.gmra.mrb[0].mxu0 %v1455
      %v1660 = vpop.f32.mrb[0].mxu0
      %v1661 = vadd.f32 %v1412, %v1660
      %v1662 = vpop.f32.mrb[0].mxu0
      %v1663 = vpop.f32.mrb[0].mxu0
      %v1664 = vadd.f32 %v1412, %v1663
      %v1665 = vpop.f32.mrb[0].mxu0
      %1666 = vmatprep.mubr.bf16.mxu0 0
      %1667 = vmatmul.mubr.bf16.gmra.mrb[0].mxu0 %v1458
      %v1668 = vpop.f32.mrb[0].mxu0
      %v1669 = vadd.f32 %v1412, %v1668
      %v1670 = vpop.f32.mrb[0].mxu0
      %v1671 = vpop.f32.mrb[0].mxu0
      %v1672 = vadd.f32 %v1412, %v1671
      %v1673 = vpop.f32.mrb[0].mxu0
      %1674 = vmatprep.mubr.bf16.mxu0 0
      %1675 = vmatmul.mubr.bf16.gmra.mrb[0].mxu0 %v1461
      %v1676 = vpop.f32.mrb[0].mxu0
      %v1677 = vadd.f32 %v1412, %v1676
      %v1678 = vpop.f32.mrb[0].mxu0
      %v1679 = vpop.f32.mrb[0].mxu0
      %v1680 = vadd.f32 %v1412, %v1679
      %v1681 = vpop.f32.mrb[0].mxu0
      %1682 = vmatprep.mubr.bf16.mxu0 0
      %1683 = vmatmul.mubr.bf16.gmra.mrb[0].mxu0 %v1464
      %v1684 = vpop.f32.mrb[0].mxu0
      %v1685 = vadd.f32 %v1412, %v1684
      %v1686 = vpop.f32.mrb[0].mxu0
      %v1687 = vpop.f32.mrb[0].mxu0
      %v1688 = vadd.f32 %v1412, %v1687
      %v1689 = vpop.f32.mrb[0].mxu0
      %1690 = vmatprep.mubr.bf16.mxu0 0
      %1691 = vmatmul.mubr.bf16.gmra.mrb[0].mxu0 %v1467
      %v1692 = vpop.f32.mrb[0].mxu0
      %v1693 = vadd.f32 %v1412, %v1692
      %v1694 = vpop.f32.mrb[0].mxu0
      %v1695 = vpop.f32.mrb[0].mxu0
      %v1696 = vadd.f32 %v1412, %v1695
      %v1697 = vpop.f32.mrb[0].mxu0
      %1698 = vmatprep.mubr.bf16.mxu0 0
      %1699 = vmatmul.mubr.bf16.gmra.mrb[0].mxu0 %v1470
      %v1700 = vpop.f32.mrb[0].mxu0
      %v1701 = vadd.f32 %v1412, %v1700
      %v1702 = vpop.f32.mrb[0].mxu0
      %v1703 = vpop.f32.mrb[0].mxu0
      %v1704 = vadd.f32 %v1412, %v1703
      %v1705 = vpop.f32.mrb[0].mxu0
      %1706 = vmatprep.mubr.bf16.mxu0 0
      %1707 = vmatmul.mubr.bf16.gmra.mrb[0].mxu0 %v1473
      %v1708 = vpop.f32.mrb[0].mxu0
      %v1709 = vadd.f32 %v1412, %v1708
      %v1710 = vpop.f32.mrb[0].mxu0
      %v1711 = vpop.f32.mrb[0].mxu0
      %v1712 = vadd.f32 %v1412, %v1711
      %v1713 = vpop.f32.mrb[0].mxu0
      %1714 = vmatprep.mubr.bf16.mxu0 0
      %1715 = vmatmul.mubr.bf16.gmra.mrb[0].mxu0 %v1476
      %v1716 = vpop.f32.mrb[0].mxu0
      %v1717 = vadd.f32 %v1412, %v1716
      %v1718 = vpop.f32.mrb[0].mxu0
      %v1719 = vpop.f32.mrb[0].mxu0
      %v1720 = vadd.f32 %v1412, %v1719
      %v1721 = vpop.f32.mrb[0].mxu0
      %1722 = vmatprep.mubr.bf16.mxu0 0
      %1723 = vmatmul.mubr.bf16.gmra.mrb[0].mxu0 %v1479
      %v1724 = vpop.f32.mrb[0].mxu0
      %v1725 = vadd.f32 %v1412, %v1724
      %v1726 = vpop.f32.mrb[0].mxu0
      %v1727 = vpop.f32.mrb[0].mxu0
      %v1728 = vadd.f32 %v1412, %v1727
      %v1729 = vpop.f32.mrb[0].mxu0
      %1730 = vmatprep.mubr.bf16.mxu0 0
      %1731 = vmatmul.mubr.bf16.gmra.mrb[0].mxu0 %v1482
      %v1732 = vpop.f32.mrb[0].mxu0
      %v1733 = vadd.f32 %v1412, %v1732
      %v1734 = vpop.f32.mrb[0].mxu0
      %v1735 = vpop.f32.mrb[0].mxu0
      %v1736 = vadd.f32 %v1412, %v1735
      %v1737 = vpop.f32.mrb[0].mxu0
      %1738 = vmatprep.mubr.bf16.mxu0 0
      %1739 = vmatmul.mubr.bf16.gmra.mrb[0].mxu0 %v1485
      %v1740 = vpop.f32.mrb[0].mxu0
      %v1741 = vadd.f32 %v1412, %v1740
      %v1742 = vpop.f32.mrb[0].mxu0
      %v1743 = vpop.f32.mrb[0].mxu0
      %v1744 = vadd.f32 %v1412, %v1743
      %v1745 = vpop.f32.mrb[0].mxu0
      %1746 = vmatprep.mubr.bf16.mxu0 0
      %1747 = vmatmul.mubr.bf16.gmra.mrb[0].mxu0 %v1488
      %v1748 = vpop.f32.mrb[0].mxu0
      %v1749 = vadd.f32 %v1412, %v1748
      %v1750 = vpop.f32.mrb[0].mxu0
      %v1751 = vpop.f32.mrb[0].mxu0
      %v1752 = vadd.f32 %v1412, %v1751
      %v1753 = vpop.f32.mrb[0].mxu0
      %1754 = vmatprep.mubr.bf16.mxu0 0
      %1755 = vmatmul.mubr.bf16.gmra.mrb[0].mxu0 %v1491
      %v1756 = vpop.f32.mrb[0].mxu0
      %v1757 = vadd.f32 %v1412, %v1756
      %v1758 = vpop.f32.mrb[0].mxu0
      %v1759 = vpop.f32.mrb[0].mxu0
      %v1760 = vadd.f32 %v1412, %v1759
      %v1761 = vpop.f32.mrb[0].mxu0
      %1762 = vmatprep.mubr.bf16.mxu0 0
      %1763 = vmatmul.mubr.bf16.gmra.mrb[0].mxu0 %v1494
      %v1764 = vpop.f32.mrb[0].mxu0
      %v1765 = vadd.f32 %v1412, %v1764
      %v1766 = vpop.f32.mrb[0].mxu0
      %v1767 = vpop.f32.mrb[0].mxu0
      %v1768 = vadd.f32 %v1412, %v1767
      %v1769 = vpop.f32.mrb[0].mxu0
      %1770 = vmatprep.mubr.bf16.mxu0 0
      %1771 = vmatmul.mubr.bf16.gmra.mrb[0].mxu0 %v1497
      %v1772 = vpop.f32.mrb[0].mxu0
      %v1773 = vadd.f32 %v1412, %v1772
      %v1774 = vpop.f32.mrb[0].mxu0
      %v1775 = vpop.f32.mrb[0].mxu0
      %v1776 = vadd.f32 %v1412, %v1775
      %v1777 = vpop.f32.mrb[0].mxu0
      %1778 = vmatprep.mubr.bf16.mxu0 0
      %1779 = vmatmul.mubr.bf16.gmra.mrb[0].mxu0 %v1500
      %v1780 = vpop.f32.mrb[0].mxu0
      %v1781 = vadd.f32 %v1412, %v1780
      %v1782 = vpop.f32.mrb[0].mxu0
      %v1783 = vpop.f32.mrb[0].mxu0
      %v1784 = vadd.f32 %v1412, %v1783
      %v1785 = vpop.f32.mrb[0].mxu0
      %1786 = vmatprep.mubr.bf16.mxu0 0
      %1787 = vmatmul.mubr.bf16.gmra.mrb[0].mxu0 %v1503
      %v1788 = vpop.f32.mrb[0].mxu0
      %v1789 = vadd.f32 %v1412, %v1788
      %v1790 = vpop.f32.mrb[0].mxu0
      %v1791 = vpop.f32.mrb[0].mxu0
      %v1792 = vadd.f32 %v1412, %v1791
      %v1793 = vpop.f32.mrb[0].mxu0
      %1794 = vmatprep.mubr.bf16.mxu0 0
      %1795 = vmatmul.mubr.bf16.gmra.mrb[0].mxu0 %v1506
      %v1796 = vpop.f32.mrb[0].mxu0
      %v1797 = vadd.f32 %v1412, %v1796
      %v1798 = vpop.f32.mrb[0].mxu0
      %v1799 = vpop.f32.mrb[0].mxu0
      %v1800 = vadd.f32 %v1412, %v1799
      %v1801 = vpop.f32.mrb[0].mxu0
      %1802 = vmatprep.mubr.bf16.mxu0 0
      %1803 = vmatmul.mubr.bf16.gmra.mrb[0].mxu0 %v1509
      %v1804 = vpop.f32.mrb[0].mxu0
      %v1805 = vadd.f32 %v1412, %v1804
      %v1806 = vpop.f32.mrb[0].mxu0
      %v1807 = vpop.f32.mrb[0].mxu0
      %v1808 = vadd.f32 %v1412, %v1807
      %v1809 = vpop.f32.mrb[0].mxu0
      %1810 = vmatprep.mubr.bf16.mxu0 0
      %1811 = vmatmul.mubr.bf16.gmra.mrb[0].mxu0 %v1512
      %v1812 = vpop.f32.mrb[0].mxu0
      %v1813 = vadd.f32 %v1412, %v1812
      %v1814 = vpop.f32.mrb[0].mxu0
      %v1815 = vpop.f32.mrb[0].mxu0
      %v1816 = vadd.f32 %v1412, %v1815
      %v1817 = vpop.f32.mrb[0].mxu0
      %1818 = vmatprep.mubr.bf16.mxu0 0
      %1819 = vmatmul.mubr.bf16.gmra.mrb[0].mxu0 %v1515
      %v1820 = vpop.f32.mrb[0].mxu0
      %v1821 = vadd.f32 %v1412, %v1820
      %v1822 = vpop.f32.mrb[0].mxu0
      %v1823 = vpop.f32.mrb[0].mxu0
      %v1824 = vadd.f32 %v1412, %v1823
      %v1825 = vpop.f32.mrb[0].mxu0
      %1826 = vmatprep.mubr.bf16.mxu0 0
      %1827 = vmatmul.mubr.bf16.gmra.mrb[0].mxu0 %v1518
      %v1828 = vpop.f32.mrb[0].mxu0
      %v1829 = vadd.f32 %v1412, %v1828
      %v1830 = vpop.f32.mrb[0].mxu0
      %v1831 = vpop.f32.mrb[0].mxu0
      %v1832 = vadd.f32 %v1412, %v1831
      %v1833 = vpop.f32.mrb[0].mxu0
      %1834 = vmatprep.mubr.bf16.mxu0 0
      %1835 = vmatmul.mubr.bf16.gmra.mrb[0].mxu0 %v1521
      %v1836 = vpop.f32.mrb[0].mxu0
      %v1837 = vadd.f32 %v1412, %v1836
      %v1838 = vpop.f32.mrb[0].mxu0
      %v1839 = vpop.f32.mrb[0].mxu0
      %v1840 = vadd.f32 %v1412, %v1839
      %v1841 = vpop.f32.mrb[0].mxu0
      %1842 = vmatprep.mubr.bf16.mxu0 0
      %1843 = vmatmul.mubr.bf16.gmra.mrb[0].mxu0 %v1524
      %v1844 = vpop.f32.mrb[0].mxu0
      %v1845 = vadd.f32 %v1412, %v1844
      %v1846 = vpop.f32.mrb[0].mxu0
      %v1847 = vpop.f32.mrb[0].mxu0
      %v1848 = vadd.f32 %v1412, %v1847
      %v1849 = vpop.f32.mrb[0].mxu0
      %1850 = vmatprep.mubr.bf16.mxu0 0
      %1851 = vmatmul.mubr.bf16.gmra.mrb[0].mxu0 %v1527
      %v1852 = vpop.f32.mrb[0].mxu0
      %v1853 = vadd.f32 %v1412, %v1852
      %v1854 = vpop.f32.mrb[0].mxu0
      %v1855 = vpop.f32.mrb[0].mxu0
      %v1856 = vadd.f32 %v1412, %v1855
      %v1857 = vpop.f32.mrb[0].mxu0
      %1858 = vmatprep.mubr.bf16.mxu0 0
      %1859 = vmatmul.mubr.bf16.gmra.mrb[0].mxu0 %v1530
      %v1860 = vpop.f32.mrb[0].mxu0
      %v1861 = vadd.f32 %v1412, %v1860
      %v1862 = vpop.f32.mrb[0].mxu0
      %v1863 = vpop.f32.mrb[0].mxu0
      %v1864 = vadd.f32 %v1412, %v1863
      %v1865 = vpop.f32.mrb[0].mxu0
      %1866 = vmatprep.mubr.bf16.mxu0 0
      %1867 = vmatmul.mubr.bf16.gmra.mrb[0].mxu0 %v1533
      %v1868 = vpop.f32.mrb[0].mxu0
      %v1869 = vadd.f32 %v1412, %v1868
      %v1870 = vpop.f32.mrb[0].mxu0
      %v1871 = vpop.f32.mrb[0].mxu0
      %v1872 = vadd.f32 %v1412, %v1871
      %v1873 = vpop.f32.mrb[0].mxu0
      %1874 = vmatprep.mubr.bf16.mxu0 0
      %1875 = vmatmul.mubr.bf16.gmra.mrb[0].mxu0 %v1536
      %v1876 = vpop.f32.mrb[0].mxu0
      %v1877 = vadd.f32 %v1412, %v1876
      %v1878 = vpop.f32.mrb[0].mxu0
      %v1879 = vpop.f32.mrb[0].mxu0
      %v1880 = vadd.f32 %v1412, %v1879
      %v1881 = vpop.f32.mrb[0].mxu0
      %1882 = vmatprep.mubr.bf16.mxu0 0
      %1883 = vmatmul.mubr.bf16.gmra.mrb[0].mxu0 %v1539
      %v1884 = vpop.f32.mrb[0].mxu0
      %v1885 = vadd.f32 %v1412, %v1884
      %v1886 = vpop.f32.mrb[0].mxu0
      %v1887 = vpop.f32.mrb[0].mxu0
      %v1888 = vadd.f32 %v1412, %v1887
      %v1889 = vpop.f32.mrb[0].mxu0
      %1890 = vmatprep.mubr.bf16.mxu0 0
      %1891 = vmatmul.mubr.bf16.gmra.mrb[0].mxu0 %v1542
      %v1892 = vpop.f32.mrb[0].mxu0
      %v1893 = vadd.f32 %v1412, %v1892
      %v1894 = vpop.f32.mrb[0].mxu0
      %v1895 = vpop.f32.mrb[0].mxu0
      %v1896 = vadd.f32 %v1412, %v1895
      %v1897 = vpop.f32.mrb[0].mxu0
      %1898 = vmatprep.mubr.bf16.mxu0 0
      %1899 = vmatmul.mubr.bf16.gmra.mrb[0].mxu0 %v1545
      %v1900 = vpop.f32.mrb[0].mxu0
      %v1901 = vadd.f32 %v1412, %v1900
      %v1902 = vpop.f32.mrb[0].mxu0
      %v1903 = vpop.f32.mrb[0].mxu0
      %v1904 = vadd.f32 %v1412, %v1903
      %v1905 = vpop.f32.mrb[0].mxu0
      %1906 = vmatprep.mubr.bf16.mxu0 0
      %1907 = vmatmul.mubr.bf16.gmra.mrb[0].mxu0 %v1548
      %v1908 = vpop.f32.mrb[0].mxu0
      %v1909 = vadd.f32 %v1412, %v1908
      %v1910 = vpop.f32.mrb[0].mxu0
      %v1911 = vpop.f32.mrb[0].mxu0
      %v1912 = vadd.f32 %v1412, %v1911
      %v1913 = vpop.f32.mrb[0].mxu0
      %1914 = vmatprep.mubr.bf16.mxu0 0
      %1915 = vmatmul.mubr.bf16.gmra.mrb[0].mxu0 %v1551
      %v1916 = vpop.f32.mrb[0].mxu0
      %v1917 = vadd.f32 %v1412, %v1916
      %v1918 = vpop.f32.mrb[0].mxu0
      %v1919 = vpop.f32.mrb[0].mxu0
      %v1920 = vadd.f32 %v1412, %v1919
      %v1921 = vpop.f32.mrb[0].mxu0
      %1922 = vmatprep.mubr.bf16.mxu0 0
      %1923 = vmatmul.mubr.bf16.gmra.mrb[0].mxu0 %v1554
      %v1924 = vpop.f32.mrb[0].mxu0
      %v1925 = vadd.f32 %v1412, %v1924
      %v1926 = vpop.f32.mrb[0].mxu0
      %v1927 = vpop.f32.mrb[0].mxu0
      %v1928 = vadd.f32 %v1412, %v1927
      %v1929 = vpop.f32.mrb[0].mxu0
      %1930 = vmatprep.mubr.bf16.mxu0 0
      %1931 = vmatmul.mubr.bf16.gmra.mrb[0].mxu0 %v1557
      %v1932 = vpop.f32.mrb[0].mxu0
      %v1933 = vadd.f32 %v1412, %v1932
      %v1934 = vpop.f32.mrb[0].mxu0
      %v1935 = vpop.f32.mrb[0].mxu0
      %v1936 = vadd.f32 %v1412, %v1935
      %v1937 = vpop.f32.mrb[0].mxu0
      %1938 = vmatprep.mubr.bf16.mxu0 0
      %1939 = vmatmul.mubr.bf16.gmra.mrb[0].mxu0 %v1560
      %v1940 = vpop.f32.mrb[0].mxu0
      %v1941 = vadd.f32 %v1412, %v1940
      %v1942 = vpop.f32.mrb[0].mxu0
      %v1943 = vpop.f32.mrb[0].mxu0
      %v1944 = vadd.f32 %v1412, %v1943
      %v1945 = vpop.f32.mrb[0].mxu0
      %1946 = vmatprep.mubr.bf16.mxu0 0
      %1947 = vmatmul.mubr.bf16.gmra.mrb[0].mxu0 %v1563
      %v1948 = vpop.f32.mrb[0].mxu0
      %v1949 = vadd.f32 %v1412, %v1948
      %v1950 = vpop.f32.mrb[0].mxu0
      %v1951 = vpop.f32.mrb[0].mxu0
      %v1952 = vadd.f32 %v1412, %v1951
      %v1953 = vpop.f32.mrb[0].mxu0
      %1954 = vmatprep.mubr.bf16.mxu0 0
      %1955 = vmatmul.mubr.bf16.gmra.mrb[0].mxu0 %v1566
      %v1956 = vpop.f32.mrb[0].mxu0
      %v1957 = vadd.f32 %v1412, %v1956
      %v1958 = vpop.f32.mrb[0].mxu0
      %v1959 = vpop.f32.mrb[0].mxu0
      %v1960 = vadd.f32 %v1412, %v1959
      %v1961 = vpop.f32.mrb[0].mxu0
      %1962 = vmatprep.mubr.bf16.mxu0 0
      %1963 = vmatmul.mubr.bf16.gmra.mrb[0].mxu0 %v1569
      %v1964 = vpop.f32.mrb[0].mxu0
      %v1965 = vadd.f32 %v1412, %v1964
      %v1966 = vpop.f32.mrb[0].mxu0
      %v1967 = vpop.f32.mrb[0].mxu0
      %v1968 = vadd.f32 %v1412, %v1967
      %v1969 = vpop.f32.mrb[0].mxu0
      %1970 = vmatprep.mubr.bf16.mxu0 0
      %1971 = vmatmul.mubr.bf16.gmra.mrb[0].mxu0 %v1572
      %v1972 = vpop.f32.mrb[0].mxu0
      %v1973 = vadd.f32 %v1412, %v1972
      %v1974 = vpop.f32.mrb[0].mxu0
      %v1975 = vpop.f32.mrb[0].mxu0
      %v1976 = vadd.f32 %v1412, %v1975
      %v1977 = vpop.f32.mrb[0].mxu0
      %1978 = vmatprep.mubr.bf16.mxu0 0
      %1979 = vmatmul.mubr.bf16.gmra.mrb[0].mxu0 %v1575
      %v1980 = vpop.f32.mrb[0].mxu0
      %v1981 = vadd.f32 %v1412, %v1980
      %v1982 = vpop.f32.mrb[0].mxu0
      %v1983 = vpop.f32.mrb[0].mxu0
      %v1984 = vadd.f32 %v1412, %v1983
      %v1985 = vpop.f32.mrb[0].mxu0
      %1986 = vmatprep.mubr.bf16.mxu0 0
      %1987 = vmatmul.mubr.bf16.gmra.mrb[0].mxu0 %v1578
      %v1988 = vpop.f32.mrb[0].mxu0
      %v1989 = vadd.f32 %v1412, %v1988
      %v1990 = vpop.f32.mrb[0].mxu0
      %v1991 = vpop.f32.mrb[0].mxu0
      %v1992 = vadd.f32 %v1412, %v1991
      %v1993 = vpop.f32.mrb[0].mxu0
      %1994 = vmatprep.mubr.bf16.mxu0 0
      %1995 = vmatmul.mubr.bf16.gmra.mrb[0].mxu0 %v1581
      %v1996 = vpop.f32.mrb[0].mxu0
      %v1997 = vadd.f32 %v1412, %v1996
      %v1998 = vpop.f32.mrb[0].mxu0
      %v1999 = vpop.f32.mrb[0].mxu0
      %v2000 = vadd.f32 %v1412, %v1999
      %v2001 = vpop.f32.mrb[0].mxu0
      %2002 = vmatprep.mubr.bf16.mxu0 0
      %2003 = vmatmul.mubr.bf16.gmra.mrb[0].mxu0 %v1584
      %v2004 = vpop.f32.mrb[0].mxu0
      %v2005 = vadd.f32 %v1412, %v2004
      %v2006 = vpop.f32.mrb[0].mxu0
      %v2007 = vpop.f32.mrb[0].mxu0
      %v2008 = vadd.f32 %v1412, %v2007
      %v2009 = vpop.f32.mrb[0].mxu0
      %2010 = vdwg.mxu0
      %v2011 = vmax.f32 %v1621, 0.0
      %v2012 = vmax.f32 %v1624, 0.0
      %v2013 = vmax.f32 %v1629, 0.0
      %v2014 = vmax.f32 %v1632, 0.0
      %v2015 = vmax.f32 %v1637, 0.0
      %v2016 = vmax.f32 %v1640, 0.0
      %v2017 = vmax.f32 %v1645, 0.0
      %v2018 = vmax.f32 %v1648, 0.0
      %v2019 = vmax.f32 %v1653, 0.0
      %v2020 = vmax.f32 %v1656, 0.0
      %v2021 = vmax.f32 %v1661, 0.0
      %v2022 = vmax.f32 %v1664, 0.0
      %v2023 = vmax.f32 %v1669, 0.0
      %v2024 = vmax.f32 %v1672, 0.0
      %v2025 = vmax.f32 %v1677, 0.0
      %v2026 = vmax.f32 %v1680, 0.0
      %v2027 = vmax.f32 %v1685, 0.0
      %v2028 = vmax.f32 %v1688, 0.0
      %v2029 = vmax.f32 %v1693, 0.0
      %v2030 = vmax.f32 %v1696, 0.0
      %v2031 = vmax.f32 %v1701, 0.0
      %v2032 = vmax.f32 %v1704, 0.0
      %v2033 = vmax.f32 %v1709, 0.0
      %v2034 = vmax.f32 %v1712, 0.0
      %v2035 = vmax.f32 %v1717, 0.0
      %v2036 = vmax.f32 %v1720, 0.0
      %v2037 = vmax.f32 %v1725, 0.0
      %v2038 = vmax.f32 %v1728, 0.0
      %v2039 = vmax.f32 %v1733, 0.0
      %v2040 = vmax.f32 %v1736, 0.0
      %v2041 = vmax.f32 %v1741, 0.0
      %v2042 = vmax.f32 %v1744, 0.0
      %v2043 = vmax.f32 %v1749, 0.0
      %v2044 = vmax.f32 %v1752, 0.0
      %v2045 = vmax.f32 %v1757, 0.0
      %v2046 = vmax.f32 %v1760, 0.0
      %v2047 = vmax.f32 %v1765, 0.0
      %v2048 = vmax.f32 %v1768, 0.0
      %v2049 = vmax.f32 %v1773, 0.0
      %v2050 = vmax.f32 %v1776, 0.0
      %v2051 = vmax.f32 %v1781, 0.0
      %v2052 = vmax.f32 %v1784, 0.0
      %v2053 = vmax.f32 %v1789, 0.0
      %v2054 = vmax.f32 %v1792, 0.0
      %v2055 = vmax.f32 %v1797, 0.0
      %v2056 = vmax.f32 %v1800, 0.0
      %v2057 = vmax.f32 %v1805, 0.0
      %v2058 = vmax.f32 %v1808, 0.0
      %v2059 = vmax.f32 %v1813, 0.0
      %v2060 = vmax.f32 %v1816, 0.0
      %v2061 = vmax.f32 %v1821, 0.0
      %v2062 = vmax.f32 %v1824, 0.0
      %v2063 = vmax.f32 %v1829, 0.0
      %v2064 = vmax.f32 %v1832, 0.0
      %v2065 = vmax.f32 %v1837, 0.0
      %v2066 = vmax.f32 %v1840, 0.0
      %v2067 = vmax.f32 %v1845, 0.0
      %v2068 = vmax.f32 %v1848, 0.0
      %v2069 = vmax.f32 %v1853, 0.0
      %v2070 = vmax.f32 %v1856, 0.0
      %v2071 = vmax.f32 %v1861, 0.0
      %v2072 = vmax.f32 %v1864, 0.0
      %v2073 = vmax.f32 %v1869, 0.0
      %v2074 = vmax.f32 %v1872, 0.0
      %v2075 = vmax.f32 %v1877, 0.0
      %v2076 = vmax.f32 %v1880, 0.0
      %v2077 = vmax.f32 %v1885, 0.0
      %v2078 = vmax.f32 %v1888, 0.0
      %v2079 = vmax.f32 %v1893, 0.0
      %v2080 = vmax.f32 %v1896, 0.0
      %v2081 = vmax.f32 %v1901, 0.0
      %v2082 = vmax.f32 %v1904, 0.0
      %v2083 = vmax.f32 %v1909, 0.0
      %v2084 = vmax.f32 %v1912, 0.0
      %v2085 = vmax.f32 %v1917, 0.0
      %v2086 = vmax.f32 %v1920, 0.0
      %v2087 = vmax.f32 %v1925, 0.0
      %v2088 = vmax.f32 %v1928, 0.0
      %v2089 = vmax.f32 %v1933, 0.0
      %v2090 = vmax.f32 %v1936, 0.0
      %v2091 = vmax.f32 %v1941, 0.0
      %v2092 = vmax.f32 %v1944, 0.0
      %v2093 = vmax.f32 %v1949, 0.0
      %v2094 = vmax.f32 %v1952, 0.0
      %v2095 = vmax.f32 %v1957, 0.0
      %v2096 = vmax.f32 %v1960, 0.0
      %v2097 = vmax.f32 %v1965, 0.0
      %v2098 = vmax.f32 %v1968, 0.0
      %v2099 = vmax.f32 %v1973, 0.0
      %v2100 = vmax.f32 %v1976, 0.0
      %v2101 = vmax.f32 %v1981, 0.0
      %v2102 = vmax.f32 %v1984, 0.0
      %v2103 = vmax.f32 %v1989, 0.0
      %v2104 = vmax.f32 %v1992, 0.0
      %v2105 = vmax.f32 %v1997, 0.0
      %v2106 = vmax.f32 %v2000, 0.0
      %v2107 = vmax.f32 %v2005, 0.0
      %v2108 = vmax.f32 %v2008, 0.0
      %v2109 = vpack.c.bf16 %v2012, %v2011
      %v2110 = vpack.c.bf16 %v2014, %v2013
      %v2111 = vpack.c.bf16 %v2016, %v2015
      %v2112 = vpack.c.bf16 %v2018, %v2017
      %v2113 = vpack.c.bf16 %v2020, %v2019
      %v2114 = vpack.c.bf16 %v2022, %v2021
      %v2115 = vpack.c.bf16 %v2024, %v2023
      %v2116 = vpack.c.bf16 %v2026, %v2025
      %v2117 = vpack.c.bf16 %v2028, %v2027
      %v2118 = vpack.c.bf16 %v2030, %v2029
      %v2119 = vpack.c.bf16 %v2032, %v2031
      %v2120 = vpack.c.bf16 %v2034, %v2033
      %v2121 = vpack.c.bf16 %v2036, %v2035
      %v2122 = vpack.c.bf16 %v2038, %v2037
      %v2123 = vpack.c.bf16 %v2040, %v2039
      %v2124 = vpack.c.bf16 %v2042, %v2041
      %v2125 = vpack.c.bf16 %v2044, %v2043
      %v2126 = vpack.c.bf16 %v2046, %v2045
      %v2127 = vpack.c.bf16 %v2048, %v2047
      %v2128 = vpack.c.bf16 %v2050, %v2049
      %v2129 = vpack.c.bf16 %v2052, %v2051
      %v2130 = vpack.c.bf16 %v2054, %v2053
      %v2131 = vpack.c.bf16 %v2056, %v2055
      %v2132 = vpack.c.bf16 %v2058, %v2057
      %v2133 = vpack.c.bf16 %v2060, %v2059
      %v2134 = vpack.c.bf16 %v2062, %v2061
      %v2135 = vpack.c.bf16 %v2064, %v2063
      %v2136 = vpack.c.bf16 %v2066, %v2065
      %v2137 = vpack.c.bf16 %v2068, %v2067
      %v2138 = vpack.c.bf16 %v2070, %v2069
      %v2139 = vpack.c.bf16 %v2072, %v2071
      %v2140 = vpack.c.bf16 %v2074, %v2073
      %v2141 = vpack.c.bf16 %v2076, %v2075
      %v2142 = vpack.c.bf16 %v2078, %v2077
      %v2143 = vpack.c.bf16 %v2080, %v2079
      %v2144 = vpack.c.bf16 %v2082, %v2081
      %v2145 = vpack.c.bf16 %v2084, %v2083
      %v2146 = vpack.c.bf16 %v2086, %v2085
      %v2147 = vpack.c.bf16 %v2088, %v2087
      %v2148 = vpack.c.bf16 %v2090, %v2089
      %v2149 = vpack.c.bf16 %v2092, %v2091
      %v2150 = vpack.c.bf16 %v2094, %v2093
      %v2151 = vpack.c.bf16 %v2096, %v2095
      %v2152 = vpack.c.bf16 %v2098, %v2097
      %v2153 = vpack.c.bf16 %v2100, %v2099
      %v2154 = vpack.c.bf16 %v2102, %v2101
      %v2155 = vpack.c.bf16 %v2104, %v2103
      %v2156 = vpack.c.bf16 %v2106, %v2105
      %v2157 = vpack.c.bf16 %v2108, %v2107
      %v2158 = vld [vmem:[%s5] sm:$0xff]
      %v2159 = vld [vmem:[%s5 + $0x8] sm:$0xff]
      %v2160 = vld [vmem:[%s5 + $0x10] sm:$0xff]
      %v2161 = vld [vmem:[%s5 + $0x18] sm:$0xff]
      %v2162 = vld [vmem:[%s5 + $0x20] sm:$0xff]
      %v2163 = vld [vmem:[%s5 + $0x28] sm:$0xff]
      %v2164 = vld [vmem:[%s5 + $0x30] sm:$0xff]
      %v2165 = vld [vmem:[%s5 + $0x38] sm:$0xff]
      %v2166 = vld [vmem:[%s5 + $0x40] sm:$0xff]
      %v2167 = vld [vmem:[%s5 + $0x48] sm:$0xff]
      %v2168 = vld [vmem:[%s5 + $0x50] sm:$0xff]
      %v2169 = vld [vmem:[%s5 + $0x58] sm:$0xff]
      %v2170 = vld [vmem:[%s5 + $0x60] sm:$0xff]
      %v2171 = vld [vmem:[%s5 + $0x68] sm:$0xff]
      %v2172 = vld [vmem:[%s5 + $0x70] sm:$0xff]
      %v2173 = vld [vmem:[%s5 + $0x78] sm:$0xff]
      %v2174 = vld [vmem:[%s5 + $0x80] sm:$0xff]
      %v2175 = vld [vmem:[%s5 + $0x88] sm:$0xff]
      %v2176 = vld [vmem:[%s5 + $0x90] sm:$0xff]
      %v2177 = vld [vmem:[%s5 + $0x98] sm:$0xff]
      %v2178 = vld [vmem:[%s5 + $0xa0] sm:$0xff]
      %v2179 = vld [vmem:[%s5 + $0xa8] sm:$0xff]
      %v2180 = vld [vmem:[%s5 + $0xb0] sm:$0xff]
      %v2181 = vld [vmem:[%s5 + $0xb8] sm:$0xff]
      %v2182 = vld [vmem:[%s5 + $0xc0] sm:$0xff]
      %v2183 = vld [vmem:[%s5 + $0xc8] sm:$0xff]
      %v2184 = vld [vmem:[%s5 + $0xd0] sm:$0xff]
      %v2185 = vld [vmem:[%s5 + $0xd8] sm:$0xff]
      %v2186 = vld [vmem:[%s5 + $0xe0] sm:$0xff]
      %v2187 = vld [vmem:[%s5 + $0xe8] sm:$0xff]
      %v2188 = vld [vmem:[%s5 + $0xf0] sm:$0xff]
      %v2189 = vld [vmem:[%s5 + $0xf8] sm:$0xff]
      %v2190 = vld [vmem:[%s5 + $0x100] sm:$0xff]
      %v2191 = vld [vmem:[%s5 + $0x108] sm:$0xff]
      %v2192 = vld [vmem:[%s5 + $0x110] sm:$0xff]
      %v2193 = vld [vmem:[%s5 + $0x118] sm:$0xff]
      %v2194 = vld [vmem:[%s5 + $0x120] sm:$0xff]
      %v2195 = vld [vmem:[%s5 + $0x128] sm:$0xff]
      %v2196 = vld [vmem:[%s5 + $0x130] sm:$0xff]
      %v2197 = vld [vmem:[%s5 + $0x138] sm:$0xff]
      %v2198 = vld [vmem:[%s5 + $0x140] sm:$0xff]
      %v2199 = vld [vmem:[%s5 + $0x148] sm:$0xff]
      %v2200 = vld [vmem:[%s5 + $0x150] sm:$0xff]
      %v2201 = vld [vmem:[%s5 + $0x158] sm:$0xff]
      %v2202 = vld [vmem:[%s5 + $0x160] sm:$0xff]
      %v2203 = vld [vmem:[%s5 + $0x168] sm:$0xff]
      %v2204 = vld [vmem:[%s5 + $0x170] sm:$0xff]
      %v2205 = vld [vmem:[%s5 + $0x178] sm:$0xff]
      %v2206 = vld [vmem:[%s5 + $0x180] sm:$0xff]
      %v2207 = vld [vmem:[%s5 + $0x188] sm:$0xff]
      %v2208 = vld [vmem:[%s5 + $0x190] sm:$0xff]
      %v2209 = vld [vmem:[%s5 + $0x198] sm:$0xff]
      %v2210 = vld [vmem:[%s5 + $0x1a0] sm:$0xff]
      %v2211 = vld [vmem:[%s5 + $0x1a8] sm:$0xff]
      %v2212 = vld [vmem:[%s5 + $0x1b0] sm:$0xff]
      %v2213 = vld [vmem:[%s5 + $0x1b8] sm:$0xff]
      %v2214 = vld [vmem:[%s5 + $0x1c0] sm:$0xff]
      %v2215 = vld [vmem:[%s5 + $0x1c8] sm:$0xff]
      %v2216 = vld [vmem:[%s5 + $0x1d0] sm:$0xff]
      %v2217 = vld [vmem:[%s5 + $0x1d8] sm:$0xff]
      %v2218 = vld [vmem:[%s5 + $0x1e0] sm:$0xff]
      %v2219 = vld [vmem:[%s5 + $0x1e8] sm:$0xff]
      %v2220 = vld [vmem:[%s5 + $0x1f0] sm:$0xff]
      %v2221 = vld [vmem:[%s5 + $0x1f8] sm:$0xff]
      %v2222 = vld [vmem:[%s6] sm:$0xff]
      %v2224 = vlaneseq
      %v2225 = vshrl.u32 %v2224, 7
      %v2226 = vsub.s32 0, %v2225
      %v2227 = vrot.slane %v2222, %v2226
      %v2228 = vlaneseq
      %v2229 = vshrl.u32 %v2228, 7
      %v2230 = vsub.s32 1, %v2229
      %v2231 = vrot.slane %v2222, %v2230
      %v2232 = vlaneseq
      %v2233 = vshrl.u32 %v2232, 7
      %v2234 = vsub.s32 2, %v2233
      %v2235 = vrot.slane %v2222, %v2234
      %v2236 = vlaneseq
      %v2237 = vshrl.u32 %v2236, 7
      %v2238 = vsub.s32 3, %v2237
      %v2239 = vrot.slane %v2222, %v2238
      %v2240 = vlaneseq
      %v2241 = vshrl.u32 %v2240, 7
      %v2242 = vsub.s32 4, %v2241
      %v2243 = vrot.slane %v2222, %v2242
      %v2244 = vlaneseq
      %v2245 = vshrl.u32 %v2244, 7
      %v2246 = vsub.s32 5, %v2245
      %v2247 = vrot.slane %v2222, %v2246
      %v2248 = vlaneseq
      %v2249 = vshrl.u32 %v2248, 7
      %v2250 = vsub.s32 6, %v2249
      %v2251 = vrot.slane %v2222, %v2250
      %v2252 = vlaneseq
      %v2253 = vshrl.u32 %v2252, 7
      %v2254 = vsub.s32 7, %v2253
      %v2255 = vrot.slane %v2222, %v2254
      %v2328 = vunpack.c.l.b16 %v2158
      %v2329 = vunpack.c.h.b16 %v2158
      %v2330 = vunpack.c.l.b16 %v2159
      %v2331 = vunpack.c.h.b16 %v2159
      %v2332 = vunpack.c.l.b16 %v2160
      %v2333 = vunpack.c.h.b16 %v2160
      %v2334 = vunpack.c.l.b16 %v2161
      %v2335 = vunpack.c.h.b16 %v2161
      %v2336 = vunpack.c.l.b16 %v2162
      %v2337 = vunpack.c.h.b16 %v2162
      %v2338 = vunpack.c.l.b16 %v2163
      %v2339 = vunpack.c.h.b16 %v2163
      %v2340 = vunpack.c.l.b16 %v2164
      %v2341 = vunpack.c.h.b16 %v2164
      %v2342 = vunpack.c.l.b16 %v2165
      %v2343 = vunpack.c.h.b16 %v2165
      %v2344 = vunpack.c.l.b16 %v2166
      %v2345 = vunpack.c.h.b16 %v2166
      %v2346 = vunpack.c.l.b16 %v2167
      %v2347 = vunpack.c.h.b16 %v2167
      %v2348 = vunpack.c.l.b16 %v2168
      %v2349 = vunpack.c.h.b16 %v2168
      %v2350 = vunpack.c.l.b16 %v2169
      %v2351 = vunpack.c.h.b16 %v2169
      %v2352 = vunpack.c.l.b16 %v2170
      %v2353 = vunpack.c.h.b16 %v2170
      %v2354 = vunpack.c.l.b16 %v2171
      %v2355 = vunpack.c.h.b16 %v2171
      %v2356 = vunpack.c.l.b16 %v2172
      %v2357 = vunpack.c.h.b16 %v2172
      %v2358 = vunpack.c.l.b16 %v2173
      %v2359 = vunpack.c.h.b16 %v2173
      %v2360 = vunpack.c.l.b16 %v2174
      %v2361 = vunpack.c.h.b16 %v2174
      %v2362 = vunpack.c.l.b16 %v2175
      %v2363 = vunpack.c.h.b16 %v2175
      %v2364 = vunpack.c.l.b16 %v2176
      %v2365 = vunpack.c.h.b16 %v2176
      %v2366 = vunpack.c.l.b16 %v2177
      %v2367 = vunpack.c.h.b16 %v2177
      %v2368 = vunpack.c.l.b16 %v2178
      %v2369 = vunpack.c.h.b16 %v2178
      %v2370 = vunpack.c.l.b16 %v2179
      %v2371 = vunpack.c.h.b16 %v2179
      %v2372 = vunpack.c.l.b16 %v2180
      %v2373 = vunpack.c.h.b16 %v2180
      %v2374 = vunpack.c.l.b16 %v2181
      %v2375 = vunpack.c.h.b16 %v2181
      %v2376 = vunpack.c.l.b16 %v2182
      %v2377 = vunpack.c.h.b16 %v2182
      %v2378 = vunpack.c.l.b16 %v2183
      %v2379 = vunpack.c.h.b16 %v2183
      %v2380 = vunpack.c.l.b16 %v2184
      %v2381 = vunpack.c.h.b16 %v2184
      %v2382 = vunpack.c.l.b16 %v2185
      %v2383 = vunpack.c.h.b16 %v2185
      %v2384 = vunpack.c.l.b16 %v2186
      %v2385 = vunpack.c.h.b16 %v2186
      %v2386 = vunpack.c.l.b16 %v2187
      %v2387 = vunpack.c.h.b16 %v2187
      %v2388 = vunpack.c.l.b16 %v2188
      %v2389 = vunpack.c.h.b16 %v2188
      %v2390 = vunpack.c.l.b16 %v2189
      %v2391 = vunpack.c.h.b16 %v2189
      %v2392 = vunpack.c.l.b16 %v2190
      %v2393 = vunpack.c.h.b16 %v2190
      %v2394 = vunpack.c.l.b16 %v2191
      %v2395 = vunpack.c.h.b16 %v2191
      %v2396 = vunpack.c.l.b16 %v2192
      %v2397 = vunpack.c.h.b16 %v2192
      %v2398 = vunpack.c.l.b16 %v2193
      %v2399 = vunpack.c.h.b16 %v2193
      %v2400 = vunpack.c.l.b16 %v2194
      %v2401 = vunpack.c.h.b16 %v2194
      %v2402 = vunpack.c.l.b16 %v2195
      %v2403 = vunpack.c.h.b16 %v2195
      %v2404 = vunpack.c.l.b16 %v2196
      %v2405 = vunpack.c.h.b16 %v2196
      %v2406 = vunpack.c.l.b16 %v2197
      %v2407 = vunpack.c.h.b16 %v2197
      %v2408 = vunpack.c.l.b16 %v2198
      %v2409 = vunpack.c.h.b16 %v2198
      %v2410 = vunpack.c.l.b16 %v2199
      %v2411 = vunpack.c.h.b16 %v2199
      %v2412 = vunpack.c.l.b16 %v2200
      %v2413 = vunpack.c.h.b16 %v2200
      %v2414 = vunpack.c.l.b16 %v2201
      %v2415 = vunpack.c.h.b16 %v2201
      %v2416 = vunpack.c.l.b16 %v2202
      %v2417 = vunpack.c.h.b16 %v2202
      %v2418 = vunpack.c.l.b16 %v2203
      %v2419 = vunpack.c.h.b16 %v2203
      %v2420 = vunpack.c.l.b16 %v2204
      %v2421 = vunpack.c.h.b16 %v2204
      %v2422 = vunpack.c.l.b16 %v2205
      %v2423 = vunpack.c.h.b16 %v2205
      %v2424 = vunpack.c.l.b16 %v2206
      %v2425 = vunpack.c.h.b16 %v2206
      %v2426 = vunpack.c.l.b16 %v2207
      %v2427 = vunpack.c.h.b16 %v2207
      %v2428 = vunpack.c.l.b16 %v2208
      %v2429 = vunpack.c.h.b16 %v2208
      %v2430 = vunpack.c.l.b16 %v2209
      %v2431 = vunpack.c.h.b16 %v2209
      %v2432 = vunpack.c.l.b16 %v2210
      %v2433 = vunpack.c.h.b16 %v2210
      %v2434 = vunpack.c.l.b16 %v2211
      %v2435 = vunpack.c.h.b16 %v2211
      %v2436 = vunpack.c.l.b16 %v2212
      %v2437 = vunpack.c.h.b16 %v2212
      %v2438 = vunpack.c.l.b16 %v2213
      %v2439 = vunpack.c.h.b16 %v2213
      %v2440 = vunpack.c.l.b16 %v2214
      %v2441 = vunpack.c.h.b16 %v2214
      %v2442 = vunpack.c.l.b16 %v2215
      %v2443 = vunpack.c.h.b16 %v2215
      %v2444 = vunpack.c.l.b16 %v2216
      %v2445 = vunpack.c.h.b16 %v2216
      %v2446 = vunpack.c.l.b16 %v2217
      %v2447 = vunpack.c.h.b16 %v2217
      %v2448 = vunpack.c.l.b16 %v2218
      %v2449 = vunpack.c.h.b16 %v2218
      %v2450 = vunpack.c.l.b16 %v2219
      %v2451 = vunpack.c.h.b16 %v2219
      %v2452 = vunpack.c.l.b16 %v2220
      %v2453 = vunpack.c.h.b16 %v2220
      %v2454 = vunpack.c.l.b16 %v2221
      %v2455 = vunpack.c.h.b16 %v2221
      %v2456 = vpack.c.b16 %v2336, %v2328
      %v2457 = vpack.c.b16 %v2337, %v2329
      %v2458 = vpack.c.b16 %v2338, %v2330
      %v2459 = vpack.c.b16 %v2339, %v2331
      %v2460 = vpack.c.b16 %v2340, %v2332
      %v2461 = vpack.c.b16 %v2341, %v2333
      %v2462 = vpack.c.b16 %v2342, %v2334
      %v2463 = vpack.c.b16 %v2343, %v2335
      %v2464 = vpack.c.b16 %v2352, %v2344
      %v2465 = vpack.c.b16 %v2353, %v2345
      %v2466 = vpack.c.b16 %v2354, %v2346
      %v2467 = vpack.c.b16 %v2355, %v2347
      %v2468 = vpack.c.b16 %v2356, %v2348
      %v2469 = vpack.c.b16 %v2357, %v2349
      %v2470 = vpack.c.b16 %v2358, %v2350
      %v2471 = vpack.c.b16 %v2359, %v2351
      %v2472 = vpack.c.b16 %v2368, %v2360
      %v2473 = vpack.c.b16 %v2369, %v2361
      %v2474 = vpack.c.b16 %v2370, %v2362
      %v2475 = vpack.c.b16 %v2371, %v2363
      %v2476 = vpack.c.b16 %v2372, %v2364
      %v2477 = vpack.c.b16 %v2373, %v2365
      %v2478 = vpack.c.b16 %v2374, %v2366
      %v2479 = vpack.c.b16 %v2375, %v2367
      %v2480 = vpack.c.b16 %v2384, %v2376
      %v2481 = vpack.c.b16 %v2385, %v2377
      %v2482 = vpack.c.b16 %v2386, %v2378
      %v2483 = vpack.c.b16 %v2387, %v2379
      %v2484 = vpack.c.b16 %v2388, %v2380
      %v2485 = vpack.c.b16 %v2389, %v2381
      %v2486 = vpack.c.b16 %v2390, %v2382
      %v2487 = vpack.c.b16 %v2391, %v2383
      %v2488 = vpack.c.b16 %v2400, %v2392
      %v2489 = vpack.c.b16 %v2401, %v2393
      %v2490 = vpack.c.b16 %v2402, %v2394
      %v2491 = vpack.c.b16 %v2403, %v2395
      %v2492 = vpack.c.b16 %v2404, %v2396
      %v2493 = vpack.c.b16 %v2405, %v2397
      %v2494 = vpack.c.b16 %v2406, %v2398
      %v2495 = vpack.c.b16 %v2407, %v2399
      %v2496 = vpack.c.b16 %v2416, %v2408
      %v2497 = vpack.c.b16 %v2417, %v2409
      %v2498 = vpack.c.b16 %v2418, %v2410
      %v2499 = vpack.c.b16 %v2419, %v2411
      %v2500 = vpack.c.b16 %v2420, %v2412
      %v2501 = vpack.c.b16 %v2421, %v2413
      %v2502 = vpack.c.b16 %v2422, %v2414
      %v2503 = vpack.c.b16 %v2423, %v2415
      %v2504 = vpack.c.b16 %v2432, %v2424
      %v2505 = vpack.c.b16 %v2433, %v2425
      %v2506 = vpack.c.b16 %v2434, %v2426
      %v2507 = vpack.c.b16 %v2435, %v2427
      %v2508 = vpack.c.b16 %v2436, %v2428
      %v2509 = vpack.c.b16 %v2437, %v2429
      %v2510 = vpack.c.b16 %v2438, %v2430
      %v2511 = vpack.c.b16 %v2439, %v2431
      %v2512 = vpack.c.b16 %v2448, %v2440
      %v2513 = vpack.c.b16 %v2449, %v2441
      %v2514 = vpack.c.b16 %v2450, %v2442
      %v2515 = vpack.c.b16 %v2451, %v2443
      %v2516 = vpack.c.b16 %v2452, %v2444
      %v2517 = vpack.c.b16 %v2453, %v2445
      %v2518 = vpack.c.b16 %v2454, %v2446
      %v2519 = vpack.c.b16 %v2455, %v2447
      %2584 = vmatprep.subr.bf16.mxu0 %v2457
      %2585 = vmatpush1.bf16.msra.mxu0 %v2456
      %2586 = vmatprep.subr.bf16.mxu0 %v2465
      %2587 = vmatpush1.bf16.msra.mxu0 %v2464
      %2588 = vmatprep.subr.bf16.mxu0 %v2473
      %2589 = vmatpush1.bf16.msra.mxu0 %v2472
      %2590 = vmatprep.subr.bf16.mxu0 %v2481
      %2591 = vmatpush1.bf16.msra.mxu0 %v2480
      %2592 = vmatprep.subr.bf16.mxu0 %v2489
      %2593 = vmatpush1.bf16.msra.mxu0 %v2488
      %2594 = vmatprep.subr.bf16.mxu0 %v2497
      %2595 = vmatpush1.bf16.msra.mxu0 %v2496
      %2596 = vmatprep.subr.bf16.mxu0 %v2505
      %2597 = vmatpush1.bf16.msra.mxu0 %v2504
      %2598 = vmatprep.subr.bf16.mxu0 %v2513
      %2599 = vmatpush1.bf16.msra.mxu0 %v2512
      %2600 = vmatprep.subr.bf16.mxu0 0
      %2601 = vmatpush1.bf16.msra.mxu0 0
      %2602 = vmatprep.subr.bf16.mxu0 0
      %2603 = vmatpush1.bf16.msra.mxu0 0
      %2604 = vmatprep.subr.bf16.mxu0 0
      %2605 = vmatpush1.bf16.msra.mxu0 0
      %2606 = vmatprep.subr.bf16.mxu0 0
      %2607 = vmatpush1.bf16.msra.mxu0 0
      %2608 = vmatprep.subr.bf16.mxu0 0
      %2609 = vmatpush1.bf16.msra.mxu0 0
      %2610 = vmatprep.subr.bf16.mxu0 0
      %2611 = vmatpush1.bf16.msra.mxu0 0
      %2612 = vmatprep.subr.bf16.mxu0 0
      %2613 = vmatpush1.bf16.msra.mxu0 0
      %2614 = vmatprep.subr.bf16.mxu0 0
      %2615 = vmatpush1.bf16.msra.mxu0 0
      %2616 = vmatprep.mubr.bf16.mxu0 0
      %2617 = vmatmul.mubr.bf16.gmra.mrb[0].mxu0 %v2109
      %v2618 = vpop.f32.mrb[0].mxu0
      %v2619 = vadd.f32 %v2227, %v2618
      %v2620 = vpop.f32.mrb[0].mxu0
      %v2621 = vadd.f32 %v2231, %v2620
      %v2622 = vpop.f32.mrb[0].mxu0
      %v2623 = vadd.f32 %v2227, %v2622
      %v2624 = vpop.f32.mrb[0].mxu0
      %v2625 = vadd.f32 %v2231, %v2624
      %2626 = vmatprep.mubr.bf16.mxu0 0
      %2627 = vmatmul.mubr.bf16.gmra.mrb[0].mxu0 %v2110
      %v2628 = vpop.f32.mrb[0].mxu0
      %v2629 = vadd.f32 %v2227, %v2628
      %v2630 = vpop.f32.mrb[0].mxu0
      %v2631 = vadd.f32 %v2231, %v2630
      %v2632 = vpop.f32.mrb[0].mxu0
      %v2633 = vadd.f32 %v2227, %v2632
      %v2634 = vpop.f32.mrb[0].mxu0
      %v2635 = vadd.f32 %v2231, %v2634
      %2636 = vmatprep.mubr.bf16.mxu0 0
      %2637 = vmatmul.mubr.bf16.gmra.mrb[0].mxu0 %v2111
      %v2638 = vpop.f32.mrb[0].mxu0
      %v2639 = vadd.f32 %v2227, %v2638
      %v2640 = vpop.f32.mrb[0].mxu0
      %v2641 = vadd.f32 %v2231, %v2640
      %v2642 = vpop.f32.mrb[0].mxu0
      %v2643 = vadd.f32 %v2227, %v2642
      %v2644 = vpop.f32.mrb[0].mxu0
      %v2645 = vadd.f32 %v2231, %v2644
      %2646 = vmatprep.mubr.bf16.mxu0 0
      %2647 = vmatmul.mubr.bf16.gmra.mrb[0].mxu0 %v2112
      %v2648 = vpop.f32.mrb[0].mxu0
      %v2649 = vadd.f32 %v2227, %v2648
      %v2650 = vpop.f32.mrb[0].mxu0
      %v2651 = vadd.f32 %v2231, %v2650
      %v2652 = vpop.f32.mrb[0].mxu0
      %v2653 = vadd.f32 %v2227, %v2652
      %v2654 = vpop.f32.mrb[0].mxu0
      %v2655 = vadd.f32 %v2231, %v2654
      %2656 = vmatprep.mubr.bf16.mxu0 0
      %2657 = vmatmul.mubr.bf16.gmra.mrb[0].mxu0 %v2113
      %v2658 = vpop.f32.mrb[0].mxu0
      %v2659 = vadd.f32 %v2227, %v2658
      %v2660 = vpop.f32.mrb[0].mxu0
      %v2661 = vadd.f32 %v2231, %v2660
      %v2662 = vpop.f32.mrb[0].mxu0
      %v2663 = vadd.f32 %v2227, %v2662
      %v2664 = vpop.f32.mrb[0].mxu0
      %v2665 = vadd.f32 %v2231, %v2664
      %2666 = vmatprep.mubr.bf16.mxu0 0
      %2667 = vmatmul.mubr.bf16.gmra.mrb[0].mxu0 %v2114
      %v2668 = vpop.f32.mrb[0].mxu0
      %v2669 = vadd.f32 %v2227, %v2668
      %v2670 = vpop.f32.mrb[0].mxu0
      %v2671 = vadd.f32 %v2231, %v2670
      %v2672 = vpop.f32.mrb[0].mxu0
      %v2673 = vadd.f32 %v2227, %v2672
      %v2674 = vpop.f32.mrb[0].mxu0
      %v2675 = vadd.f32 %v2231, %v2674
      %2676 = vmatprep.mubr.bf16.mxu0 0
      %2677 = vmatmul.mubr.bf16.gmra.mrb[0].mxu0 %v2115
      %v2678 = vpop.f32.mrb[0].mxu0
      %v2679 = vadd.f32 %v2227, %v2678
      %v2680 = vpop.f32.mrb[0].mxu0
      %v2681 = vadd.f32 %v2231, %v2680
      %v2682 = vpop.f32.mrb[0].mxu0
      %v2683 = vadd.f32 %v2227, %v2682
      %v2684 = vpop.f32.mrb[0].mxu0
      %v2685 = vadd.f32 %v2231, %v2684
      %2686 = vmatprep.mubr.bf16.mxu0 0
      %2687 = vmatmul.mubr.bf16.gmra.mrb[0].mxu0 %v2116
      %v2688 = vpop.f32.mrb[0].mxu0
      %v2689 = vadd.f32 %v2227, %v2688
      %v2690 = vpop.f32.mrb[0].mxu0
      %v2691 = vadd.f32 %v2231, %v2690
      %v2692 = vpop.f32.mrb[0].mxu0
      %v2693 = vadd.f32 %v2227, %v2692
      %v2694 = vpop.f32.mrb[0].mxu0
      %v2695 = vadd.f32 %v2231, %v2694
      %2696 = vmatprep.mubr.bf16.mxu0 0
      %2697 = vmatmul.mubr.bf16.gmra.mrb[0].mxu0 %v2117
      %v2698 = vpop.f32.mrb[0].mxu0
      %v2699 = vadd.f32 %v2227, %v2698
      %v2700 = vpop.f32.mrb[0].mxu0
      %v2701 = vadd.f32 %v2231, %v2700
      %v2702 = vpop.f32.mrb[0].mxu0
      %v2703 = vadd.f32 %v2227, %v2702
      %v2704 = vpop.f32.mrb[0].mxu0
      %v2705 = vadd.f32 %v2231, %v2704
      %2706 = vmatprep.mubr.bf16.mxu0 0
      %2707 = vmatmul.mubr.bf16.gmra.mrb[0].mxu0 %v2118
      %v2708 = vpop.f32.mrb[0].mxu0
      %v2709 = vadd.f32 %v2227, %v2708
      %v2710 = vpop.f32.mrb[0].mxu0
      %v2711 = vadd.f32 %v2231, %v2710
      %v2712 = vpop.f32.mrb[0].mxu0
      %v2713 = vadd.f32 %v2227, %v2712
      %v2714 = vpop.f32.mrb[0].mxu0
      %v2715 = vadd.f32 %v2231, %v2714
      %2716 = vmatprep.mubr.bf16.mxu0 0
      %2717 = vmatmul.mubr.bf16.gmra.mrb[0].mxu0 %v2119
      %v2718 = vpop.f32.mrb[0].mxu0
      %v2719 = vadd.f32 %v2227, %v2718
      %v2720 = vpop.f32.mrb[0].mxu0
      %v2721 = vadd.f32 %v2231, %v2720
      %v2722 = vpop.f32.mrb[0].mxu0
      %v2723 = vadd.f32 %v2227, %v2722
      %v2724 = vpop.f32.mrb[0].mxu0
      %v2725 = vadd.f32 %v2231, %v2724
      %2726 = vmatprep.mubr.bf16.mxu0 0
      %2727 = vmatmul.mubr.bf16.gmra.mrb[0].mxu0 %v2120
      %v2728 = vpop.f32.mrb[0].mxu0
      %v2729 = vadd.f32 %v2227, %v2728
      %v2730 = vpop.f32.mrb[0].mxu0
      %v2731 = vadd.f32 %v2231, %v2730
      %v2732 = vpop.f32.mrb[0].mxu0
      %v2733 = vadd.f32 %v2227, %v2732
      %v2734 = vpop.f32.mrb[0].mxu0
      %v2735 = vadd.f32 %v2231, %v2734
      %2736 = vmatprep.mubr.bf16.mxu0 0
      %2737 = vmatmul.mubr.bf16.gmra.mrb[0].mxu0 %v2121
      %v2738 = vpop.f32.mrb[0].mxu0
      %v2739 = vadd.f32 %v2227, %v2738
      %v2740 = vpop.f32.mrb[0].mxu0
      %v2741 = vadd.f32 %v2231, %v2740
      %v2742 = vpop.f32.mrb[0].mxu0
      %v2743 = vadd.f32 %v2227, %v2742
      %v2744 = vpop.f32.mrb[0].mxu0
      %v2745 = vadd.f32 %v2231, %v2744
      %2746 = vmatprep.mubr.bf16.mxu0 0
      %2747 = vmatmul.mubr.bf16.gmra.mrb[0].mxu0 %v2122
      %v2748 = vpop.f32.mrb[0].mxu0
      %v2749 = vadd.f32 %v2227, %v2748
      %v2750 = vpop.f32.mrb[0].mxu0
      %v2751 = vadd.f32 %v2231, %v2750
      %v2752 = vpop.f32.mrb[0].mxu0
      %v2753 = vadd.f32 %v2227, %v2752
      %v2754 = vpop.f32.mrb[0].mxu0
      %v2755 = vadd.f32 %v2231, %v2754
      %2756 = vmatprep.mubr.bf16.mxu0 0
      %2757 = vmatmul.mubr.bf16.gmra.mrb[0].mxu0 %v2123
      %v2758 = vpop.f32.mrb[0].mxu0
      %v2759 = vadd.f32 %v2227, %v2758
      %v2760 = vpop.f32.mrb[0].mxu0
      %v2761 = vadd.f32 %v2231, %v2760
      %v2762 = vpop.f32.mrb[0].mxu0
      %v2763 = vadd.f32 %v2227, %v2762
      %v2764 = vpop.f32.mrb[0].mxu0
      %v2765 = vadd.f32 %v2231, %v2764
      %2766 = vmatprep.mubr.bf16.mxu0 0
      %2767 = vmatmul.mubr.bf16.gmra.mrb[0].mxu0 %v2124
      %v2768 = vpop.f32.mrb[0].mxu0
      %v2769 = vadd.f32 %v2227, %v2768
      %v2770 = vpop.f32.mrb[0].mxu0
      %v2771 = vadd.f32 %v2231, %v2770
      %v2772 = vpop.f32.mrb[0].mxu0
      %v2773 = vadd.f32 %v2227, %v2772
      %v2774 = vpop.f32.mrb[0].mxu0
      %v2775 = vadd.f32 %v2231, %v2774
      %2776 = vmatprep.mubr.bf16.mxu0 0
      %2777 = vmatmul.mubr.bf16.gmra.mrb[0].mxu0 %v2125
      %v2778 = vpop.f32.mrb[0].mxu0
      %v2779 = vadd.f32 %v2227, %v2778
      %v2780 = vpop.f32.mrb[0].mxu0
      %v2781 = vadd.f32 %v2231, %v2780
      %v2782 = vpop.f32.mrb[0].mxu0
      %v2783 = vadd.f32 %v2227, %v2782
      %v2784 = vpop.f32.mrb[0].mxu0
      %v2785 = vadd.f32 %v2231, %v2784
      %2786 = vmatprep.mubr.bf16.mxu0 0
      %2787 = vmatmul.mubr.bf16.gmra.mrb[0].mxu0 %v2126
      %v2788 = vpop.f32.mrb[0].mxu0
      %v2789 = vadd.f32 %v2227, %v2788
      %v2790 = vpop.f32.mrb[0].mxu0
      %v2791 = vadd.f32 %v2231, %v2790
      %v2792 = vpop.f32.mrb[0].mxu0
      %v2793 = vadd.f32 %v2227, %v2792
      %v2794 = vpop.f32.mrb[0].mxu0
      %v2795 = vadd.f32 %v2231, %v2794
      %2796 = vmatprep.mubr.bf16.mxu0 0
      %2797 = vmatmul.mubr.bf16.gmra.mrb[0].mxu0 %v2127
      %v2798 = vpop.f32.mrb[0].mxu0
      %v2799 = vadd.f32 %v2227, %v2798
      %v2800 = vpop.f32.mrb[0].mxu0
      %v2801 = vadd.f32 %v2231, %v2800
      %v2802 = vpop.f32.mrb[0].mxu0
      %v2803 = vadd.f32 %v2227, %v2802
      %v2804 = vpop.f32.mrb[0].mxu0
      %v2805 = vadd.f32 %v2231, %v2804
      %2806 = vmatprep.mubr.bf16.mxu0 0
      %2807 = vmatmul.mubr.bf16.gmra.mrb[0].mxu0 %v2128
      %v2808 = vpop.f32.mrb[0].mxu0
      %v2809 = vadd.f32 %v2227, %v2808
      %v2810 = vpop.f32.mrb[0].mxu0
      %v2811 = vadd.f32 %v2231, %v2810
      %v2812 = vpop.f32.mrb[0].mxu0
      %v2813 = vadd.f32 %v2227, %v2812
      %v2814 = vpop.f32.mrb[0].mxu0
      %v2815 = vadd.f32 %v2231, %v2814
      %2816 = vmatprep.mubr.bf16.mxu0 0
      %2817 = vmatmul.mubr.bf16.gmra.mrb[0].mxu0 %v2129
      %v2818 = vpop.f32.mrb[0].mxu0
      %v2819 = vadd.f32 %v2227, %v2818
      %v2820 = vpop.f32.mrb[0].mxu0
      %v2821 = vadd.f32 %v2231, %v2820
      %v2822 = vpop.f32.mrb[0].mxu0
      %v2823 = vadd.f32 %v2227, %v2822
      %v2824 = vpop.f32.mrb[0].mxu0
      %v2825 = vadd.f32 %v2231, %v2824
      %2826 = vmatprep.mubr.bf16.mxu0 0
      %2827 = vmatmul.mubr.bf16.gmra.mrb[0].mxu0 %v2130
      %v2828 = vpop.f32.mrb[0].mxu0
      %v2829 = vadd.f32 %v2227, %v2828
      %v2830 = vpop.f32.mrb[0].mxu0
      %v2831 = vadd.f32 %v2231, %v2830
      %v2832 = vpop.f32.mrb[0].mxu0
      %v2833 = vadd.f32 %v2227, %v2832
      %v2834 = vpop.f32.mrb[0].mxu0
      %v2835 = vadd.f32 %v2231, %v2834
      %2836 = vmatprep.mubr.bf16.mxu0 0
      %2837 = vmatmul.mubr.bf16.gmra.mrb[0].mxu0 %v2131
      %v2838 = vpop.f32.mrb[0].mxu0
      %v2839 = vadd.f32 %v2227, %v2838
      %v2840 = vpop.f32.mrb[0].mxu0
      %v2841 = vadd.f32 %v2231, %v2840
      %v2842 = vpop.f32.mrb[0].mxu0
      %v2843 = vadd.f32 %v2227, %v2842
      %v2844 = vpop.f32.mrb[0].mxu0
      %v2845 = vadd.f32 %v2231, %v2844
      %2846 = vmatprep.mubr.bf16.mxu0 0
      %2847 = vmatmul.mubr.bf16.gmra.mrb[0].mxu0 %v2132
      %v2848 = vpop.f32.mrb[0].mxu0
      %v2849 = vadd.f32 %v2227, %v2848
      %v2850 = vpop.f32.mrb[0].mxu0
      %v2851 = vadd.f32 %v2231, %v2850
      %v2852 = vpop.f32.mrb[0].mxu0
      %v2853 = vadd.f32 %v2227, %v2852
      %v2854 = vpop.f32.mrb[0].mxu0
      %v2855 = vadd.f32 %v2231, %v2854
      %2856 = vmatprep.mubr.bf16.mxu0 0
      %2857 = vmatmul.mubr.bf16.gmra.mrb[0].mxu0 %v2133
      %v2858 = vpop.f32.mrb[0].mxu0
      %v2859 = vadd.f32 %v2227, %v2858
      %v2860 = vpop.f32.mrb[0].mxu0
      %v2861 = vadd.f32 %v2231, %v2860
      %v2862 = vpop.f32.mrb[0].mxu0
      %v2863 = vadd.f32 %v2227, %v2862
      %v2864 = vpop.f32.mrb[0].mxu0
      %v2865 = vadd.f32 %v2231, %v2864
      %2866 = vmatprep.mubr.bf16.mxu0 0
      %2867 = vmatmul.mubr.bf16.gmra.mrb[0].mxu0 %v2134
      %v2868 = vpop.f32.mrb[0].mxu0
      %v2869 = vadd.f32 %v2227, %v2868
      %v2870 = vpop.f32.mrb[0].mxu0
      %v2871 = vadd.f32 %v2231, %v2870
      %v2872 = vpop.f32.mrb[0].mxu0
      %v2873 = vadd.f32 %v2227, %v2872
      %v2874 = vpop.f32.mrb[0].mxu0
      %v2875 = vadd.f32 %v2231, %v2874
      %2876 = vmatprep.mubr.bf16.mxu0 0
      %2877 = vmatmul.mubr.bf16.gmra.mrb[0].mxu0 %v2135
      %v2878 = vpop.f32.mrb[0].mxu0
      %v2879 = vadd.f32 %v2227, %v2878
      %v2880 = vpop.f32.mrb[0].mxu0
      %v2881 = vadd.f32 %v2231, %v2880
      %v2882 = vpop.f32.mrb[0].mxu0
      %v2883 = vadd.f32 %v2227, %v2882
      %v2884 = vpop.f32.mrb[0].mxu0
      %v2885 = vadd.f32 %v2231, %v2884
      %2886 = vmatprep.mubr.bf16.mxu0 0
      %2887 = vmatmul.mubr.bf16.gmra.mrb[0].mxu0 %v2136
      %v2888 = vpop.f32.mrb[0].mxu0
      %v2889 = vadd.f32 %v2227, %v2888
      %v2890 = vpop.f32.mrb[0].mxu0
      %v2891 = vadd.f32 %v2231, %v2890
      %v2892 = vpop.f32.mrb[0].mxu0
      %v2893 = vadd.f32 %v2227, %v2892
      %v2894 = vpop.f32.mrb[0].mxu0
      %v2895 = vadd.f32 %v2231, %v2894
      %2896 = vmatprep.mubr.bf16.mxu0 0
      %2897 = vmatmul.mubr.bf16.gmra.mrb[0].mxu0 %v2137
      %v2898 = vpop.f32.mrb[0].mxu0
      %v2899 = vadd.f32 %v2227, %v2898
      %v2900 = vpop.f32.mrb[0].mxu0
      %v2901 = vadd.f32 %v2231, %v2900
      %v2902 = vpop.f32.mrb[0].mxu0
      %v2903 = vadd.f32 %v2227, %v2902
      %v2904 = vpop.f32.mrb[0].mxu0
      %v2905 = vadd.f32 %v2231, %v2904
      %2906 = vmatprep.mubr.bf16.mxu0 0
      %2907 = vmatmul.mubr.bf16.gmra.mrb[0].mxu0 %v2138
      %v2908 = vpop.f32.mrb[0].mxu0
      %v2909 = vadd.f32 %v2227, %v2908
      %v2910 = vpop.f32.mrb[0].mxu0
      %v2911 = vadd.f32 %v2231, %v2910
      %v2912 = vpop.f32.mrb[0].mxu0
      %v2913 = vadd.f32 %v2227, %v2912
      %v2914 = vpop.f32.mrb[0].mxu0
      %v2915 = vadd.f32 %v2231, %v2914
      %2916 = vmatprep.mubr.bf16.mxu0 0
      %2917 = vmatmul.mubr.bf16.gmra.mrb[0].mxu0 %v2139
      %v2918 = vpop.f32.mrb[0].mxu0
      %v2919 = vadd.f32 %v2227, %v2918
      %v2920 = vpop.f32.mrb[0].mxu0
      %v2921 = vadd.f32 %v2231, %v2920
      %v2922 = vpop.f32.mrb[0].mxu0
      %v2923 = vadd.f32 %v2227, %v2922
      %v2924 = vpop.f32.mrb[0].mxu0
      %v2925 = vadd.f32 %v2231, %v2924
      %2926 = vmatprep.mubr.bf16.mxu0 0
      %2927 = vmatmul.mubr.bf16.gmra.mrb[0].mxu0 %v2140
      %v2928 = vpop.f32.mrb[0].mxu0
      %v2929 = vadd.f32 %v2227, %v2928
      %v2930 = vpop.f32.mrb[0].mxu0
      %v2931 = vadd.f32 %v2231, %v2930
      %v2932 = vpop.f32.mrb[0].mxu0
      %v2933 = vadd.f32 %v2227, %v2932
      %v2934 = vpop.f32.mrb[0].mxu0
      %v2935 = vadd.f32 %v2231, %v2934
      %2936 = vmatprep.mubr.bf16.mxu0 0
      %2937 = vmatmul.mubr.bf16.gmra.mrb[0].mxu0 %v2141
      %v2938 = vpop.f32.mrb[0].mxu0
      %v2939 = vadd.f32 %v2227, %v2938
      %v2940 = vpop.f32.mrb[0].mxu0
      %v2941 = vadd.f32 %v2231, %v2940
      %v2942 = vpop.f32.mrb[0].mxu0
      %v2943 = vadd.f32 %v2227, %v2942
      %v2944 = vpop.f32.mrb[0].mxu0
      %v2945 = vadd.f32 %v2231, %v2944
      %2946 = vmatprep.mubr.bf16.mxu0 0
      %2947 = vmatmul.mubr.bf16.gmra.mrb[0].mxu0 %v2142
      %v2948 = vpop.f32.mrb[0].mxu0
      %v2949 = vadd.f32 %v2227, %v2948
      %v2950 = vpop.f32.mrb[0].mxu0
      %v2951 = vadd.f32 %v2231, %v2950
      %v2952 = vpop.f32.mrb[0].mxu0
      %v2953 = vadd.f32 %v2227, %v2952
      %v2954 = vpop.f32.mrb[0].mxu0
      %v2955 = vadd.f32 %v2231, %v2954
      %2956 = vmatprep.mubr.bf16.mxu0 0
      %2957 = vmatmul.mubr.bf16.gmra.mrb[0].mxu0 %v2143
      %v2958 = vpop.f32.mrb[0].mxu0
      %v2959 = vadd.f32 %v2227, %v2958
      %v2960 = vpop.f32.mrb[0].mxu0
      %v2961 = vadd.f32 %v2231, %v2960
      %v2962 = vpop.f32.mrb[0].mxu0
      %v2963 = vadd.f32 %v2227, %v2962
      %v2964 = vpop.f32.mrb[0].mxu0
      %v2965 = vadd.f32 %v2231, %v2964
      %2966 = vmatprep.mubr.bf16.mxu0 0
      %2967 = vmatmul.mubr.bf16.gmra.mrb[0].mxu0 %v2144
      %v2968 = vpop.f32.mrb[0].mxu0
      %v2969 = vadd.f32 %v2227, %v2968
      %v2970 = vpop.f32.mrb[0].mxu0
      %v2971 = vadd.f32 %v2231, %v2970
      %v2972 = vpop.f32.mrb[0].mxu0
      %v2973 = vadd.f32 %v2227, %v2972
      %v2974 = vpop.f32.mrb[0].mxu0
      %v2975 = vadd.f32 %v2231, %v2974
      %2976 = vmatprep.mubr.bf16.mxu0 0
      %2977 = vmatmul.mubr.bf16.gmra.mrb[0].mxu0 %v2145
      %v2978 = vpop.f32.mrb[0].mxu0
      %v2979 = vadd.f32 %v2227, %v2978
      %v2980 = vpop.f32.mrb[0].mxu0
      %v2981 = vadd.f32 %v2231, %v2980
      %v2982 = vpop.f32.mrb[0].mxu0
      %v2983 = vadd.f32 %v2227, %v2982
      %v2984 = vpop.f32.mrb[0].mxu0
      %v2985 = vadd.f32 %v2231, %v2984
      %2986 = vmatprep.mubr.bf16.mxu0 0
      %2987 = vmatmul.mubr.bf16.gmra.mrb[0].mxu0 %v2146
      %v2988 = vpop.f32.mrb[0].mxu0
      %v2989 = vadd.f32 %v2227, %v2988
      %v2990 = vpop.f32.mrb[0].mxu0
      %v2991 = vadd.f32 %v2231, %v2990
      %v2992 = vpop.f32.mrb[0].mxu0
      %v2993 = vadd.f32 %v2227, %v2992
      %v2994 = vpop.f32.mrb[0].mxu0
      %v2995 = vadd.f32 %v2231, %v2994
      %2996 = vmatprep.mubr.bf16.mxu0 0
      %2997 = vmatmul.mubr.bf16.gmra.mrb[0].mxu0 %v2147
      %v2998 = vpop.f32.mrb[0].mxu0
      %v2999 = vadd.f32 %v2227, %v2998
      %v3000 = vpop.f32.mrb[0].mxu0
      %v3001 = vadd.f32 %v2231, %v3000
      %v3002 = vpop.f32.mrb[0].mxu0
      %v3003 = vadd.f32 %v2227, %v3002
      %v3004 = vpop.f32.mrb[0].mxu0
      %v3005 = vadd.f32 %v2231, %v3004
      %3006 = vmatprep.mubr.bf16.mxu0 0
      %3007 = vmatmul.mubr.bf16.gmra.mrb[0].mxu0 %v2148
      %v3008 = vpop.f32.mrb[0].mxu0
      %v3009 = vadd.f32 %v2227, %v3008
      %v3010 = vpop.f32.mrb[0].mxu0
      %v3011 = vadd.f32 %v2231, %v3010
      %v3012 = vpop.f32.mrb[0].mxu0
      %v3013 = vadd.f32 %v2227, %v3012
      %v3014 = vpop.f32.mrb[0].mxu0
      %v3015 = vadd.f32 %v2231, %v3014
      %3016 = vmatprep.mubr.bf16.mxu0 0
      %3017 = vmatmul.mubr.bf16.gmra.mrb[0].mxu0 %v2149
      %v3018 = vpop.f32.mrb[0].mxu0
      %v3019 = vadd.f32 %v2227, %v3018
      %v3020 = vpop.f32.mrb[0].mxu0
      %v3021 = vadd.f32 %v2231, %v3020
      %v3022 = vpop.f32.mrb[0].mxu0
      %v3023 = vadd.f32 %v2227, %v3022
      %v3024 = vpop.f32.mrb[0].mxu0
      %v3025 = vadd.f32 %v2231, %v3024
      %3026 = vmatprep.mubr.bf16.mxu0 0
      %3027 = vmatmul.mubr.bf16.gmra.mrb[0].mxu0 %v2150
      %v3028 = vpop.f32.mrb[0].mxu0
      %v3029 = vadd.f32 %v2227, %v3028
      %v3030 = vpop.f32.mrb[0].mxu0
      %v3031 = vadd.f32 %v2231, %v3030
      %v3032 = vpop.f32.mrb[0].mxu0
      %v3033 = vadd.f32 %v2227, %v3032
      %v3034 = vpop.f32.mrb[0].mxu0
      %v3035 = vadd.f32 %v2231, %v3034
      %3036 = vmatprep.mubr.bf16.mxu0 0
      %3037 = vmatmul.mubr.bf16.gmra.mrb[0].mxu0 %v2151
      %v3038 = vpop.f32.mrb[0].mxu0
      %v3039 = vadd.f32 %v2227, %v3038
      %v3040 = vpop.f32.mrb[0].mxu0
      %v3041 = vadd.f32 %v2231, %v3040
      %v3042 = vpop.f32.mrb[0].mxu0
      %v3043 = vadd.f32 %v2227, %v3042
      %v3044 = vpop.f32.mrb[0].mxu0
      %v3045 = vadd.f32 %v2231, %v3044
      %3046 = vmatprep.mubr.bf16.mxu0 0
      %3047 = vmatmul.mubr.bf16.gmra.mrb[0].mxu0 %v2152
      %v3048 = vpop.f32.mrb[0].mxu0
      %v3049 = vadd.f32 %v2227, %v3048
      %v3050 = vpop.f32.mrb[0].mxu0
      %v3051 = vadd.f32 %v2231, %v3050
      %v3052 = vpop.f32.mrb[0].mxu0
      %v3053 = vadd.f32 %v2227, %v3052
      %v3054 = vpop.f32.mrb[0].mxu0
      %v3055 = vadd.f32 %v2231, %v3054
      %3056 = vmatprep.mubr.bf16.mxu0 0
      %3057 = vmatmul.mubr.bf16.gmra.mrb[0].mxu0 %v2153
      %v3058 = vpop.f32.mrb[0].mxu0
      %v3059 = vadd.f32 %v2227, %v3058
      %v3060 = vpop.f32.mrb[0].mxu0
      %v3061 = vadd.f32 %v2231, %v3060
      %v3062 = vpop.f32.mrb[0].mxu0
      %v3063 = vadd.f32 %v2227, %v3062
      %v3064 = vpop.f32.mrb[0].mxu0
      %v3065 = vadd.f32 %v2231, %v3064
      %3066 = vmatprep.mubr.bf16.mxu0 0
      %3067 = vmatmul.mubr.bf16.gmra.mrb[0].mxu0 %v2154
      %v3068 = vpop.f32.mrb[0].mxu0
      %v3069 = vadd.f32 %v2227, %v3068
      %v3070 = vpop.f32.mrb[0].mxu0
      %v3071 = vadd.f32 %v2231, %v3070
      %v3072 = vpop.f32.mrb[0].mxu0
      %v3073 = vadd.f32 %v2227, %v3072
      %v3074 = vpop.f32.mrb[0].mxu0
      %v3075 = vadd.f32 %v2231, %v3074
      %3076 = vmatprep.mubr.bf16.mxu0 0
      %3077 = vmatmul.mubr.bf16.gmra.mrb[0].mxu0 %v2155
      %v3078 = vpop.f32.mrb[0].mxu0
      %v3079 = vadd.f32 %v2227, %v3078
      %v3080 = vpop.f32.mrb[0].mxu0
      %v3081 = vadd.f32 %v2231, %v3080
      %v3082 = vpop.f32.mrb[0].mxu0
      %v3083 = vadd.f32 %v2227, %v3082
      %v3084 = vpop.f32.mrb[0].mxu0
      %v3085 = vadd.f32 %v2231, %v3084
      %3086 = vmatprep.mubr.bf16.mxu0 0
      %3087 = vmatmul.mubr.bf16.gmra.mrb[0].mxu0 %v2156
      %v3088 = vpop.f32.mrb[0].mxu0
      %v3089 = vadd.f32 %v2227, %v3088
      %v3090 = vpop.f32.mrb[0].mxu0
      %v3091 = vadd.f32 %v2231, %v3090
      %v3092 = vpop.f32.mrb[0].mxu0
      %v3093 = vadd.f32 %v2227, %v3092
      %v3094 = vpop.f32.mrb[0].mxu0
      %v3095 = vadd.f32 %v2231, %v3094
      %3096 = vmatprep.mubr.bf16.mxu0 0
      %3097 = vmatmul.mubr.bf16.gmra.mrb[0].mxu0 %v2157
      %v3098 = vpop.f32.mrb[0].mxu0
      %v3099 = vadd.f32 %v2227, %v3098
      %v3100 = vpop.f32.mrb[0].mxu0
      %v3101 = vadd.f32 %v2231, %v3100
      %v3102 = vpop.f32.mrb[0].mxu0
      %v3103 = vadd.f32 %v2227, %v3102
      %v3104 = vpop.f32.mrb[0].mxu0
      %v3105 = vadd.f32 %v2231, %v3104
      %3106 = vdwg.mxu0
      %3107 = vmatprep.subr.bf16.mxu0 %v2459
      %3108 = vmatpush1.bf16.msra.mxu0 %v2458
      %3109 = vmatprep.subr.bf16.mxu0 %v2467
      %3110 = vmatpush1.bf16.msra.mxu0 %v2466
      %3111 = vmatprep.subr.bf16.mxu0 %v2475
      %3112 = vmatpush1.bf16.msra.mxu0 %v2474
      %3113 = vmatprep.subr.bf16.mxu0 %v2483
      %3114 = vmatpush1.bf16.msra.mxu0 %v2482
      %3115 = vmatprep.subr.bf16.mxu0 %v2491
      %3116 = vmatpush1.bf16.msra.mxu0 %v2490
      %3117 = vmatprep.subr.bf16.mxu0 %v2499
      %3118 = vmatpush1.bf16.msra.mxu0 %v2498
      %3119 = vmatprep.subr.bf16.mxu0 %v2507
      %3120 = vmatpush1.bf16.msra.mxu0 %v2506
      %3121 = vmatprep.subr.bf16.mxu0 %v2515
      %3122 = vmatpush1.bf16.msra.mxu0 %v2514
      %3123 = vmatprep.subr.bf16.mxu0 0
      %3124 = vmatpush1.bf16.msra.mxu0 0
      %3125 = vmatprep.subr.bf16.mxu0 0
      %3126 = vmatpush1.bf16.msra.mxu0 0
      %3127 = vmatprep.subr.bf16.mxu0 0
      %3128 = vmatpush1.bf16.msra.mxu0 0
      %3129 = vmatprep.subr.bf16.mxu0 0
      %3130 = vmatpush1.bf16.msra.mxu0 0
      %3131 = vmatprep.subr.bf16.mxu0 0
      %3132 = vmatpush1.bf16.msra.mxu0 0
      %3133 = vmatprep.subr.bf16.mxu0 0
      %3134 = vmatpush1.bf16.msra.mxu0 0
      %3135 = vmatprep.subr.bf16.mxu0 0
      %3136 = vmatpush1.bf16.msra.mxu0 0
      %3137 = vmatprep.subr.bf16.mxu0 0
      %3138 = vmatpush1.bf16.msra.mxu0 0
      %3139 = vmatprep.mubr.bf16.mxu0 0
      %3140 = vmatmul.mubr.bf16.gmra.mrb[0].mxu0 %v2109
      %v3141 = vpop.f32.mrb[0].mxu0
      %v3142 = vadd.f32 %v2235, %v3141
      %v3143 = vpop.f32.mrb[0].mxu0
      %v3144 = vadd.f32 %v2239, %v3143
      %v3145 = vpop.f32.mrb[0].mxu0
      %v3146 = vadd.f32 %v2235, %v3145
      %v3147 = vpop.f32.mrb[0].mxu0
      %v3148 = vadd.f32 %v2239, %v3147
      %3149 = vmatprep.mubr.bf16.mxu0 0
      %3150 = vmatmul.mubr.bf16.gmra.mrb[0].mxu0 %v2110
      %v3151 = vpop.f32.mrb[0].mxu0
      %v3152 = vadd.f32 %v2235, %v3151
      %v3153 = vpop.f32.mrb[0].mxu0
      %v3154 = vadd.f32 %v2239, %v3153
      %v3155 = vpop.f32.mrb[0].mxu0
      %v3156 = vadd.f32 %v2235, %v3155
      %v3157 = vpop.f32.mrb[0].mxu0
      %v3158 = vadd.f32 %v2239, %v3157
      %3159 = vmatprep.mubr.bf16.mxu0 0
      %3160 = vmatmul.mubr.bf16.gmra.mrb[0].mxu0 %v2111
      %v3161 = vpop.f32.mrb[0].mxu0
      %v3162 = vadd.f32 %v2235, %v3161
      %v3163 = vpop.f32.mrb[0].mxu0
      %v3164 = vadd.f32 %v2239, %v3163
      %v3165 = vpop.f32.mrb[0].mxu0
      %v3166 = vadd.f32 %v2235, %v3165
      %v3167 = vpop.f32.mrb[0].mxu0
      %v3168 = vadd.f32 %v2239, %v3167
      %3169 = vmatprep.mubr.bf16.mxu0 0
      %3170 = vmatmul.mubr.bf16.gmra.mrb[0].mxu0 %v2112
      %v3171 = vpop.f32.mrb[0].mxu0
      %v3172 = vadd.f32 %v2235, %v3171
      %v3173 = vpop.f32.mrb[0].mxu0
      %v3174 = vadd.f32 %v2239, %v3173
      %v3175 = vpop.f32.mrb[0].mxu0
      %v3176 = vadd.f32 %v2235, %v3175
      %v3177 = vpop.f32.mrb[0].mxu0
      %v3178 = vadd.f32 %v2239, %v3177
      %3179 = vmatprep.mubr.bf16.mxu0 0
      %3180 = vmatmul.mubr.bf16.gmra.mrb[0].mxu0 %v2113
      %v3181 = vpop.f32.mrb[0].mxu0
      %v3182 = vadd.f32 %v2235, %v3181
      %v3183 = vpop.f32.mrb[0].mxu0
      %v3184 = vadd.f32 %v2239, %v3183
      %v3185 = vpop.f32.mrb[0].mxu0
      %v3186 = vadd.f32 %v2235, %v3185
      %v3187 = vpop.f32.mrb[0].mxu0
      %v3188 = vadd.f32 %v2239, %v3187
      %3189 = vmatprep.mubr.bf16.mxu0 0
      %3190 = vmatmul.mubr.bf16.gmra.mrb[0].mxu0 %v2114
      %v3191 = vpop.f32.mrb[0].mxu0
      %v3192 = vadd.f32 %v2235, %v3191
      %v3193 = vpop.f32.mrb[0].mxu0
      %v3194 = vadd.f32 %v2239, %v3193
      %v3195 = vpop.f32.mrb[0].mxu0
      %v3196 = vadd.f32 %v2235, %v3195
      %v3197 = vpop.f32.mrb[0].mxu0
      %v3198 = vadd.f32 %v2239, %v3197
      %3199 = vmatprep.mubr.bf16.mxu0 0
      %3200 = vmatmul.mubr.bf16.gmra.mrb[0].mxu0 %v2115
      %v3201 = vpop.f32.mrb[0].mxu0
      %v3202 = vadd.f32 %v2235, %v3201
      %v3203 = vpop.f32.mrb[0].mxu0
      %v3204 = vadd.f32 %v2239, %v3203
      %v3205 = vpop.f32.mrb[0].mxu0
      %v3206 = vadd.f32 %v2235, %v3205
      %v3207 = vpop.f32.mrb[0].mxu0
      %v3208 = vadd.f32 %v2239, %v3207
      %3209 = vmatprep.mubr.bf16.mxu0 0
      %3210 = vmatmul.mubr.bf16.gmra.mrb[0].mxu0 %v2116
      %v3211 = vpop.f32.mrb[0].mxu0
      %v3212 = vadd.f32 %v2235, %v3211
      %v3213 = vpop.f32.mrb[0].mxu0
      %v3214 = vadd.f32 %v2239, %v3213
      %v3215 = vpop.f32.mrb[0].mxu0
      %v3216 = vadd.f32 %v2235, %v3215
      %v3217 = vpop.f32.mrb[0].mxu0
      %v3218 = vadd.f32 %v2239, %v3217
      %3219 = vmatprep.mubr.bf16.mxu0 0
      %3220 = vmatmul.mubr.bf16.gmra.mrb[0].mxu0 %v2117
      %v3221 = vpop.f32.mrb[0].mxu0
      %v3222 = vadd.f32 %v2235, %v3221
      %v3223 = vpop.f32.mrb[0].mxu0
      %v3224 = vadd.f32 %v2239, %v3223
      %v3225 = vpop.f32.mrb[0].mxu0
      %v3226 = vadd.f32 %v2235, %v3225
      %v3227 = vpop.f32.mrb[0].mxu0
      %v3228 = vadd.f32 %v2239, %v3227
      %3229 = vmatprep.mubr.bf16.mxu0 0
      %3230 = vmatmul.mubr.bf16.gmra.mrb[0].mxu0 %v2118
      %v3231 = vpop.f32.mrb[0].mxu0
      %v3232 = vadd.f32 %v2235, %v3231
      %v3233 = vpop.f32.mrb[0].mxu0
      %v3234 = vadd.f32 %v2239, %v3233
      %v3235 = vpop.f32.mrb[0].mxu0
      %v3236 = vadd.f32 %v2235, %v3235
      %v3237 = vpop.f32.mrb[0].mxu0
      %v3238 = vadd.f32 %v2239, %v3237
      %3239 = vmatprep.mubr.bf16.mxu0 0
      %3240 = vmatmul.mubr.bf16.gmra.mrb[0].mxu0 %v2119
      %v3241 = vpop.f32.mrb[0].mxu0
      %v3242 = vadd.f32 %v2235, %v3241
      %v3243 = vpop.f32.mrb[0].mxu0
      %v3244 = vadd.f32 %v2239, %v3243
      %v3245 = vpop.f32.mrb[0].mxu0
      %v3246 = vadd.f32 %v2235, %v3245
      %v3247 = vpop.f32.mrb[0].mxu0
      %v3248 = vadd.f32 %v2239, %v3247
      %3249 = vmatprep.mubr.bf16.mxu0 0
      %3250 = vmatmul.mubr.bf16.gmra.mrb[0].mxu0 %v2120
      %v3251 = vpop.f32.mrb[0].mxu0
      %v3252 = vadd.f32 %v2235, %v3251
      %v3253 = vpop.f32.mrb[0].mxu0
      %v3254 = vadd.f32 %v2239, %v3253
      %v3255 = vpop.f32.mrb[0].mxu0
      %v3256 = vadd.f32 %v2235, %v3255
      %v3257 = vpop.f32.mrb[0].mxu0
      %v3258 = vadd.f32 %v2239, %v3257
      %3259 = vmatprep.mubr.bf16.mxu0 0
      %3260 = vmatmul.mubr.bf16.gmra.mrb[0].mxu0 %v2121
      %v3261 = vpop.f32.mrb[0].mxu0
      %v3262 = vadd.f32 %v2235, %v3261
      %v3263 = vpop.f32.mrb[0].mxu0
      %v3264 = vadd.f32 %v2239, %v3263
      %v3265 = vpop.f32.mrb[0].mxu0
      %v3266 = vadd.f32 %v2235, %v3265
      %v3267 = vpop.f32.mrb[0].mxu0
      %v3268 = vadd.f32 %v2239, %v3267
      %3269 = vmatprep.mubr.bf16.mxu0 0
      %3270 = vmatmul.mubr.bf16.gmra.mrb[0].mxu0 %v2122
      %v3271 = vpop.f32.mrb[0].mxu0
      %v3272 = vadd.f32 %v2235, %v3271
      %v3273 = vpop.f32.mrb[0].mxu0
      %v3274 = vadd.f32 %v2239, %v3273
      %v3275 = vpop.f32.mrb[0].mxu0
      %v3276 = vadd.f32 %v2235, %v3275
      %v3277 = vpop.f32.mrb[0].mxu0
      %v3278 = vadd.f32 %v2239, %v3277
      %3279 = vmatprep.mubr.bf16.mxu0 0
      %3280 = vmatmul.mubr.bf16.gmra.mrb[0].mxu0 %v2123
      %v3281 = vpop.f32.mrb[0].mxu0
      %v3282 = vadd.f32 %v2235, %v3281
      %v3283 = vpop.f32.mrb[0].mxu0
      %v3284 = vadd.f32 %v2239, %v3283
      %v3285 = vpop.f32.mrb[0].mxu0
      %v3286 = vadd.f32 %v2235, %v3285
      %v3287 = vpop.f32.mrb[0].mxu0
      %v3288 = vadd.f32 %v2239, %v3287
      %3289 = vmatprep.mubr.bf16.mxu0 0
      %3290 = vmatmul.mubr.bf16.gmra.mrb[0].mxu0 %v2124
      %v3291 = vpop.f32.mrb[0].mxu0
      %v3292 = vadd.f32 %v2235, %v3291
      %v3293 = vpop.f32.mrb[0].mxu0
      %v3294 = vadd.f32 %v2239, %v3293
      %v3295 = vpop.f32.mrb[0].mxu0
      %v3296 = vadd.f32 %v2235, %v3295
      %v3297 = vpop.f32.mrb[0].mxu0
      %v3298 = vadd.f32 %v2239, %v3297
      %3299 = vmatprep.mubr.bf16.mxu0 0
      %3300 = vmatmul.mubr.bf16.gmra.mrb[0].mxu0 %v2125
      %v3301 = vpop.f32.mrb[0].mxu0
      %v3302 = vadd.f32 %v2235, %v3301
      %v3303 = vpop.f32.mrb[0].mxu0
      %v3304 = vadd.f32 %v2239, %v3303
      %v3305 = vpop.f32.mrb[0].mxu0
      %v3306 = vadd.f32 %v2235, %v3305
      %v3307 = vpop.f32.mrb[0].mxu0
      %v3308 = vadd.f32 %v2239, %v3307
      %3309 = vmatprep.mubr.bf16.mxu0 0
      %3310 = vmatmul.mubr.bf16.gmra.mrb[0].mxu0 %v2126
      %v3311 = vpop.f32.mrb[0].mxu0
      %v3312 = vadd.f32 %v2235, %v3311
      %v3313 = vpop.f32.mrb[0].mxu0
      %v3314 = vadd.f32 %v2239, %v3313
      %v3315 = vpop.f32.mrb[0].mxu0
      %v3316 = vadd.f32 %v2235, %v3315
      %v3317 = vpop.f32.mrb[0].mxu0
      %v3318 = vadd.f32 %v2239, %v3317
      %3319 = vmatprep.mubr.bf16.mxu0 0
      %3320 = vmatmul.mubr.bf16.gmra.mrb[0].mxu0 %v2127
      %v3321 = vpop.f32.mrb[0].mxu0
      %v3322 = vadd.f32 %v2235, %v3321
      %v3323 = vpop.f32.mrb[0].mxu0
      %v3324 = vadd.f32 %v2239, %v3323
      %v3325 = vpop.f32.mrb[0].mxu0
      %v3326 = vadd.f32 %v2235, %v3325
      %v3327 = vpop.f32.mrb[0].mxu0
      %v3328 = vadd.f32 %v2239, %v3327
      %3329 = vmatprep.mubr.bf16.mxu0 0
      %3330 = vmatmul.mubr.bf16.gmra.mrb[0].mxu0 %v2128
      %v3331 = vpop.f32.mrb[0].mxu0
      %v3332 = vadd.f32 %v2235, %v3331
      %v3333 = vpop.f32.mrb[0].mxu0
      %v3334 = vadd.f32 %v2239, %v3333
      %v3335 = vpop.f32.mrb[0].mxu0
      %v3336 = vadd.f32 %v2235, %v3335
      %v3337 = vpop.f32.mrb[0].mxu0
      %v3338 = vadd.f32 %v2239, %v3337
      %3339 = vmatprep.mubr.bf16.mxu0 0
      %3340 = vmatmul.mubr.bf16.gmra.mrb[0].mxu0 %v2129
      %v3341 = vpop.f32.mrb[0].mxu0
      %v3342 = vadd.f32 %v2235, %v3341
      %v3343 = vpop.f32.mrb[0].mxu0
      %v3344 = vadd.f32 %v2239, %v3343
      %v3345 = vpop.f32.mrb[0].mxu0
      %v3346 = vadd.f32 %v2235, %v3345
      %v3347 = vpop.f32.mrb[0].mxu0
      %v3348 = vadd.f32 %v2239, %v3347
      %3349 = vmatprep.mubr.bf16.mxu0 0
      %3350 = vmatmul.mubr.bf16.gmra.mrb[0].mxu0 %v2130
      %v3351 = vpop.f32.mrb[0].mxu0
      %v3352 = vadd.f32 %v2235, %v3351
      %v3353 = vpop.f32.mrb[0].mxu0
      %v3354 = vadd.f32 %v2239, %v3353
      %v3355 = vpop.f32.mrb[0].mxu0
      %v3356 = vadd.f32 %v2235, %v3355
      %v3357 = vpop.f32.mrb[0].mxu0
      %v3358 = vadd.f32 %v2239, %v3357
      %3359 = vmatprep.mubr.bf16.mxu0 0
      %3360 = vmatmul.mubr.bf16.gmra.mrb[0].mxu0 %v2131
      %v3361 = vpop.f32.mrb[0].mxu0
      %v3362 = vadd.f32 %v2235, %v3361
      %v3363 = vpop.f32.mrb[0].mxu0
      %v3364 = vadd.f32 %v2239, %v3363
      %v3365 = vpop.f32.mrb[0].mxu0
      %v3366 = vadd.f32 %v2235, %v3365
      %v3367 = vpop.f32.mrb[0].mxu0
      %v3368 = vadd.f32 %v2239, %v3367
      %3369 = vmatprep.mubr.bf16.mxu0 0
      %3370 = vmatmul.mubr.bf16.gmra.mrb[0].mxu0 %v2132
      %v3371 = vpop.f32.mrb[0].mxu0
      %v3372 = vadd.f32 %v2235, %v3371
      %v3373 = vpop.f32.mrb[0].mxu0
      %v3374 = vadd.f32 %v2239, %v3373
      %v3375 = vpop.f32.mrb[0].mxu0
      %v3376 = vadd.f32 %v2235, %v3375
      %v3377 = vpop.f32.mrb[0].mxu0
      %v3378 = vadd.f32 %v2239, %v3377
      %3379 = vmatprep.mubr.bf16.mxu0 0
      %3380 = vmatmul.mubr.bf16.gmra.mrb[0].mxu0 %v2133
      %v3381 = vpop.f32.mrb[0].mxu0
      %v3382 = vadd.f32 %v2235, %v3381
      %v3383 = vpop.f32.mrb[0].mxu0
      %v3384 = vadd.f32 %v2239, %v3383
      %v3385 = vpop.f32.mrb[0].mxu0
      %v3386 = vadd.f32 %v2235, %v3385
      %v3387 = vpop.f32.mrb[0].mxu0
      %v3388 = vadd.f32 %v2239, %v3387
      %3389 = vmatprep.mubr.bf16.mxu0 0
      %3390 = vmatmul.mubr.bf16.gmra.mrb[0].mxu0 %v2134
      %v3391 = vpop.f32.mrb[0].mxu0
      %v3392 = vadd.f32 %v2235, %v3391
      %v3393 = vpop.f32.mrb[0].mxu0
      %v3394 = vadd.f32 %v2239, %v3393
      %v3395 = vpop.f32.mrb[0].mxu0
      %v3396 = vadd.f32 %v2235, %v3395
      %v3397 = vpop.f32.mrb[0].mxu0
      %v3398 = vadd.f32 %v2239, %v3397
      %3399 = vmatprep.mubr.bf16.mxu0 0
      %3400 = vmatmul.mubr.bf16.gmra.mrb[0].mxu0 %v2135
      %v3401 = vpop.f32.mrb[0].mxu0
      %v3402 = vadd.f32 %v2235, %v3401
      %v3403 = vpop.f32.mrb[0].mxu0
      %v3404 = vadd.f32 %v2239, %v3403
      %v3405 = vpop.f32.mrb[0].mxu0
      %v3406 = vadd.f32 %v2235, %v3405
      %v3407 = vpop.f32.mrb[0].mxu0
      %v3408 = vadd.f32 %v2239, %v3407
      %3409 = vmatprep.mubr.bf16.mxu0 0
      %3410 = vmatmul.mubr.bf16.gmra.mrb[0].mxu0 %v2136
      %v3411 = vpop.f32.mrb[0].mxu0
      %v3412 = vadd.f32 %v2235, %v3411
      %v3413 = vpop.f32.mrb[0].mxu0
      %v3414 = vadd.f32 %v2239, %v3413
      %v3415 = vpop.f32.mrb[0].mxu0
      %v3416 = vadd.f32 %v2235, %v3415
      %v3417 = vpop.f32.mrb[0].mxu0
      %v3418 = vadd.f32 %v2239, %v3417
      %3419 = vmatprep.mubr.bf16.mxu0 0
      %3420 = vmatmul.mubr.bf16.gmra.mrb[0].mxu0 %v2137
      %v3421 = vpop.f32.mrb[0].mxu0
      %v3422 = vadd.f32 %v2235, %v3421
      %v3423 = vpop.f32.mrb[0].mxu0
      %v3424 = vadd.f32 %v2239, %v3423
      %v3425 = vpop.f32.mrb[0].mxu0
      %v3426 = vadd.f32 %v2235, %v3425
      %v3427 = vpop.f32.mrb[0].mxu0
      %v3428 = vadd.f32 %v2239, %v3427
      %3429 = vmatprep.mubr.bf16.mxu0 0
      %3430 = vmatmul.mubr.bf16.gmra.mrb[0].mxu0 %v2138
      %v3431 = vpop.f32.mrb[0].mxu0
      %v3432 = vadd.f32 %v2235, %v3431
      %v3433 = vpop.f32.mrb[0].mxu0
      %v3434 = vadd.f32 %v2239, %v3433
      %v3435 = vpop.f32.mrb[0].mxu0
      %v3436 = vadd.f32 %v2235, %v3435
      %v3437 = vpop.f32.mrb[0].mxu0
      %v3438 = vadd.f32 %v2239, %v3437
      %3439 = vmatprep.mubr.bf16.mxu0 0
      %3440 = vmatmul.mubr.bf16.gmra.mrb[0].mxu0 %v2139
      %v3441 = vpop.f32.mrb[0].mxu0
      %v3442 = vadd.f32 %v2235, %v3441
      %v3443 = vpop.f32.mrb[0].mxu0
      %v3444 = vadd.f32 %v2239, %v3443
      %v3445 = vpop.f32.mrb[0].mxu0
      %v3446 = vadd.f32 %v2235, %v3445
      %v3447 = vpop.f32.mrb[0].mxu0
      %v3448 = vadd.f32 %v2239, %v3447
      %3449 = vmatprep.mubr.bf16.mxu0 0
      %3450 = vmatmul.mubr.bf16.gmra.mrb[0].mxu0 %v2140
      %v3451 = vpop.f32.mrb[0].mxu0
      %v3452 = vadd.f32 %v2235, %v3451
      %v3453 = vpop.f32.mrb[0].mxu0
      %v3454 = vadd.f32 %v2239, %v3453
      %v3455 = vpop.f32.mrb[0].mxu0
      %v3456 = vadd.f32 %v2235, %v3455
      %v3457 = vpop.f32.mrb[0].mxu0
      %v3458 = vadd.f32 %v2239, %v3457
      %3459 = vmatprep.mubr.bf16.mxu0 0
      %3460 = vmatmul.mubr.bf16.gmra.mrb[0].mxu0 %v2141
      %v3461 = vpop.f32.mrb[0].mxu0
      %v3462 = vadd.f32 %v2235, %v3461
      %v3463 = vpop.f32.mrb[0].mxu0
      %v3464 = vadd.f32 %v2239, %v3463
      %v3465 = vpop.f32.mrb[0].mxu0
      %v3466 = vadd.f32 %v2235, %v3465
      %v3467 = vpop.f32.mrb[0].mxu0
      %v3468 = vadd.f32 %v2239, %v3467
      %3469 = vmatprep.mubr.bf16.mxu0 0
      %3470 = vmatmul.mubr.bf16.gmra.mrb[0].mxu0 %v2142
      %v3471 = vpop.f32.mrb[0].mxu0
      %v3472 = vadd.f32 %v2235, %v3471
      %v3473 = vpop.f32.mrb[0].mxu0
      %v3474 = vadd.f32 %v2239, %v3473
      %v3475 = vpop.f32.mrb[0].mxu0
      %v3476 = vadd.f32 %v2235, %v3475
      %v3477 = vpop.f32.mrb[0].mxu0
      %v3478 = vadd.f32 %v2239, %v3477
      %3479 = vmatprep.mubr.bf16.mxu0 0
      %3480 = vmatmul.mubr.bf16.gmra.mrb[0].mxu0 %v2143
      %v3481 = vpop.f32.mrb[0].mxu0
      %v3482 = vadd.f32 %v2235, %v3481
      %v3483 = vpop.f32.mrb[0].mxu0
      %v3484 = vadd.f32 %v2239, %v3483
      %v3485 = vpop.f32.mrb[0].mxu0
      %v3486 = vadd.f32 %v2235, %v3485
      %v3487 = vpop.f32.mrb[0].mxu0
      %v3488 = vadd.f32 %v2239, %v3487
      %3489 = vmatprep.mubr.bf16.mxu0 0
      %3490 = vmatmul.mubr.bf16.gmra.mrb[0].mxu0 %v2144
      %v3491 = vpop.f32.mrb[0].mxu0
      %v3492 = vadd.f32 %v2235, %v3491
      %v3493 = vpop.f32.mrb[0].mxu0
      %v3494 = vadd.f32 %v2239, %v3493
      %v3495 = vpop.f32.mrb[0].mxu0
      %v3496 = vadd.f32 %v2235, %v3495
      %v3497 = vpop.f32.mrb[0].mxu0
      %v3498 = vadd.f32 %v2239, %v3497
      %3499 = vmatprep.mubr.bf16.mxu0 0
      %3500 = vmatmul.mubr.bf16.gmra.mrb[0].mxu0 %v2145
      %v3501 = vpop.f32.mrb[0].mxu0
      %v3502 = vadd.f32 %v2235, %v3501
      %v3503 = vpop.f32.mrb[0].mxu0
      %v3504 = vadd.f32 %v2239, %v3503
      %v3505 = vpop.f32.mrb[0].mxu0
      %v3506 = vadd.f32 %v2235, %v3505
      %v3507 = vpop.f32.mrb[0].mxu0
      %v3508 = vadd.f32 %v2239, %v3507
      %3509 = vmatprep.mubr.bf16.mxu0 0
      %3510 = vmatmul.mubr.bf16.gmra.mrb[0].mxu0 %v2146
      %v3511 = vpop.f32.mrb[0].mxu0
      %v3512 = vadd.f32 %v2235, %v3511
      %v3513 = vpop.f32.mrb[0].mxu0
      %v3514 = vadd.f32 %v2239, %v3513
      %v3515 = vpop.f32.mrb[0].mxu0
      %v3516 = vadd.f32 %v2235, %v3515
      %v3517 = vpop.f32.mrb[0].mxu0
      %v3518 = vadd.f32 %v2239, %v3517
      %3519 = vmatprep.mubr.bf16.mxu0 0
      %3520 = vmatmul.mubr.bf16.gmra.mrb[0].mxu0 %v2147
      %v3521 = vpop.f32.mrb[0].mxu0
      %v3522 = vadd.f32 %v2235, %v3521
      %v3523 = vpop.f32.mrb[0].mxu0
      %v3524 = vadd.f32 %v2239, %v3523
      %v3525 = vpop.f32.mrb[0].mxu0
      %v3526 = vadd.f32 %v2235, %v3525
      %v3527 = vpop.f32.mrb[0].mxu0
      %v3528 = vadd.f32 %v2239, %v3527
      %3529 = vmatprep.mubr.bf16.mxu0 0
      %3530 = vmatmul.mubr.bf16.gmra.mrb[0].mxu0 %v2148
      %v3531 = vpop.f32.mrb[0].mxu0
      %v3532 = vadd.f32 %v2235, %v3531
      %v3533 = vpop.f32.mrb[0].mxu0
      %v3534 = vadd.f32 %v2239, %v3533
      %v3535 = vpop.f32.mrb[0].mxu0
      %v3536 = vadd.f32 %v2235, %v3535
      %v3537 = vpop.f32.mrb[0].mxu0
      %v3538 = vadd.f32 %v2239, %v3537
      %3539 = vmatprep.mubr.bf16.mxu0 0
      %3540 = vmatmul.mubr.bf16.gmra.mrb[0].mxu0 %v2149
      %v3541 = vpop.f32.mrb[0].mxu0
      %v3542 = vadd.f32 %v2235, %v3541
      %v3543 = vpop.f32.mrb[0].mxu0
      %v3544 = vadd.f32 %v2239, %v3543
      %v3545 = vpop.f32.mrb[0].mxu0
      %v3546 = vadd.f32 %v2235, %v3545
      %v3547 = vpop.f32.mrb[0].mxu0
      %v3548 = vadd.f32 %v2239, %v3547
      %3549 = vmatprep.mubr.bf16.mxu0 0
      %3550 = vmatmul.mubr.bf16.gmra.mrb[0].mxu0 %v2150
      %v3551 = vpop.f32.mrb[0].mxu0
      %v3552 = vadd.f32 %v2235, %v3551
      %v3553 = vpop.f32.mrb[0].mxu0
      %v3554 = vadd.f32 %v2239, %v3553
      %v3555 = vpop.f32.mrb[0].mxu0
      %v3556 = vadd.f32 %v2235, %v3555
      %v3557 = vpop.f32.mrb[0].mxu0
      %v3558 = vadd.f32 %v2239, %v3557
      %3559 = vmatprep.mubr.bf16.mxu0 0
      %3560 = vmatmul.mubr.bf16.gmra.mrb[0].mxu0 %v2151
      %v3561 = vpop.f32.mrb[0].mxu0
      %v3562 = vadd.f32 %v2235, %v3561
      %v3563 = vpop.f32.mrb[0].mxu0
      %v3564 = vadd.f32 %v2239, %v3563
      %v3565 = vpop.f32.mrb[0].mxu0
      %v3566 = vadd.f32 %v2235, %v3565
      %v3567 = vpop.f32.mrb[0].mxu0
      %v3568 = vadd.f32 %v2239, %v3567
      %3569 = vmatprep.mubr.bf16.mxu0 0
      %3570 = vmatmul.mubr.bf16.gmra.mrb[0].mxu0 %v2152
      %v3571 = vpop.f32.mrb[0].mxu0
      %v3572 = vadd.f32 %v2235, %v3571
      %v3573 = vpop.f32.mrb[0].mxu0
      %v3574 = vadd.f32 %v2239, %v3573
      %v3575 = vpop.f32.mrb[0].mxu0
      %v3576 = vadd.f32 %v2235, %v3575
      %v3577 = vpop.f32.mrb[0].mxu0
      %v3578 = vadd.f32 %v2239, %v3577
      %3579 = vmatprep.mubr.bf16.mxu0 0
      %3580 = vmatmul.mubr.bf16.gmra.mrb[0].mxu0 %v2153
      %v3581 = vpop.f32.mrb[0].mxu0
      %v3582 = vadd.f32 %v2235, %v3581
      %v3583 = vpop.f32.mrb[0].mxu0
      %v3584 = vadd.f32 %v2239, %v3583
      %v3585 = vpop.f32.mrb[0].mxu0
      %v3586 = vadd.f32 %v2235, %v3585
      %v3587 = vpop.f32.mrb[0].mxu0
      %v3588 = vadd.f32 %v2239, %v3587
      %3589 = vmatprep.mubr.bf16.mxu0 0
      %3590 = vmatmul.mubr.bf16.gmra.mrb[0].mxu0 %v2154
      %v3591 = vpop.f32.mrb[0].mxu0
      %v3592 = vadd.f32 %v2235, %v3591
      %v3593 = vpop.f32.mrb[0].mxu0
      %v3594 = vadd.f32 %v2239, %v3593
      %v3595 = vpop.f32.mrb[0].mxu0
      %v3596 = vadd.f32 %v2235, %v3595
      %v3597 = vpop.f32.mrb[0].mxu0
      %v3598 = vadd.f32 %v2239, %v3597
      %3599 = vmatprep.mubr.bf16.mxu0 0
      %3600 = vmatmul.mubr.bf16.gmra.mrb[0].mxu0 %v2155
      %v3601 = vpop.f32.mrb[0].mxu0
      %v3602 = vadd.f32 %v2235, %v3601
      %v3603 = vpop.f32.mrb[0].mxu0
      %v3604 = vadd.f32 %v2239, %v3603
      %v3605 = vpop.f32.mrb[0].mxu0
      %v3606 = vadd.f32 %v2235, %v3605
      %v3607 = vpop.f32.mrb[0].mxu0
      %v3608 = vadd.f32 %v2239, %v3607
      %3609 = vmatprep.mubr.bf16.mxu0 0
      %3610 = vmatmul.mubr.bf16.gmra.mrb[0].mxu0 %v2156
      %v3611 = vpop.f32.mrb[0].mxu0
      %v3612 = vadd.f32 %v2235, %v3611
      %v3613 = vpop.f32.mrb[0].mxu0
      %v3614 = vadd.f32 %v2239, %v3613
      %v3615 = vpop.f32.mrb[0].mxu0
      %v3616 = vadd.f32 %v2235, %v3615
      %v3617 = vpop.f32.mrb[0].mxu0
      %v3618 = vadd.f32 %v2239, %v3617
      %3619 = vmatprep.mubr.bf16.mxu0 0
      %3620 = vmatmul.mubr.bf16.gmra.mrb[0].mxu0 %v2157
      %v3621 = vpop.f32.mrb[0].mxu0
      %v3622 = vadd.f32 %v2235, %v3621
      %v3623 = vpop.f32.mrb[0].mxu0
      %v3624 = vadd.f32 %v2239, %v3623
      %v3625 = vpop.f32.mrb[0].mxu0
      %v3626 = vadd.f32 %v2235, %v3625
      %v3627 = vpop.f32.mrb[0].mxu0
      %v3628 = vadd.f32 %v2239, %v3627
      %3629 = vdwg.mxu0
      %3630 = vmatprep.subr.bf16.mxu0 %v2461
      %3631 = vmatpush1.bf16.msra.mxu0 %v2460
      %3632 = vmatprep.subr.bf16.mxu0 %v2469
      %3633 = vmatpush1.bf16.msra.mxu0 %v2468
      %3634 = vmatprep.subr.bf16.mxu0 %v2477
      %3635 = vmatpush1.bf16.msra.mxu0 %v2476
      %3636 = vmatprep.subr.bf16.mxu0 %v2485
      %3637 = vmatpush1.bf16.msra.mxu0 %v2484
      %3638 = vmatprep.subr.bf16.mxu0 %v2493
      %3639 = vmatpush1.bf16.msra.mxu0 %v2492
      %3640 = vmatprep.subr.bf16.mxu0 %v2501
      %3641 = vmatpush1.bf16.msra.mxu0 %v2500
      %3642 = vmatprep.subr.bf16.mxu0 %v2509
      %3643 = vmatpush1.bf16.msra.mxu0 %v2508
      %3644 = vmatprep.subr.bf16.mxu0 %v2517
      %3645 = vmatpush1.bf16.msra.mxu0 %v2516
      %3646 = vmatprep.subr.bf16.mxu0 0
      %3647 = vmatpush1.bf16.msra.mxu0 0
      %3648 = vmatprep.subr.bf16.mxu0 0
      %3649 = vmatpush1.bf16.msra.mxu0 0
      %3650 = vmatprep.subr.bf16.mxu0 0
      %3651 = vmatpush1.bf16.msra.mxu0 0
      %3652 = vmatprep.subr.bf16.mxu0 0
      %3653 = vmatpush1.bf16.msra.mxu0 0
      %3654 = vmatprep.subr.bf16.mxu0 0
      %3655 = vmatpush1.bf16.msra.mxu0 0
      %3656 = vmatprep.subr.bf16.mxu0 0
      %3657 = vmatpush1.bf16.msra.mxu0 0
      %3658 = vmatprep.subr.bf16.mxu0 0
      %3659 = vmatpush1.bf16.msra.mxu0 0
      %3660 = vmatprep.subr.bf16.mxu0 0
      %3661 = vmatpush1.bf16.msra.mxu0 0
      %3662 = vmatprep.mubr.bf16.mxu0 0
      %3663 = vmatmul.mubr.bf16.gmra.mrb[0].mxu0 %v2109
      %v3664 = vpop.f32.mrb[0].mxu0
      %v3665 = vadd.f32 %v2243, %v3664
      %v3666 = vpop.f32.mrb[0].mxu0
      %v3667 = vadd.f32 %v2247, %v3666
      %v3668 = vpop.f32.mrb[0].mxu0
      %v3669 = vadd.f32 %v2243, %v3668
      %v3670 = vpop.f32.mrb[0].mxu0
      %v3671 = vadd.f32 %v2247, %v3670
      %3672 = vmatprep.mubr.bf16.mxu0 0
      %3673 = vmatmul.mubr.bf16.gmra.mrb[0].mxu0 %v2110
      %v3674 = vpop.f32.mrb[0].mxu0
      %v3675 = vadd.f32 %v2243, %v3674
      %v3676 = vpop.f32.mrb[0].mxu0
      %v3677 = vadd.f32 %v2247, %v3676
      %v3678 = vpop.f32.mrb[0].mxu0
      %v3679 = vadd.f32 %v2243, %v3678
      %v3680 = vpop.f32.mrb[0].mxu0
      %v3681 = vadd.f32 %v2247, %v3680
      %3682 = vmatprep.mubr.bf16.mxu0 0
      %3683 = vmatmul.mubr.bf16.gmra.mrb[0].mxu0 %v2111
      %v3684 = vpop.f32.mrb[0].mxu0
      %v3685 = vadd.f32 %v2243, %v3684
      %v3686 = vpop.f32.mrb[0].mxu0
      %v3687 = vadd.f32 %v2247, %v3686
      %v3688 = vpop.f32.mrb[0].mxu0
      %v3689 = vadd.f32 %v2243, %v3688
      %v3690 = vpop.f32.mrb[0].mxu0
      %v3691 = vadd.f32 %v2247, %v3690
      %3692 = vmatprep.mubr.bf16.mxu0 0
      %3693 = vmatmul.mubr.bf16.gmra.mrb[0].mxu0 %v2112
      %v3694 = vpop.f32.mrb[0].mxu0
      %v3695 = vadd.f32 %v2243, %v3694
      %v3696 = vpop.f32.mrb[0].mxu0
      %v3697 = vadd.f32 %v2247, %v3696
      %v3698 = vpop.f32.mrb[0].mxu0
      %v3699 = vadd.f32 %v2243, %v3698
      %v3700 = vpop.f32.mrb[0].mxu0
      %v3701 = vadd.f32 %v2247, %v3700
      %3702 = vmatprep.mubr.bf16.mxu0 0
      %3703 = vmatmul.mubr.bf16.gmra.mrb[0].mxu0 %v2113
      %v3704 = vpop.f32.mrb[0].mxu0
      %v3705 = vadd.f32 %v2243, %v3704
      %v3706 = vpop.f32.mrb[0].mxu0
      %v3707 = vadd.f32 %v2247, %v3706
      %v3708 = vpop.f32.mrb[0].mxu0
      %v3709 = vadd.f32 %v2243, %v3708
      %v3710 = vpop.f32.mrb[0].mxu0
      %v3711 = vadd.f32 %v2247, %v3710
      %3712 = vmatprep.mubr.bf16.mxu0 0
      %3713 = vmatmul.mubr.bf16.gmra.mrb[0].mxu0 %v2114
      %v3714 = vpop.f32.mrb[0].mxu0
      %v3715 = vadd.f32 %v2243, %v3714
      %v3716 = vpop.f32.mrb[0].mxu0
      %v3717 = vadd.f32 %v2247, %v3716
      %v3718 = vpop.f32.mrb[0].mxu0
      %v3719 = vadd.f32 %v2243, %v3718
      %v3720 = vpop.f32.mrb[0].mxu0
      %v3721 = vadd.f32 %v2247, %v3720
      %3722 = vmatprep.mubr.bf16.mxu0 0
      %3723 = vmatmul.mubr.bf16.gmra.mrb[0].mxu0 %v2115
      %v3724 = vpop.f32.mrb[0].mxu0
      %v3725 = vadd.f32 %v2243, %v3724
      %v3726 = vpop.f32.mrb[0].mxu0
      %v3727 = vadd.f32 %v2247, %v3726
      %v3728 = vpop.f32.mrb[0].mxu0
      %v3729 = vadd.f32 %v2243, %v3728
      %v3730 = vpop.f32.mrb[0].mxu0
      %v3731 = vadd.f32 %v2247, %v3730
      %3732 = vmatprep.mubr.bf16.mxu0 0
      %3733 = vmatmul.mubr.bf16.gmra.mrb[0].mxu0 %v2116
      %v3734 = vpop.f32.mrb[0].mxu0
      %v3735 = vadd.f32 %v2243, %v3734
      %v3736 = vpop.f32.mrb[0].mxu0
      %v3737 = vadd.f32 %v2247, %v3736
      %v3738 = vpop.f32.mrb[0].mxu0
      %v3739 = vadd.f32 %v2243, %v3738
      %v3740 = vpop.f32.mrb[0].mxu0
      %v3741 = vadd.f32 %v2247, %v3740
      %3742 = vmatprep.mubr.bf16.mxu0 0
      %3743 = vmatmul.mubr.bf16.gmra.mrb[0].mxu0 %v2117
      %v3744 = vpop.f32.mrb[0].mxu0
      %v3745 = vadd.f32 %v2243, %v3744
      %v3746 = vpop.f32.mrb[0].mxu0
      %v3747 = vadd.f32 %v2247, %v3746
      %v3748 = vpop.f32.mrb[0].mxu0
      %v3749 = vadd.f32 %v2243, %v3748
      %v3750 = vpop.f32.mrb[0].mxu0
      %v3751 = vadd.f32 %v2247, %v3750
      %3752 = vmatprep.mubr.bf16.mxu0 0
      %3753 = vmatmul.mubr.bf16.gmra.mrb[0].mxu0 %v2118
      %v3754 = vpop.f32.mrb[0].mxu0
      %v3755 = vadd.f32 %v2243, %v3754
      %v3756 = vpop.f32.mrb[0].mxu0
      %v3757 = vadd.f32 %v2247, %v3756
      %v3758 = vpop.f32.mrb[0].mxu0
      %v3759 = vadd.f32 %v2243, %v3758
      %v3760 = vpop.f32.mrb[0].mxu0
      %v3761 = vadd.f32 %v2247, %v3760
      %3762 = vmatprep.mubr.bf16.mxu0 0
      %3763 = vmatmul.mubr.bf16.gmra.mrb[0].mxu0 %v2119
      %v3764 = vpop.f32.mrb[0].mxu0
      %v3765 = vadd.f32 %v2243, %v3764
      %v3766 = vpop.f32.mrb[0].mxu0
      %v3767 = vadd.f32 %v2247, %v3766
      %v3768 = vpop.f32.mrb[0].mxu0
      %v3769 = vadd.f32 %v2243, %v3768
      %v3770 = vpop.f32.mrb[0].mxu0
      %v3771 = vadd.f32 %v2247, %v3770
      %3772 = vmatprep.mubr.bf16.mxu0 0
      %3773 = vmatmul.mubr.bf16.gmra.mrb[0].mxu0 %v2120
      %v3774 = vpop.f32.mrb[0].mxu0
      %v3775 = vadd.f32 %v2243, %v3774
      %v3776 = vpop.f32.mrb[0].mxu0
      %v3777 = vadd.f32 %v2247, %v3776
      %v3778 = vpop.f32.mrb[0].mxu0
      %v3779 = vadd.f32 %v2243, %v3778
      %v3780 = vpop.f32.mrb[0].mxu0
      %v3781 = vadd.f32 %v2247, %v3780
      %3782 = vmatprep.mubr.bf16.mxu0 0
      %3783 = vmatmul.mubr.bf16.gmra.mrb[0].mxu0 %v2121
      %v3784 = vpop.f32.mrb[0].mxu0
      %v3785 = vadd.f32 %v2243, %v3784
      %v3786 = vpop.f32.mrb[0].mxu0
      %v3787 = vadd.f32 %v2247, %v3786
      %v3788 = vpop.f32.mrb[0].mxu0
      %v3789 = vadd.f32 %v2243, %v3788
      %v3790 = vpop.f32.mrb[0].mxu0
      %v3791 = vadd.f32 %v2247, %v3790
      %3792 = vmatprep.mubr.bf16.mxu0 0
      %3793 = vmatmul.mubr.bf16.gmra.mrb[0].mxu0 %v2122
      %v3794 = vpop.f32.mrb[0].mxu0
      %v3795 = vadd.f32 %v2243, %v3794
      %v3796 = vpop.f32.mrb[0].mxu0
      %v3797 = vadd.f32 %v2247, %v3796
      %v3798 = vpop.f32.mrb[0].mxu0
      %v3799 = vadd.f32 %v2243, %v3798
      %v3800 = vpop.f32.mrb[0].mxu0
      %v3801 = vadd.f32 %v2247, %v3800
      %3802 = vmatprep.mubr.bf16.mxu0 0
      %3803 = vmatmul.mubr.bf16.gmra.mrb[0].mxu0 %v2123
      %v3804 = vpop.f32.mrb[0].mxu0
      %v3805 = vadd.f32 %v2243, %v3804
      %v3806 = vpop.f32.mrb[0].mxu0
      %v3807 = vadd.f32 %v2247, %v3806
      %v3808 = vpop.f32.mrb[0].mxu0
      %v3809 = vadd.f32 %v2243, %v3808
      %v3810 = vpop.f32.mrb[0].mxu0
      %v3811 = vadd.f32 %v2247, %v3810
      %3812 = vmatprep.mubr.bf16.mxu0 0
      %3813 = vmatmul.mubr.bf16.gmra.mrb[0].mxu0 %v2124
      %v3814 = vpop.f32.mrb[0].mxu0
      %v3815 = vadd.f32 %v2243, %v3814
      %v3816 = vpop.f32.mrb[0].mxu0
      %v3817 = vadd.f32 %v2247, %v3816
      %v3818 = vpop.f32.mrb[0].mxu0
      %v3819 = vadd.f32 %v2243, %v3818
      %v3820 = vpop.f32.mrb[0].mxu0
      %v3821 = vadd.f32 %v2247, %v3820
      %3822 = vmatprep.mubr.bf16.mxu0 0
      %3823 = vmatmul.mubr.bf16.gmra.mrb[0].mxu0 %v2125
      %v3824 = vpop.f32.mrb[0].mxu0
      %v3825 = vadd.f32 %v2243, %v3824
      %v3826 = vpop.f32.mrb[0].mxu0
      %v3827 = vadd.f32 %v2247, %v3826
      %v3828 = vpop.f32.mrb[0].mxu0
      %v3829 = vadd.f32 %v2243, %v3828
      %v3830 = vpop.f32.mrb[0].mxu0
      %v3831 = vadd.f32 %v2247, %v3830
      %3832 = vmatprep.mubr.bf16.mxu0 0
      %3833 = vmatmul.mubr.bf16.gmra.mrb[0].mxu0 %v2126
      %v3834 = vpop.f32.mrb[0].mxu0
      %v3835 = vadd.f32 %v2243, %v3834
      %v3836 = vpop.f32.mrb[0].mxu0
      %v3837 = vadd.f32 %v2247, %v3836
      %v3838 = vpop.f32.mrb[0].mxu0
      %v3839 = vadd.f32 %v2243, %v3838
      %v3840 = vpop.f32.mrb[0].mxu0
      %v3841 = vadd.f32 %v2247, %v3840
      %3842 = vmatprep.mubr.bf16.mxu0 0
      %3843 = vmatmul.mubr.bf16.gmra.mrb[0].mxu0 %v2127
      %v3844 = vpop.f32.mrb[0].mxu0
      %v3845 = vadd.f32 %v2243, %v3844
      %v3846 = vpop.f32.mrb[0].mxu0
      %v3847 = vadd.f32 %v2247, %v3846
      %v3848 = vpop.f32.mrb[0].mxu0
      %v3849 = vadd.f32 %v2243, %v3848
      %v3850 = vpop.f32.mrb[0].mxu0
      %v3851 = vadd.f32 %v2247, %v3850
      %3852 = vmatprep.mubr.bf16.mxu0 0
      %3853 = vmatmul.mubr.bf16.gmra.mrb[0].mxu0 %v2128
      %v3854 = vpop.f32.mrb[0].mxu0
      %v3855 = vadd.f32 %v2243, %v3854
      %v3856 = vpop.f32.mrb[0].mxu0
      %v3857 = vadd.f32 %v2247, %v3856
      %v3858 = vpop.f32.mrb[0].mxu0
      %v3859 = vadd.f32 %v2243, %v3858
      %v3860 = vpop.f32.mrb[0].mxu0
      %v3861 = vadd.f32 %v2247, %v3860
      %3862 = vmatprep.mubr.bf16.mxu0 0
      %3863 = vmatmul.mubr.bf16.gmra.mrb[0].mxu0 %v2129
      %v3864 = vpop.f32.mrb[0].mxu0
      %v3865 = vadd.f32 %v2243, %v3864
      %v3866 = vpop.f32.mrb[0].mxu0
      %v3867 = vadd.f32 %v2247, %v3866
      %v3868 = vpop.f32.mrb[0].mxu0
      %v3869 = vadd.f32 %v2243, %v3868
      %v3870 = vpop.f32.mrb[0].mxu0
      %v3871 = vadd.f32 %v2247, %v3870
      %3872 = vmatprep.mubr.bf16.mxu0 0
      %3873 = vmatmul.mubr.bf16.gmra.mrb[0].mxu0 %v2130
      %v3874 = vpop.f32.mrb[0].mxu0
      %v3875 = vadd.f32 %v2243, %v3874
      %v3876 = vpop.f32.mrb[0].mxu0
      %v3877 = vadd.f32 %v2247, %v3876
      %v3878 = vpop.f32.mrb[0].mxu0
      %v3879 = vadd.f32 %v2243, %v3878
      %v3880 = vpop.f32.mrb[0].mxu0
      %v3881 = vadd.f32 %v2247, %v3880
      %3882 = vmatprep.mubr.bf16.mxu0 0
      %3883 = vmatmul.mubr.bf16.gmra.mrb[0].mxu0 %v2131
      %v3884 = vpop.f32.mrb[0].mxu0
      %v3885 = vadd.f32 %v2243, %v3884
      %v3886 = vpop.f32.mrb[0].mxu0
      %v3887 = vadd.f32 %v2247, %v3886
      %v3888 = vpop.f32.mrb[0].mxu0
      %v3889 = vadd.f32 %v2243, %v3888
      %v3890 = vpop.f32.mrb[0].mxu0
      %v3891 = vadd.f32 %v2247, %v3890
      %3892 = vmatprep.mubr.bf16.mxu0 0
      %3893 = vmatmul.mubr.bf16.gmra.mrb[0].mxu0 %v2132
      %v3894 = vpop.f32.mrb[0].mxu0
      %v3895 = vadd.f32 %v2243, %v3894
      %v3896 = vpop.f32.mrb[0].mxu0
      %v3897 = vadd.f32 %v2247, %v3896
      %v3898 = vpop.f32.mrb[0].mxu0
      %v3899 = vadd.f32 %v2243, %v3898
      %v3900 = vpop.f32.mrb[0].mxu0
      %v3901 = vadd.f32 %v2247, %v3900
      %3902 = vmatprep.mubr.bf16.mxu0 0
      %3903 = vmatmul.mubr.bf16.gmra.mrb[0].mxu0 %v2133
      %v3904 = vpop.f32.mrb[0].mxu0
      %v3905 = vadd.f32 %v2243, %v3904
      %v3906 = vpop.f32.mrb[0].mxu0
      %v3907 = vadd.f32 %v2247, %v3906
      %v3908 = vpop.f32.mrb[0].mxu0
      %v3909 = vadd.f32 %v2243, %v3908
      %v3910 = vpop.f32.mrb[0].mxu0
      %v3911 = vadd.f32 %v2247, %v3910
      %3912 = vmatprep.mubr.bf16.mxu0 0
      %3913 = vmatmul.mubr.bf16.gmra.mrb[0].mxu0 %v2134
      %v3914 = vpop.f32.mrb[0].mxu0
      %v3915 = vadd.f32 %v2243, %v3914
      %v3916 = vpop.f32.mrb[0].mxu0
      %v3917 = vadd.f32 %v2247, %v3916
      %v3918 = vpop.f32.mrb[0].mxu0
      %v3919 = vadd.f32 %v2243, %v3918
      %v3920 = vpop.f32.mrb[0].mxu0
      %v3921 = vadd.f32 %v2247, %v3920
      %3922 = vmatprep.mubr.bf16.mxu0 0
      %3923 = vmatmul.mubr.bf16.gmra.mrb[0].mxu0 %v2135
      %v3924 = vpop.f32.mrb[0].mxu0
      %v3925 = vadd.f32 %v2243, %v3924
      %v3926 = vpop.f32.mrb[0].mxu0
      %v3927 = vadd.f32 %v2247, %v3926
      %v3928 = vpop.f32.mrb[0].mxu0
      %v3929 = vadd.f32 %v2243, %v3928
      %v3930 = vpop.f32.mrb[0].mxu0
      %v3931 = vadd.f32 %v2247, %v3930
      %3932 = vmatprep.mubr.bf16.mxu0 0
      %3933 = vmatmul.mubr.bf16.gmra.mrb[0].mxu0 %v2136
      %v3934 = vpop.f32.mrb[0].mxu0
      %v3935 = vadd.f32 %v2243, %v3934
      %v3936 = vpop.f32.mrb[0].mxu0
      %v3937 = vadd.f32 %v2247, %v3936
      %v3938 = vpop.f32.mrb[0].mxu0
      %v3939 = vadd.f32 %v2243, %v3938
      %v3940 = vpop.f32.mrb[0].mxu0
      %v3941 = vadd.f32 %v2247, %v3940
      %3942 = vmatprep.mubr.bf16.mxu0 0
      %3943 = vmatmul.mubr.bf16.gmra.mrb[0].mxu0 %v2137
      %v3944 = vpop.f32.mrb[0].mxu0
      %v3945 = vadd.f32 %v2243, %v3944
      %v3946 = vpop.f32.mrb[0].mxu0
      %v3947 = vadd.f32 %v2247, %v3946
      %v3948 = vpop.f32.mrb[0].mxu0
      %v3949 = vadd.f32 %v2243, %v3948
      %v3950 = vpop.f32.mrb[0].mxu0
      %v3951 = vadd.f32 %v2247, %v3950
      %3952 = vmatprep.mubr.bf16.mxu0 0
      %3953 = vmatmul.mubr.bf16.gmra.mrb[0].mxu0 %v2138
      %v3954 = vpop.f32.mrb[0].mxu0
      %v3955 = vadd.f32 %v2243, %v3954
      %v3956 = vpop.f32.mrb[0].mxu0
      %v3957 = vadd.f32 %v2247, %v3956
      %v3958 = vpop.f32.mrb[0].mxu0
      %v3959 = vadd.f32 %v2243, %v3958
      %v3960 = vpop.f32.mrb[0].mxu0
      %v3961 = vadd.f32 %v2247, %v3960
      %3962 = vmatprep.mubr.bf16.mxu0 0
      %3963 = vmatmul.mubr.bf16.gmra.mrb[0].mxu0 %v2139
      %v3964 = vpop.f32.mrb[0].mxu0
      %v3965 = vadd.f32 %v2243, %v3964
      %v3966 = vpop.f32.mrb[0].mxu0
      %v3967 = vadd.f32 %v2247, %v3966
      %v3968 = vpop.f32.mrb[0].mxu0
      %v3969 = vadd.f32 %v2243, %v3968
      %v3970 = vpop.f32.mrb[0].mxu0
      %v3971 = vadd.f32 %v2247, %v3970
      %3972 = vmatprep.mubr.bf16.mxu0 0
      %3973 = vmatmul.mubr.bf16.gmra.mrb[0].mxu0 %v2140
      %v3974 = vpop.f32.mrb[0].mxu0
      %v3975 = vadd.f32 %v2243, %v3974
      %v3976 = vpop.f32.mrb[0].mxu0
      %v3977 = vadd.f32 %v2247, %v3976
      %v3978 = vpop.f32.mrb[0].mxu0
      %v3979 = vadd.f32 %v2243, %v3978
      %v3980 = vpop.f32.mrb[0].mxu0
      %v3981 = vadd.f32 %v2247, %v3980
      %3982 = vmatprep.mubr.bf16.mxu0 0
      %3983 = vmatmul.mubr.bf16.gmra.mrb[0].mxu0 %v2141
      %v3984 = vpop.f32.mrb[0].mxu0
      %v3985 = vadd.f32 %v2243, %v3984
      %v3986 = vpop.f32.mrb[0].mxu0
      %v3987 = vadd.f32 %v2247, %v3986
      %v3988 = vpop.f32.mrb[0].mxu0
      %v3989 = vadd.f32 %v2243, %v3988
      %v3990 = vpop.f32.mrb[0].mxu0
      %v3991 = vadd.f32 %v2247, %v3990
      %3992 = vmatprep.mubr.bf16.mxu0 0
      %3993 = vmatmul.mubr.bf16.gmra.mrb[0].mxu0 %v2142
      %v3994 = vpop.f32.mrb[0].mxu0
      %v3995 = vadd.f32 %v2243, %v3994
      %v3996 = vpop.f32.mrb[0].mxu0
      %v3997 = vadd.f32 %v2247, %v3996
      %v3998 = vpop.f32.mrb[0].mxu0
      %v3999 = vadd.f32 %v2243, %v3998
      %v4000 = vpop.f32.mrb[0].mxu0
      %v4001 = vadd.f32 %v2247, %v4000
      %4002 = vmatprep.mubr.bf16.mxu0 0
      %4003 = vmatmul.mubr.bf16.gmra.mrb[0].mxu0 %v2143
      %v4004 = vpop.f32.mrb[0].mxu0
      %v4005 = vadd.f32 %v2243, %v4004
      %v4006 = vpop.f32.mrb[0].mxu0
      %v4007 = vadd.f32 %v2247, %v4006
      %v4008 = vpop.f32.mrb[0].mxu0
      %v4009 = vadd.f32 %v2243, %v4008
      %v4010 = vpop.f32.mrb[0].mxu0
      %v4011 = vadd.f32 %v2247, %v4010
      %4012 = vmatprep.mubr.bf16.mxu0 0
      %4013 = vmatmul.mubr.bf16.gmra.mrb[0].mxu0 %v2144
      %v4014 = vpop.f32.mrb[0].mxu0
      %v4015 = vadd.f32 %v2243, %v4014
      %v4016 = vpop.f32.mrb[0].mxu0
      %v4017 = vadd.f32 %v2247, %v4016
      %v4018 = vpop.f32.mrb[0].mxu0
      %v4019 = vadd.f32 %v2243, %v4018
      %v4020 = vpop.f32.mrb[0].mxu0
      %v4021 = vadd.f32 %v2247, %v4020
      %4022 = vmatprep.mubr.bf16.mxu0 0
      %4023 = vmatmul.mubr.bf16.gmra.mrb[0].mxu0 %v2145
      %v4024 = vpop.f32.mrb[0].mxu0
      %v4025 = vadd.f32 %v2243, %v4024
      %v4026 = vpop.f32.mrb[0].mxu0
      %v4027 = vadd.f32 %v2247, %v4026
      %v4028 = vpop.f32.mrb[0].mxu0
      %v4029 = vadd.f32 %v2243, %v4028
      %v4030 = vpop.f32.mrb[0].mxu0
      %v4031 = vadd.f32 %v2247, %v4030
      %4032 = vmatprep.mubr.bf16.mxu0 0
      %4033 = vmatmul.mubr.bf16.gmra.mrb[0].mxu0 %v2146
      %v4034 = vpop.f32.mrb[0].mxu0
      %v4035 = vadd.f32 %v2243, %v4034
      %v4036 = vpop.f32.mrb[0].mxu0
      %v4037 = vadd.f32 %v2247, %v4036
      %v4038 = vpop.f32.mrb[0].mxu0
      %v4039 = vadd.f32 %v2243, %v4038
      %v4040 = vpop.f32.mrb[0].mxu0
      %v4041 = vadd.f32 %v2247, %v4040
      %4042 = vmatprep.mubr.bf16.mxu0 0
      %4043 = vmatmul.mubr.bf16.gmra.mrb[0].mxu0 %v2147
      %v4044 = vpop.f32.mrb[0].mxu0
      %v4045 = vadd.f32 %v2243, %v4044
      %v4046 = vpop.f32.mrb[0].mxu0
      %v4047 = vadd.f32 %v2247, %v4046
      %v4048 = vpop.f32.mrb[0].mxu0
      %v4049 = vadd.f32 %v2243, %v4048
      %v4050 = vpop.f32.mrb[0].mxu0
      %v4051 = vadd.f32 %v2247, %v4050
      %4052 = vmatprep.mubr.bf16.mxu0 0
      %4053 = vmatmul.mubr.bf16.gmra.mrb[0].mxu0 %v2148
      %v4054 = vpop.f32.mrb[0].mxu0
      %v4055 = vadd.f32 %v2243, %v4054
      %v4056 = vpop.f32.mrb[0].mxu0
      %v4057 = vadd.f32 %v2247, %v4056
      %v4058 = vpop.f32.mrb[0].mxu0
      %v4059 = vadd.f32 %v2243, %v4058
      %v4060 = vpop.f32.mrb[0].mxu0
      %v4061 = vadd.f32 %v2247, %v4060
      %4062 = vmatprep.mubr.bf16.mxu0 0
      %4063 = vmatmul.mubr.bf16.gmra.mrb[0].mxu0 %v2149
      %v4064 = vpop.f32.mrb[0].mxu0
      %v4065 = vadd.f32 %v2243, %v4064
      %v4066 = vpop.f32.mrb[0].mxu0
      %v4067 = vadd.f32 %v2247, %v4066
      %v4068 = vpop.f32.mrb[0].mxu0
      %v4069 = vadd.f32 %v2243, %v4068
      %v4070 = vpop.f32.mrb[0].mxu0
      %v4071 = vadd.f32 %v2247, %v4070
      %4072 = vmatprep.mubr.bf16.mxu0 0
      %4073 = vmatmul.mubr.bf16.gmra.mrb[0].mxu0 %v2150
      %v4074 = vpop.f32.mrb[0].mxu0
      %v4075 = vadd.f32 %v2243, %v4074
      %v4076 = vpop.f32.mrb[0].mxu0
      %v4077 = vadd.f32 %v2247, %v4076
      %v4078 = vpop.f32.mrb[0].mxu0
      %v4079 = vadd.f32 %v2243, %v4078
      %v4080 = vpop.f32.mrb[0].mxu0
      %v4081 = vadd.f32 %v2247, %v4080
      %4082 = vmatprep.mubr.bf16.mxu0 0
      %4083 = vmatmul.mubr.bf16.gmra.mrb[0].mxu0 %v2151
      %v4084 = vpop.f32.mrb[0].mxu0
      %v4085 = vadd.f32 %v2243, %v4084
      %v4086 = vpop.f32.mrb[0].mxu0
      %v4087 = vadd.f32 %v2247, %v4086
      %v4088 = vpop.f32.mrb[0].mxu0
      %v4089 = vadd.f32 %v2243, %v4088
      %v4090 = vpop.f32.mrb[0].mxu0
      %v4091 = vadd.f32 %v2247, %v4090
      %4092 = vmatprep.mubr.bf16.mxu0 0
      %4093 = vmatmul.mubr.bf16.gmra.mrb[0].mxu0 %v2152
      %v4094 = vpop.f32.mrb[0].mxu0
      %v4095 = vadd.f32 %v2243, %v4094
      %v4096 = vpop.f32.mrb[0].mxu0
      %v4097 = vadd.f32 %v2247, %v4096
      %v4098 = vpop.f32.mrb[0].mxu0
      %v4099 = vadd.f32 %v2243, %v4098
      %v4100 = vpop.f32.mrb[0].mxu0
      %v4101 = vadd.f32 %v2247, %v4100
      %4102 = vmatprep.mubr.bf16.mxu0 0
      %4103 = vmatmul.mubr.bf16.gmra.mrb[0].mxu0 %v2153
      %v4104 = vpop.f32.mrb[0].mxu0
      %v4105 = vadd.f32 %v2243, %v4104
      %v4106 = vpop.f32.mrb[0].mxu0
      %v4107 = vadd.f32 %v2247, %v4106
      %v4108 = vpop.f32.mrb[0].mxu0
      %v4109 = vadd.f32 %v2243, %v4108
      %v4110 = vpop.f32.mrb[0].mxu0
      %v4111 = vadd.f32 %v2247, %v4110
      %4112 = vmatprep.mubr.bf16.mxu0 0
      %4113 = vmatmul.mubr.bf16.gmra.mrb[0].mxu0 %v2154
      %v4114 = vpop.f32.mrb[0].mxu0
      %v4115 = vadd.f32 %v2243, %v4114
      %v4116 = vpop.f32.mrb[0].mxu0
      %v4117 = vadd.f32 %v2247, %v4116
      %v4118 = vpop.f32.mrb[0].mxu0
      %v4119 = vadd.f32 %v2243, %v4118
      %v4120 = vpop.f32.mrb[0].mxu0
      %v4121 = vadd.f32 %v2247, %v4120
      %4122 = vmatprep.mubr.bf16.mxu0 0
      %4123 = vmatmul.mubr.bf16.gmra.mrb[0].mxu0 %v2155
      %v4124 = vpop.f32.mrb[0].mxu0
      %v4125 = vadd.f32 %v2243, %v4124
      %v4126 = vpop.f32.mrb[0].mxu0
      %v4127 = vadd.f32 %v2247, %v4126
      %v4128 = vpop.f32.mrb[0].mxu0
      %v4129 = vadd.f32 %v2243, %v4128
      %v4130 = vpop.f32.mrb[0].mxu0
      %v4131 = vadd.f32 %v2247, %v4130
      %4132 = vmatprep.mubr.bf16.mxu0 0
      %4133 = vmatmul.mubr.bf16.gmra.mrb[0].mxu0 %v2156
      %v4134 = vpop.f32.mrb[0].mxu0
      %v4135 = vadd.f32 %v2243, %v4134
      %v4136 = vpop.f32.mrb[0].mxu0
      %v4137 = vadd.f32 %v2247, %v4136
      %v4138 = vpop.f32.mrb[0].mxu0
      %v4139 = vadd.f32 %v2243, %v4138
      %v4140 = vpop.f32.mrb[0].mxu0
      %v4141 = vadd.f32 %v2247, %v4140
      %4142 = vmatprep.mubr.bf16.mxu0 0
      %4143 = vmatmul.mubr.bf16.gmra.mrb[0].mxu0 %v2157
      %v4144 = vpop.f32.mrb[0].mxu0
      %v4145 = vadd.f32 %v2243, %v4144
      %v4146 = vpop.f32.mrb[0].mxu0
      %v4147 = vadd.f32 %v2247, %v4146
      %v4148 = vpop.f32.mrb[0].mxu0
      %v4149 = vadd.f32 %v2243, %v4148
      %v4150 = vpop.f32.mrb[0].mxu0
      %v4151 = vadd.f32 %v2247, %v4150
      %4152 = vdwg.mxu0
      %4153 = vmatprep.subr.bf16.mxu0 %v2463
      %4154 = vmatpush1.bf16.msra.mxu0 %v2462
      %4155 = vmatprep.subr.bf16.mxu0 %v2471
      %4156 = vmatpush1.bf16.msra.mxu0 %v2470
      %4157 = vmatprep.subr.bf16.mxu0 %v2479
      %4158 = vmatpush1.bf16.msra.mxu0 %v2478
      %4159 = vmatprep.subr.bf16.mxu0 %v2487
      %4160 = vmatpush1.bf16.msra.mxu0 %v2486
      %4161 = vmatprep.subr.bf16.mxu0 %v2495
      %4162 = vmatpush1.bf16.msra.mxu0 %v2494
      %4163 = vmatprep.subr.bf16.mxu0 %v2503
      %4164 = vmatpush1.bf16.msra.mxu0 %v2502
      %4165 = vmatprep.subr.bf16.mxu0 %v2511
      %4166 = vmatpush1.bf16.msra.mxu0 %v2510
      %4167 = vmatprep.subr.bf16.mxu0 %v2519
      %4168 = vmatpush1.bf16.msra.mxu0 %v2518
      %4169 = vmatprep.subr.bf16.mxu0 0
      %4170 = vmatpush1.bf16.msra.mxu0 0
      %4171 = vmatprep.subr.bf16.mxu0 0
      %4172 = vmatpush1.bf16.msra.mxu0 0
      %4173 = vmatprep.subr.bf16.mxu0 0
      %4174 = vmatpush1.bf16.msra.mxu0 0
      %4175 = vmatprep.subr.bf16.mxu0 0
      %4176 = vmatpush1.bf16.msra.mxu0 0
      %4177 = vmatprep.subr.bf16.mxu0 0
      %4178 = vmatpush1.bf16.msra.mxu0 0
      %4179 = vmatprep.subr.bf16.mxu0 0
      %4180 = vmatpush1.bf16.msra.mxu0 0
      %4181 = vmatprep.subr.bf16.mxu0 0
      %4182 = vmatpush1.bf16.msra.mxu0 0
      %4183 = vmatprep.subr.bf16.mxu0 0
      %4184 = vmatpush1.bf16.msra.mxu0 0
      %4185 = vmatprep.mubr.bf16.mxu0 0
      %4186 = vmatmul.mubr.bf16.gmra.mrb[0].mxu0 %v2109
      %v4187 = vpop.f32.mrb[0].mxu0
      %v4188 = vadd.f32 %v2251, %v4187
      %v4189 = vpop.f32.mrb[0].mxu0
      %v4190 = vadd.f32 %v2255, %v4189
      %v4191 = vpop.f32.mrb[0].mxu0
      %v4192 = vadd.f32 %v2251, %v4191
      %v4193 = vpop.f32.mrb[0].mxu0
      %v4194 = vadd.f32 %v2255, %v4193
      %4195 = vmatprep.mubr.bf16.mxu0 0
      %4196 = vmatmul.mubr.bf16.gmra.mrb[0].mxu0 %v2110
      %v4197 = vpop.f32.mrb[0].mxu0
      %v4198 = vadd.f32 %v2251, %v4197
      %v4199 = vpop.f32.mrb[0].mxu0
      %v4200 = vadd.f32 %v2255, %v4199
      %v4201 = vpop.f32.mrb[0].mxu0
      %v4202 = vadd.f32 %v2251, %v4201
      %v4203 = vpop.f32.mrb[0].mxu0
      %v4204 = vadd.f32 %v2255, %v4203
      %4205 = vmatprep.mubr.bf16.mxu0 0
      %4206 = vmatmul.mubr.bf16.gmra.mrb[0].mxu0 %v2111
      %v4207 = vpop.f32.mrb[0].mxu0
      %v4208 = vadd.f32 %v2251, %v4207
      %v4209 = vpop.f32.mrb[0].mxu0
      %v4210 = vadd.f32 %v2255, %v4209
      %v4211 = vpop.f32.mrb[0].mxu0
      %v4212 = vadd.f32 %v2251, %v4211
      %v4213 = vpop.f32.mrb[0].mxu0
      %v4214 = vadd.f32 %v2255, %v4213
      %4215 = vmatprep.mubr.bf16.mxu0 0
      %4216 = vmatmul.mubr.bf16.gmra.mrb[0].mxu0 %v2112
      %v4217 = vpop.f32.mrb[0].mxu0
      %v4218 = vadd.f32 %v2251, %v4217
      %v4219 = vpop.f32.mrb[0].mxu0
      %v4220 = vadd.f32 %v2255, %v4219
      %v4221 = vpop.f32.mrb[0].mxu0
      %v4222 = vadd.f32 %v2251, %v4221
      %v4223 = vpop.f32.mrb[0].mxu0
      %v4224 = vadd.f32 %v2255, %v4223
      %4225 = vmatprep.mubr.bf16.mxu0 0
      %4226 = vmatmul.mubr.bf16.gmra.mrb[0].mxu0 %v2113
      %v4227 = vpop.f32.mrb[0].mxu0
      %v4228 = vadd.f32 %v2251, %v4227
      %v4229 = vpop.f32.mrb[0].mxu0
      %v4230 = vadd.f32 %v2255, %v4229
      %v4231 = vpop.f32.mrb[0].mxu0
      %v4232 = vadd.f32 %v2251, %v4231
      %v4233 = vpop.f32.mrb[0].mxu0
      %v4234 = vadd.f32 %v2255, %v4233
      %4235 = vmatprep.mubr.bf16.mxu0 0
      %4236 = vmatmul.mubr.bf16.gmra.mrb[0].mxu0 %v2114
      %v4237 = vpop.f32.mrb[0].mxu0
      %v4238 = vadd.f32 %v2251, %v4237
      %v4239 = vpop.f32.mrb[0].mxu0
      %v4240 = vadd.f32 %v2255, %v4239
      %v4241 = vpop.f32.mrb[0].mxu0
      %v4242 = vadd.f32 %v2251, %v4241
      %v4243 = vpop.f32.mrb[0].mxu0
      %v4244 = vadd.f32 %v2255, %v4243
      %4245 = vmatprep.mubr.bf16.mxu0 0
      %4246 = vmatmul.mubr.bf16.gmra.mrb[0].mxu0 %v2115
      %v4247 = vpop.f32.mrb[0].mxu0
      %v4248 = vadd.f32 %v2251, %v4247
      %v4249 = vpop.f32.mrb[0].mxu0
      %v4250 = vadd.f32 %v2255, %v4249
      %v4251 = vpop.f32.mrb[0].mxu0
      %v4252 = vadd.f32 %v2251, %v4251
      %v4253 = vpop.f32.mrb[0].mxu0
      %v4254 = vadd.f32 %v2255, %v4253
      %4255 = vmatprep.mubr.bf16.mxu0 0
      %4256 = vmatmul.mubr.bf16.gmra.mrb[0].mxu0 %v2116
      %v4257 = vpop.f32.mrb[0].mxu0
      %v4258 = vadd.f32 %v2251, %v4257
      %v4259 = vpop.f32.mrb[0].mxu0
      %v4260 = vadd.f32 %v2255, %v4259
      %v4261 = vpop.f32.mrb[0].mxu0
      %v4262 = vadd.f32 %v2251, %v4261
      %v4263 = vpop.f32.mrb[0].mxu0
      %v4264 = vadd.f32 %v2255, %v4263
      %4265 = vmatprep.mubr.bf16.mxu0 0
      %4266 = vmatmul.mubr.bf16.gmra.mrb[0].mxu0 %v2117
      %v4267 = vpop.f32.mrb[0].mxu0
      %v4268 = vadd.f32 %v2251, %v4267
      %v4269 = vpop.f32.mrb[0].mxu0
      %v4270 = vadd.f32 %v2255, %v4269
      %v4271 = vpop.f32.mrb[0].mxu0
      %v4272 = vadd.f32 %v2251, %v4271
      %v4273 = vpop.f32.mrb[0].mxu0
      %v4274 = vadd.f32 %v2255, %v4273
      %4275 = vmatprep.mubr.bf16.mxu0 0
      %4276 = vmatmul.mubr.bf16.gmra.mrb[0].mxu0 %v2118
      %v4277 = vpop.f32.mrb[0].mxu0
      %v4278 = vadd.f32 %v2251, %v4277
      %v4279 = vpop.f32.mrb[0].mxu0
      %v4280 = vadd.f32 %v2255, %v4279
      %v4281 = vpop.f32.mrb[0].mxu0
      %v4282 = vadd.f32 %v2251, %v4281
      %v4283 = vpop.f32.mrb[0].mxu0
      %v4284 = vadd.f32 %v2255, %v4283
      %4285 = vmatprep.mubr.bf16.mxu0 0
      %4286 = vmatmul.mubr.bf16.gmra.mrb[0].mxu0 %v2119
      %v4287 = vpop.f32.mrb[0].mxu0
      %v4288 = vadd.f32 %v2251, %v4287
      %v4289 = vpop.f32.mrb[0].mxu0
      %v4290 = vadd.f32 %v2255, %v4289
      %v4291 = vpop.f32.mrb[0].mxu0
      %v4292 = vadd.f32 %v2251, %v4291
      %v4293 = vpop.f32.mrb[0].mxu0
      %v4294 = vadd.f32 %v2255, %v4293
      %4295 = vmatprep.mubr.bf16.mxu0 0
      %4296 = vmatmul.mubr.bf16.gmra.mrb[0].mxu0 %v2120
      %v4297 = vpop.f32.mrb[0].mxu0
      %v4298 = vadd.f32 %v2251, %v4297
      %v4299 = vpop.f32.mrb[0].mxu0
      %v4300 = vadd.f32 %v2255, %v4299
      %v4301 = vpop.f32.mrb[0].mxu0
      %v4302 = vadd.f32 %v2251, %v4301
      %v4303 = vpop.f32.mrb[0].mxu0
      %v4304 = vadd.f32 %v2255, %v4303
      %4305 = vmatprep.mubr.bf16.mxu0 0
      %4306 = vmatmul.mubr.bf16.gmra.mrb[0].mxu0 %v2121
      %v4307 = vpop.f32.mrb[0].mxu0
      %v4308 = vadd.f32 %v2251, %v4307
      %v4309 = vpop.f32.mrb[0].mxu0
      %v4310 = vadd.f32 %v2255, %v4309
      %v4311 = vpop.f32.mrb[0].mxu0
      %v4312 = vadd.f32 %v2251, %v4311
      %v4313 = vpop.f32.mrb[0].mxu0
      %v4314 = vadd.f32 %v2255, %v4313
      %4315 = vmatprep.mubr.bf16.mxu0 0
      %4316 = vmatmul.mubr.bf16.gmra.mrb[0].mxu0 %v2122
      %v4317 = vpop.f32.mrb[0].mxu0
      %v4318 = vadd.f32 %v2251, %v4317
      %v4319 = vpop.f32.mrb[0].mxu0
      %v4320 = vadd.f32 %v2255, %v4319
      %v4321 = vpop.f32.mrb[0].mxu0
      %v4322 = vadd.f32 %v2251, %v4321
      %v4323 = vpop.f32.mrb[0].mxu0
      %v4324 = vadd.f32 %v2255, %v4323
      %4325 = vmatprep.mubr.bf16.mxu0 0
      %4326 = vmatmul.mubr.bf16.gmra.mrb[0].mxu0 %v2123
      %v4327 = vpop.f32.mrb[0].mxu0
      %v4328 = vadd.f32 %v2251, %v4327
      %v4329 = vpop.f32.mrb[0].mxu0
      %v4330 = vadd.f32 %v2255, %v4329
      %v4331 = vpop.f32.mrb[0].mxu0
      %v4332 = vadd.f32 %v2251, %v4331
      %v4333 = vpop.f32.mrb[0].mxu0
      %v4334 = vadd.f32 %v2255, %v4333
      %4335 = vmatprep.mubr.bf16.mxu0 0
      %4336 = vmatmul.mubr.bf16.gmra.mrb[0].mxu0 %v2124
      %v4337 = vpop.f32.mrb[0].mxu0
      %v4338 = vadd.f32 %v2251, %v4337
      %v4339 = vpop.f32.mrb[0].mxu0
      %v4340 = vadd.f32 %v2255, %v4339
      %v4341 = vpop.f32.mrb[0].mxu0
      %v4342 = vadd.f32 %v2251, %v4341
      %v4343 = vpop.f32.mrb[0].mxu0
      %v4344 = vadd.f32 %v2255, %v4343
      %4345 = vmatprep.mubr.bf16.mxu0 0
      %4346 = vmatmul.mubr.bf16.gmra.mrb[0].mxu0 %v2125
      %v4347 = vpop.f32.mrb[0].mxu0
      %v4348 = vadd.f32 %v2251, %v4347
      %v4349 = vpop.f32.mrb[0].mxu0
      %v4350 = vadd.f32 %v2255, %v4349
      %v4351 = vpop.f32.mrb[0].mxu0
      %v4352 = vadd.f32 %v2251, %v4351
      %v4353 = vpop.f32.mrb[0].mxu0
      %v4354 = vadd.f32 %v2255, %v4353
      %4355 = vmatprep.mubr.bf16.mxu0 0
      %4356 = vmatmul.mubr.bf16.gmra.mrb[0].mxu0 %v2126
      %v4357 = vpop.f32.mrb[0].mxu0
      %v4358 = vadd.f32 %v2251, %v4357
      %v4359 = vpop.f32.mrb[0].mxu0
      %v4360 = vadd.f32 %v2255, %v4359
      %v4361 = vpop.f32.mrb[0].mxu0
      %v4362 = vadd.f32 %v2251, %v4361
      %v4363 = vpop.f32.mrb[0].mxu0
      %v4364 = vadd.f32 %v2255, %v4363
      %4365 = vmatprep.mubr.bf16.mxu0 0
      %4366 = vmatmul.mubr.bf16.gmra.mrb[0].mxu0 %v2127
      %v4367 = vpop.f32.mrb[0].mxu0
      %v4368 = vadd.f32 %v2251, %v4367
      %v4369 = vpop.f32.mrb[0].mxu0
      %v4370 = vadd.f32 %v2255, %v4369
      %v4371 = vpop.f32.mrb[0].mxu0
      %v4372 = vadd.f32 %v2251, %v4371
      %v4373 = vpop.f32.mrb[0].mxu0
      %v4374 = vadd.f32 %v2255, %v4373
      %4375 = vmatprep.mubr.bf16.mxu0 0
      %4376 = vmatmul.mubr.bf16.gmra.mrb[0].mxu0 %v2128
      %v4377 = vpop.f32.mrb[0].mxu0
      %v4378 = vadd.f32 %v2251, %v4377
      %v4379 = vpop.f32.mrb[0].mxu0
      %v4380 = vadd.f32 %v2255, %v4379
      %v4381 = vpop.f32.mrb[0].mxu0
      %v4382 = vadd.f32 %v2251, %v4381
      %v4383 = vpop.f32.mrb[0].mxu0
      %v4384 = vadd.f32 %v2255, %v4383
      %4385 = vmatprep.mubr.bf16.mxu0 0
      %4386 = vmatmul.mubr.bf16.gmra.mrb[0].mxu0 %v2129
      %v4387 = vpop.f32.mrb[0].mxu0
      %v4388 = vadd.f32 %v2251, %v4387
      %v4389 = vpop.f32.mrb[0].mxu0
      %v4390 = vadd.f32 %v2255, %v4389
      %v4391 = vpop.f32.mrb[0].mxu0
      %v4392 = vadd.f32 %v2251, %v4391
      %v4393 = vpop.f32.mrb[0].mxu0
      %v4394 = vadd.f32 %v2255, %v4393
      %4395 = vmatprep.mubr.bf16.mxu0 0
      %4396 = vmatmul.mubr.bf16.gmra.mrb[0].mxu0 %v2130
      %v4397 = vpop.f32.mrb[0].mxu0
      %v4398 = vadd.f32 %v2251, %v4397
      %v4399 = vpop.f32.mrb[0].mxu0
      %v4400 = vadd.f32 %v2255, %v4399
      %v4401 = vpop.f32.mrb[0].mxu0
      %v4402 = vadd.f32 %v2251, %v4401
      %v4403 = vpop.f32.mrb[0].mxu0
      %v4404 = vadd.f32 %v2255, %v4403
      %4405 = vmatprep.mubr.bf16.mxu0 0
      %4406 = vmatmul.mubr.bf16.gmra.mrb[0].mxu0 %v2131
      %v4407 = vpop.f32.mrb[0].mxu0
      %v4408 = vadd.f32 %v2251, %v4407
      %v4409 = vpop.f32.mrb[0].mxu0
      %v4410 = vadd.f32 %v2255, %v4409
      %v4411 = vpop.f32.mrb[0].mxu0
      %v4412 = vadd.f32 %v2251, %v4411
      %v4413 = vpop.f32.mrb[0].mxu0
      %v4414 = vadd.f32 %v2255, %v4413
      %4415 = vmatprep.mubr.bf16.mxu0 0
      %4416 = vmatmul.mubr.bf16.gmra.mrb[0].mxu0 %v2132
      %v4417 = vpop.f32.mrb[0].mxu0
      %v4418 = vadd.f32 %v2251, %v4417
      %v4419 = vpop.f32.mrb[0].mxu0
      %v4420 = vadd.f32 %v2255, %v4419
      %v4421 = vpop.f32.mrb[0].mxu0
      %v4422 = vadd.f32 %v2251, %v4421
      %v4423 = vpop.f32.mrb[0].mxu0
      %v4424 = vadd.f32 %v2255, %v4423
      %4425 = vmatprep.mubr.bf16.mxu0 0
      %4426 = vmatmul.mubr.bf16.gmra.mrb[0].mxu0 %v2133
      %v4427 = vpop.f32.mrb[0].mxu0
      %v4428 = vadd.f32 %v2251, %v4427
      %v4429 = vpop.f32.mrb[0].mxu0
      %v4430 = vadd.f32 %v2255, %v4429
      %v4431 = vpop.f32.mrb[0].mxu0
      %v4432 = vadd.f32 %v2251, %v4431
      %v4433 = vpop.f32.mrb[0].mxu0
      %v4434 = vadd.f32 %v2255, %v4433
      %4435 = vmatprep.mubr.bf16.mxu0 0
      %4436 = vmatmul.mubr.bf16.gmra.mrb[0].mxu0 %v2134
      %v4437 = vpop.f32.mrb[0].mxu0
      %v4438 = vadd.f32 %v2251, %v4437
      %v4439 = vpop.f32.mrb[0].mxu0
      %v4440 = vadd.f32 %v2255, %v4439
      %v4441 = vpop.f32.mrb[0].mxu0
      %v4442 = vadd.f32 %v2251, %v4441
      %v4443 = vpop.f32.mrb[0].mxu0
      %v4444 = vadd.f32 %v2255, %v4443
      %4445 = vmatprep.mubr.bf16.mxu0 0
      %4446 = vmatmul.mubr.bf16.gmra.mrb[0].mxu0 %v2135
      %v4447 = vpop.f32.mrb[0].mxu0
      %v4448 = vadd.f32 %v2251, %v4447
      %v4449 = vpop.f32.mrb[0].mxu0
      %v4450 = vadd.f32 %v2255, %v4449
      %v4451 = vpop.f32.mrb[0].mxu0
      %v4452 = vadd.f32 %v2251, %v4451
      %v4453 = vpop.f32.mrb[0].mxu0
      %v4454 = vadd.f32 %v2255, %v4453
      %4455 = vmatprep.mubr.bf16.mxu0 0
      %4456 = vmatmul.mubr.bf16.gmra.mrb[0].mxu0 %v2136
      %v4457 = vpop.f32.mrb[0].mxu0
      %v4458 = vadd.f32 %v2251, %v4457
      %v4459 = vpop.f32.mrb[0].mxu0
      %v4460 = vadd.f32 %v2255, %v4459
      %v4461 = vpop.f32.mrb[0].mxu0
      %v4462 = vadd.f32 %v2251, %v4461
      %v4463 = vpop.f32.mrb[0].mxu0
      %v4464 = vadd.f32 %v2255, %v4463
      %4465 = vmatprep.mubr.bf16.mxu0 0
      %4466 = vmatmul.mubr.bf16.gmra.mrb[0].mxu0 %v2137
      %v4467 = vpop.f32.mrb[0].mxu0
      %v4468 = vadd.f32 %v2251, %v4467
      %v4469 = vpop.f32.mrb[0].mxu0
      %v4470 = vadd.f32 %v2255, %v4469
      %v4471 = vpop.f32.mrb[0].mxu0
      %v4472 = vadd.f32 %v2251, %v4471
      %v4473 = vpop.f32.mrb[0].mxu0
      %v4474 = vadd.f32 %v2255, %v4473
      %4475 = vmatprep.mubr.bf16.mxu0 0
      %4476 = vmatmul.mubr.bf16.gmra.mrb[0].mxu0 %v2138
      %v4477 = vpop.f32.mrb[0].mxu0
      %v4478 = vadd.f32 %v2251, %v4477
      %v4479 = vpop.f32.mrb[0].mxu0
      %v4480 = vadd.f32 %v2255, %v4479
      %v4481 = vpop.f32.mrb[0].mxu0
      %v4482 = vadd.f32 %v2251, %v4481
      %v4483 = vpop.f32.mrb[0].mxu0
      %v4484 = vadd.f32 %v2255, %v4483
      %4485 = vmatprep.mubr.bf16.mxu0 0
      %4486 = vmatmul.mubr.bf16.gmra.mrb[0].mxu0 %v2139
      %v4487 = vpop.f32.mrb[0].mxu0
      %v4488 = vadd.f32 %v2251, %v4487
      %v4489 = vpop.f32.mrb[0].mxu0
      %v4490 = vadd.f32 %v2255, %v4489
      %v4491 = vpop.f32.mrb[0].mxu0
      %v4492 = vadd.f32 %v2251, %v4491
      %v4493 = vpop.f32.mrb[0].mxu0
      %v4494 = vadd.f32 %v2255, %v4493
      %4495 = vmatprep.mubr.bf16.mxu0 0
      %4496 = vmatmul.mubr.bf16.gmra.mrb[0].mxu0 %v2140
      %v4497 = vpop.f32.mrb[0].mxu0
      %v4498 = vadd.f32 %v2251, %v4497
      %v4499 = vpop.f32.mrb[0].mxu0
      %v4500 = vadd.f32 %v2255, %v4499
      %v4501 = vpop.f32.mrb[0].mxu0
      %v4502 = vadd.f32 %v2251, %v4501
      %v4503 = vpop.f32.mrb[0].mxu0
      %v4504 = vadd.f32 %v2255, %v4503
      %4505 = vmatprep.mubr.bf16.mxu0 0
      %4506 = vmatmul.mubr.bf16.gmra.mrb[0].mxu0 %v2141
      %v4507 = vpop.f32.mrb[0].mxu0
      %v4508 = vadd.f32 %v2251, %v4507
      %v4509 = vpop.f32.mrb[0].mxu0
      %v4510 = vadd.f32 %v2255, %v4509
      %v4511 = vpop.f32.mrb[0].mxu0
      %v4512 = vadd.f32 %v2251, %v4511
      %v4513 = vpop.f32.mrb[0].mxu0
      %v4514 = vadd.f32 %v2255, %v4513
      %4515 = vmatprep.mubr.bf16.mxu0 0
      %4516 = vmatmul.mubr.bf16.gmra.mrb[0].mxu0 %v2142
      %v4517 = vpop.f32.mrb[0].mxu0
      %v4518 = vadd.f32 %v2251, %v4517
      %v4519 = vpop.f32.mrb[0].mxu0
      %v4520 = vadd.f32 %v2255, %v4519
      %v4521 = vpop.f32.mrb[0].mxu0
      %v4522 = vadd.f32 %v2251, %v4521
      %v4523 = vpop.f32.mrb[0].mxu0
      %v4524 = vadd.f32 %v2255, %v4523
      %4525 = vmatprep.mubr.bf16.mxu0 0
      %4526 = vmatmul.mubr.bf16.gmra.mrb[0].mxu0 %v2143
      %v4527 = vpop.f32.mrb[0].mxu0
      %v4528 = vadd.f32 %v2251, %v4527
      %v4529 = vpop.f32.mrb[0].mxu0
      %v4530 = vadd.f32 %v2255, %v4529
      %v4531 = vpop.f32.mrb[0].mxu0
      %v4532 = vadd.f32 %v2251, %v4531
      %v4533 = vpop.f32.mrb[0].mxu0
      %v4534 = vadd.f32 %v2255, %v4533
      %4535 = vmatprep.mubr.bf16.mxu0 0
      %4536 = vmatmul.mubr.bf16.gmra.mrb[0].mxu0 %v2144
      %v4537 = vpop.f32.mrb[0].mxu0
      %v4538 = vadd.f32 %v2251, %v4537
      %v4539 = vpop.f32.mrb[0].mxu0
      %v4540 = vadd.f32 %v2255, %v4539
      %v4541 = vpop.f32.mrb[0].mxu0
      %v4542 = vadd.f32 %v2251, %v4541
      %v4543 = vpop.f32.mrb[0].mxu0
      %v4544 = vadd.f32 %v2255, %v4543
      %4545 = vmatprep.mubr.bf16.mxu0 0
      %4546 = vmatmul.mubr.bf16.gmra.mrb[0].mxu0 %v2145
      %v4547 = vpop.f32.mrb[0].mxu0
      %v4548 = vadd.f32 %v2251, %v4547
      %v4549 = vpop.f32.mrb[0].mxu0
      %v4550 = vadd.f32 %v2255, %v4549
      %v4551 = vpop.f32.mrb[0].mxu0
      %v4552 = vadd.f32 %v2251, %v4551
      %v4553 = vpop.f32.mrb[0].mxu0
      %v4554 = vadd.f32 %v2255, %v4553
      %4555 = vmatprep.mubr.bf16.mxu0 0
      %4556 = vmatmul.mubr.bf16.gmra.mrb[0].mxu0 %v2146
      %v4557 = vpop.f32.mrb[0].mxu0
      %v4558 = vadd.f32 %v2251, %v4557
      %v4559 = vpop.f32.mrb[0].mxu0
      %v4560 = vadd.f32 %v2255, %v4559
      %v4561 = vpop.f32.mrb[0].mxu0
      %v4562 = vadd.f32 %v2251, %v4561
      %v4563 = vpop.f32.mrb[0].mxu0
      %v4564 = vadd.f32 %v2255, %v4563
      %4565 = vmatprep.mubr.bf16.mxu0 0
      %4566 = vmatmul.mubr.bf16.gmra.mrb[0].mxu0 %v2147
      %v4567 = vpop.f32.mrb[0].mxu0
      %v4568 = vadd.f32 %v2251, %v4567
      %v4569 = vpop.f32.mrb[0].mxu0
      %v4570 = vadd.f32 %v2255, %v4569
      %v4571 = vpop.f32.mrb[0].mxu0
      %v4572 = vadd.f32 %v2251, %v4571
      %v4573 = vpop.f32.mrb[0].mxu0
      %v4574 = vadd.f32 %v2255, %v4573
      %4575 = vmatprep.mubr.bf16.mxu0 0
      %4576 = vmatmul.mubr.bf16.gmra.mrb[0].mxu0 %v2148
      %v4577 = vpop.f32.mrb[0].mxu0
      %v4578 = vadd.f32 %v2251, %v4577
      %v4579 = vpop.f32.mrb[0].mxu0
      %v4580 = vadd.f32 %v2255, %v4579
      %v4581 = vpop.f32.mrb[0].mxu0
      %v4582 = vadd.f32 %v2251, %v4581
      %v4583 = vpop.f32.mrb[0].mxu0
      %v4584 = vadd.f32 %v2255, %v4583
      %4585 = vmatprep.mubr.bf16.mxu0 0
      %4586 = vmatmul.mubr.bf16.gmra.mrb[0].mxu0 %v2149
      %v4587 = vpop.f32.mrb[0].mxu0
      %v4588 = vadd.f32 %v2251, %v4587
      %v4589 = vpop.f32.mrb[0].mxu0
      %v4590 = vadd.f32 %v2255, %v4589
      %v4591 = vpop.f32.mrb[0].mxu0
      %v4592 = vadd.f32 %v2251, %v4591
      %v4593 = vpop.f32.mrb[0].mxu0
      %v4594 = vadd.f32 %v2255, %v4593
      %4595 = vmatprep.mubr.bf16.mxu0 0
      %4596 = vmatmul.mubr.bf16.gmra.mrb[0].mxu0 %v2150
      %v4597 = vpop.f32.mrb[0].mxu0
      %v4598 = vadd.f32 %v2251, %v4597
      %v4599 = vpop.f32.mrb[0].mxu0
      %v4600 = vadd.f32 %v2255, %v4599
      %v4601 = vpop.f32.mrb[0].mxu0
      %v4602 = vadd.f32 %v2251, %v4601
      %v4603 = vpop.f32.mrb[0].mxu0
      %v4604 = vadd.f32 %v2255, %v4603
      %4605 = vmatprep.mubr.bf16.mxu0 0
      %4606 = vmatmul.mubr.bf16.gmra.mrb[0].mxu0 %v2151
      %v4607 = vpop.f32.mrb[0].mxu0
      %v4608 = vadd.f32 %v2251, %v4607
      %v4609 = vpop.f32.mrb[0].mxu0
      %v4610 = vadd.f32 %v2255, %v4609
      %v4611 = vpop.f32.mrb[0].mxu0
      %v4612 = vadd.f32 %v2251, %v4611
      %v4613 = vpop.f32.mrb[0].mxu0
      %v4614 = vadd.f32 %v2255, %v4613
      %4615 = vmatprep.mubr.bf16.mxu0 0
      %4616 = vmatmul.mubr.bf16.gmra.mrb[0].mxu0 %v2152
      %v4617 = vpop.f32.mrb[0].mxu0
      %v4618 = vadd.f32 %v2251, %v4617
      %v4619 = vpop.f32.mrb[0].mxu0
      %v4620 = vadd.f32 %v2255, %v4619
      %v4621 = vpop.f32.mrb[0].mxu0
      %v4622 = vadd.f32 %v2251, %v4621
      %v4623 = vpop.f32.mrb[0].mxu0
      %v4624 = vadd.f32 %v2255, %v4623
      %4625 = vmatprep.mubr.bf16.mxu0 0
      %4626 = vmatmul.mubr.bf16.gmra.mrb[0].mxu0 %v2153
      %v4627 = vpop.f32.mrb[0].mxu0
      %v4628 = vadd.f32 %v2251, %v4627
      %v4629 = vpop.f32.mrb[0].mxu0
      %v4630 = vadd.f32 %v2255, %v4629
      %v4631 = vpop.f32.mrb[0].mxu0
      %v4632 = vadd.f32 %v2251, %v4631
      %v4633 = vpop.f32.mrb[0].mxu0
      %v4634 = vadd.f32 %v2255, %v4633
      %4635 = vmatprep.mubr.bf16.mxu0 0
      %4636 = vmatmul.mubr.bf16.gmra.mrb[0].mxu0 %v2154
      %v4637 = vpop.f32.mrb[0].mxu0
      %v4638 = vadd.f32 %v2251, %v4637
      %v4639 = vpop.f32.mrb[0].mxu0
      %v4640 = vadd.f32 %v2255, %v4639
      %v4641 = vpop.f32.mrb[0].mxu0
      %v4642 = vadd.f32 %v2251, %v4641
      %v4643 = vpop.f32.mrb[0].mxu0
      %v4644 = vadd.f32 %v2255, %v4643
      %4645 = vmatprep.mubr.bf16.mxu0 0
      %4646 = vmatmul.mubr.bf16.gmra.mrb[0].mxu0 %v2155
      %v4647 = vpop.f32.mrb[0].mxu0
      %v4648 = vadd.f32 %v2251, %v4647
      %v4649 = vpop.f32.mrb[0].mxu0
      %v4650 = vadd.f32 %v2255, %v4649
      %v4651 = vpop.f32.mrb[0].mxu0
      %v4652 = vadd.f32 %v2251, %v4651
      %v4653 = vpop.f32.mrb[0].mxu0
      %v4654 = vadd.f32 %v2255, %v4653
      %4655 = vmatprep.mubr.bf16.mxu0 0
      %4656 = vmatmul.mubr.bf16.gmra.mrb[0].mxu0 %v2156
      %v4657 = vpop.f32.mrb[0].mxu0
      %v4658 = vadd.f32 %v2251, %v4657
      %v4659 = vpop.f32.mrb[0].mxu0
      %v4660 = vadd.f32 %v2255, %v4659
      %v4661 = vpop.f32.mrb[0].mxu0
      %v4662 = vadd.f32 %v2251, %v4661
      %v4663 = vpop.f32.mrb[0].mxu0
      %v4664 = vadd.f32 %v2255, %v4663
      %4665 = vmatprep.mubr.bf16.mxu0 0
      %4666 = vmatmul.mubr.bf16.gmra.mrb[0].mxu0 %v2157
      %v4667 = vpop.f32.mrb[0].mxu0
      %v4668 = vadd.f32 %v2251, %v4667
      %v4669 = vpop.f32.mrb[0].mxu0
      %v4670 = vadd.f32 %v2255, %v4669
      %v4671 = vpop.f32.mrb[0].mxu0
      %v4672 = vadd.f32 %v2251, %v4671
      %v4673 = vpop.f32.mrb[0].mxu0
      %v4674 = vadd.f32 %v2255, %v4673
      %4675 = vdwg.mxu0
      %v4676 = vmax.f32 %v2619, %v2623
      %v4677 = vmax.f32 %v4676, %v2629
      %v4678 = vmax.f32 %v4677, %v2633
      %v4679 = vmax.f32 %v4678, %v2639
      %v4680 = vmax.f32 %v4679, %v2643
      %v4681 = vmax.f32 %v4680, %v2649
      %v4682 = vmax.f32 %v4681, %v2653
      %v4683 = vmax.f32 %v4682, %v2659
      %v4684 = vmax.f32 %v4683, %v2663
      %v4685 = vmax.f32 %v4684, %v2669
      %v4686 = vmax.f32 %v4685, %v2673
      %v4687 = vmax.f32 %v4686, %v2679
      %v4688 = vmax.f32 %v4687, %v2683
      %v4689 = vmax.f32 %v4688, %v2689
      %v4690 = vmax.f32 %v4689, %v2693
      %v4691 = vmax.f32 %v4690, %v2699
      %v4692 = vmax.f32 %v4691, %v2703
      %v4693 = vmax.f32 %v4692, %v2709
      %v4694 = vmax.f32 %v4693, %v2713
      %v4695 = vmax.f32 %v4694, %v2719
      %v4696 = vmax.f32 %v4695, %v2723
      %v4697 = vmax.f32 %v4696, %v2729
      %v4698 = vmax.f32 %v4697, %v2733
      %v4699 = vmax.f32 %v4698, %v2739
      %v4700 = vmax.f32 %v4699, %v2743
      %v4701 = vmax.f32 %v4700, %v2749
      %v4702 = vmax.f32 %v4701, %v2753
      %v4703 = vmax.f32 %v4702, %v2759
      %v4704 = vmax.f32 %v4703, %v2763
      %v4705 = vmax.f32 %v4704, %v2769
      %v4706 = vmax.f32 %v4705, %v2773
      %v4707 = vmax.f32 %v4706, %v2779
      %v4708 = vmax.f32 %v4707, %v2783
      %v4709 = vmax.f32 %v4708, %v2789
      %v4710 = vmax.f32 %v4709, %v2793
      %v4711 = vmax.f32 %v4710, %v2799
      %v4712 = vmax.f32 %v4711, %v2803
      %v4713 = vmax.f32 %v4712, %v2809
      %v4714 = vmax.f32 %v4713, %v2813
      %v4715 = vmax.f32 %v4714, %v2819
      %v4716 = vmax.f32 %v4715, %v2823
      %v4717 = vmax.f32 %v4716, %v2829
      %v4718 = vmax.f32 %v4717, %v2833
      %v4719 = vmax.f32 %v4718, %v2839
      %v4720 = vmax.f32 %v4719, %v2843
      %v4721 = vmax.f32 %v4720, %v2849
      %v4722 = vmax.f32 %v4721, %v2853
      %v4723 = vmax.f32 %v4722, %v2859
      %v4724 = vmax.f32 %v4723, %v2863
      %v4725 = vmax.f32 %v4724, %v2869
      %v4726 = vmax.f32 %v4725, %v2873
      %v4727 = vmax.f32 %v4726, %v2879
      %v4728 = vmax.f32 %v4727, %v2883
      %v4729 = vmax.f32 %v4728, %v2889
      %v4730 = vmax.f32 %v4729, %v2893
      %v4731 = vmax.f32 %v4730, %v2899
      %v4732 = vmax.f32 %v4731, %v2903
      %v4733 = vmax.f32 %v4732, %v2909
      %v4734 = vmax.f32 %v4733, %v2913
      %v4735 = vmax.f32 %v4734, %v2919
      %v4736 = vmax.f32 %v4735, %v2923
      %v4737 = vmax.f32 %v4736, %v2929
      %v4738 = vmax.f32 %v4737, %v2933
      %v4739 = vmax.f32 %v4738, %v2939
      %v4740 = vmax.f32 %v4739, %v2943
      %v4741 = vmax.f32 %v4740, %v2949
      %v4742 = vmax.f32 %v4741, %v2953
      %v4743 = vmax.f32 %v4742, %v2959
      %v4744 = vmax.f32 %v4743, %v2963
      %v4745 = vmax.f32 %v4744, %v2969
      %v4746 = vmax.f32 %v4745, %v2973
      %v4747 = vmax.f32 %v4746, %v2979
      %v4748 = vmax.f32 %v4747, %v2983
      %v4749 = vmax.f32 %v4748, %v2989
      %v4750 = vmax.f32 %v4749, %v2993
      %v4751 = vmax.f32 %v4750, %v2999
      %v4752 = vmax.f32 %v4751, %v3003
      %v4753 = vmax.f32 %v4752, %v3009
      %v4754 = vmax.f32 %v4753, %v3013
      %v4755 = vmax.f32 %v4754, %v3019
      %v4756 = vmax.f32 %v4755, %v3023
      %v4757 = vmax.f32 %v4756, %v3029
      %v4758 = vmax.f32 %v4757, %v3033
      %v4759 = vmax.f32 %v4758, %v3039
      %v4760 = vmax.f32 %v4759, %v3043
      %v4761 = vmax.f32 %v4760, %v3049
      %v4762 = vmax.f32 %v4761, %v3053
      %v4763 = vmax.f32 %v4762, %v3059
      %v4764 = vmax.f32 %v4763, %v3063
      %v4765 = vmax.f32 %v4764, %v3069
      %v4766 = vmax.f32 %v4765, %v3073
      %v4767 = vmax.f32 %v4766, %v3079
      %v4768 = vmax.f32 %v4767, %v3083
      %v4769 = vmax.f32 %v4768, %v3089
      %v4770 = vmax.f32 %v4769, %v3093
      %v4771 = vmax.f32 %v4770, %v3099
      %v4772 = vmax.f32 %v4771, %v3103
      %v4773 = vrot.slane %v4772, 4
      %v4774 = vmax.f32 %v4772, %v4773
      %v4775 = vrot.slane %v4774, 2
      %v4776 = vmax.f32 %v4774, %v4775
      %v4777 = vrot.slane %v4776, 1
      %v4778 = vmax.f32 %v4776, %v4777
      %v4779 = vmax.f32 %v2621, %v2625
      %v4780 = vmax.f32 %v4779, %v2631
      %v4781 = vmax.f32 %v4780, %v2635
      %v4782 = vmax.f32 %v4781, %v2641
      %v4783 = vmax.f32 %v4782, %v2645
      %v4784 = vmax.f32 %v4783, %v2651
      %v4785 = vmax.f32 %v4784, %v2655
      %v4786 = vmax.f32 %v4785, %v2661
      %v4787 = vmax.f32 %v4786, %v2665
      %v4788 = vmax.f32 %v4787, %v2671
      %v4789 = vmax.f32 %v4788, %v2675
      %v4790 = vmax.f32 %v4789, %v2681
      %v4791 = vmax.f32 %v4790, %v2685
      %v4792 = vmax.f32 %v4791, %v2691
      %v4793 = vmax.f32 %v4792, %v2695
      %v4794 = vmax.f32 %v4793, %v2701
      %v4795 = vmax.f32 %v4794, %v2705
      %v4796 = vmax.f32 %v4795, %v2711
      %v4797 = vmax.f32 %v4796, %v2715
      %v4798 = vmax.f32 %v4797, %v2721
      %v4799 = vmax.f32 %v4798, %v2725
      %v4800 = vmax.f32 %v4799, %v2731
      %v4801 = vmax.f32 %v4800, %v2735
      %v4802 = vmax.f32 %v4801, %v2741
      %v4803 = vmax.f32 %v4802, %v2745
      %v4804 = vmax.f32 %v4803, %v2751
      %v4805 = vmax.f32 %v4804, %v2755
      %v4806 = vmax.f32 %v4805, %v2761
      %v4807 = vmax.f32 %v4806, %v2765
      %v4808 = vmax.f32 %v4807, %v2771
      %v4809 = vmax.f32 %v4808, %v2775
      %v4810 = vmax.f32 %v4809, %v2781
      %v4811 = vmax.f32 %v4810, %v2785
      %v4812 = vmax.f32 %v4811, %v2791
      %v4813 = vmax.f32 %v4812, %v2795
      %v4814 = vmax.f32 %v4813, %v2801
      %v4815 = vmax.f32 %v4814, %v2805
      %v4816 = vmax.f32 %v4815, %v2811
      %v4817 = vmax.f32 %v4816, %v2815
      %v4818 = vmax.f32 %v4817, %v2821
      %v4819 = vmax.f32 %v4818, %v2825
      %v4820 = vmax.f32 %v4819, %v2831
      %v4821 = vmax.f32 %v4820, %v2835
      %v4822 = vmax.f32 %v4821, %v2841
      %v4823 = vmax.f32 %v4822, %v2845
      %v4824 = vmax.f32 %v4823, %v2851
      %v4825 = vmax.f32 %v4824, %v2855
      %v4826 = vmax.f32 %v4825, %v2861
      %v4827 = vmax.f32 %v4826, %v2865
      %v4828 = vmax.f32 %v4827, %v2871
      %v4829 = vmax.f32 %v4828, %v2875
      %v4830 = vmax.f32 %v4829, %v2881
      %v4831 = vmax.f32 %v4830, %v2885
      %v4832 = vmax.f32 %v4831, %v2891
      %v4833 = vmax.f32 %v4832, %v2895
      %v4834 = vmax.f32 %v4833, %v2901
      %v4835 = vmax.f32 %v4834, %v2905
      %v4836 = vmax.f32 %v4835, %v2911
      %v4837 = vmax.f32 %v4836, %v2915
      %v4838 = vmax.f32 %v4837, %v2921
      %v4839 = vmax.f32 %v4838, %v2925
      %v4840 = vmax.f32 %v4839, %v2931
      %v4841 = vmax.f32 %v4840, %v2935
      %v4842 = vmax.f32 %v4841, %v2941
      %v4843 = vmax.f32 %v4842, %v2945
      %v4844 = vmax.f32 %v4843, %v2951
      %v4845 = vmax.f32 %v4844, %v2955
      %v4846 = vmax.f32 %v4845, %v2961
      %v4847 = vmax.f32 %v4846, %v2965
      %v4848 = vmax.f32 %v4847, %v2971
      %v4849 = vmax.f32 %v4848, %v2975
      %v4850 = vmax.f32 %v4849, %v2981
      %v4851 = vmax.f32 %v4850, %v2985
      %v4852 = vmax.f32 %v4851, %v2991
      %v4853 = vmax.f32 %v4852, %v2995
      %v4854 = vmax.f32 %v4853, %v3001
      %v4855 = vmax.f32 %v4854, %v3005
      %v4856 = vmax.f32 %v4855, %v3011
      %v4857 = vmax.f32 %v4856, %v3015
      %v4858 = vmax.f32 %v4857, %v3021
      %v4859 = vmax.f32 %v4858, %v3025
      %v4860 = vmax.f32 %v4859, %v3031
      %v4861 = vmax.f32 %v4860, %v3035
      %v4862 = vmax.f32 %v4861, %v3041
      %v4863 = vmax.f32 %v4862, %v3045
      %v4864 = vmax.f32 %v4863, %v3051
      %v4865 = vmax.f32 %v4864, %v3055
      %v4866 = vmax.f32 %v4865, %v3061
      %v4867 = vmax.f32 %v4866, %v3065
      %v4868 = vmax.f32 %v4867, %v3071
      %v4869 = vmax.f32 %v4868, %v3075
      %v4870 = vmax.f32 %v4869, %v3081
      %v4871 = vmax.f32 %v4870, %v3085
      %v4872 = vmax.f32 %v4871, %v3091
      %v4873 = vmax.f32 %v4872, %v3095
      %v4874 = vmax.f32 %v4873, %v3101
      %v4875 = vmax.f32 %v4874, %v3105
      %v4876 = vrot.slane %v4875, 4
      %v4877 = vmax.f32 %v4875, %v4876
      %v4878 = vrot.slane %v4877, 2
      %v4879 = vmax.f32 %v4877, %v4878
      %v4880 = vrot.slane %v4879, 1
      %v4881 = vmax.f32 %v4879, %v4880
      %v4882 = vmax.f32 %v3142, %v3146
      %v4883 = vmax.f32 %v4882, %v3152
      %v4884 = vmax.f32 %v4883, %v3156
      %v4885 = vmax.f32 %v4884, %v3162
      %v4886 = vmax.f32 %v4885, %v3166
      %v4887 = vmax.f32 %v4886, %v3172
      %v4888 = vmax.f32 %v4887, %v3176
      %v4889 = vmax.f32 %v4888, %v3182
      %v4890 = vmax.f32 %v4889, %v3186
      %v4891 = vmax.f32 %v4890, %v3192
      %v4892 = vmax.f32 %v4891, %v3196
      %v4893 = vmax.f32 %v4892, %v3202
      %v4894 = vmax.f32 %v4893, %v3206
      %v4895 = vmax.f32 %v4894, %v3212
      %v4896 = vmax.f32 %v4895, %v3216
      %v4897 = vmax.f32 %v4896, %v3222
      %v4898 = vmax.f32 %v4897, %v3226
      %v4899 = vmax.f32 %v4898, %v3232
      %v4900 = vmax.f32 %v4899, %v3236
      %v4901 = vmax.f32 %v4900, %v3242
      %v4902 = vmax.f32 %v4901, %v3246
      %v4903 = vmax.f32 %v4902, %v3252
      %v4904 = vmax.f32 %v4903, %v3256
      %v4905 = vmax.f32 %v4904, %v3262
      %v4906 = vmax.f32 %v4905, %v3266
      %v4907 = vmax.f32 %v4906, %v3272
      %v4908 = vmax.f32 %v4907, %v3276
      %v4909 = vmax.f32 %v4908, %v3282
      %v4910 = vmax.f32 %v4909, %v3286
      %v4911 = vmax.f32 %v4910, %v3292
      %v4912 = vmax.f32 %v4911, %v3296
      %v4913 = vmax.f32 %v4912, %v3302
      %v4914 = vmax.f32 %v4913, %v3306
      %v4915 = vmax.f32 %v4914, %v3312
      %v4916 = vmax.f32 %v4915, %v3316
      %v4917 = vmax.f32 %v4916, %v3322
      %v4918 = vmax.f32 %v4917, %v3326
      %v4919 = vmax.f32 %v4918, %v3332
      %v4920 = vmax.f32 %v4919, %v3336
      %v4921 = vmax.f32 %v4920, %v3342
      %v4922 = vmax.f32 %v4921, %v3346
      %v4923 = vmax.f32 %v4922, %v3352
      %v4924 = vmax.f32 %v4923, %v3356
      %v4925 = vmax.f32 %v4924, %v3362
      %v4926 = vmax.f32 %v4925, %v3366
      %v4927 = vmax.f32 %v4926, %v3372
      %v4928 = vmax.f32 %v4927, %v3376
      %v4929 = vmax.f32 %v4928, %v3382
      %v4930 = vmax.f32 %v4929, %v3386
      %v4931 = vmax.f32 %v4930, %v3392
      %v4932 = vmax.f32 %v4931, %v3396
      %v4933 = vmax.f32 %v4932, %v3402
      %v4934 = vmax.f32 %v4933, %v3406
      %v4935 = vmax.f32 %v4934, %v3412
      %v4936 = vmax.f32 %v4935, %v3416
      %v4937 = vmax.f32 %v4936, %v3422
      %v4938 = vmax.f32 %v4937, %v3426
      %v4939 = vmax.f32 %v4938, %v3432
      %v4940 = vmax.f32 %v4939, %v3436
      %v4941 = vmax.f32 %v4940, %v3442
      %v4942 = vmax.f32 %v4941, %v3446
      %v4943 = vmax.f32 %v4942, %v3452
      %v4944 = vmax.f32 %v4943, %v3456
      %v4945 = vmax.f32 %v4944, %v3462
      %v4946 = vmax.f32 %v4945, %v3466
      %v4947 = vmax.f32 %v4946, %v3472
      %v4948 = vmax.f32 %v4947, %v3476
      %v4949 = vmax.f32 %v4948, %v3482
      %v4950 = vmax.f32 %v4949, %v3486
      %v4951 = vmax.f32 %v4950, %v3492
      %v4952 = vmax.f32 %v4951, %v3496
      %v4953 = vmax.f32 %v4952, %v3502
      %v4954 = vmax.f32 %v4953, %v3506
      %v4955 = vmax.f32 %v4954, %v3512
      %v4956 = vmax.f32 %v4955, %v3516
      %v4957 = vmax.f32 %v4956, %v3522
      %v4958 = vmax.f32 %v4957, %v3526
      %v4959 = vmax.f32 %v4958, %v3532
      %v4960 = vmax.f32 %v4959, %v3536
      %v4961 = vmax.f32 %v4960, %v3542
      %v4962 = vmax.f32 %v4961, %v3546
      %v4963 = vmax.f32 %v4962, %v3552
      %v4964 = vmax.f32 %v4963, %v3556
      %v4965 = vmax.f32 %v4964, %v3562
      %v4966 = vmax.f32 %v4965, %v3566
      %v4967 = vmax.f32 %v4966, %v3572
      %v4968 = vmax.f32 %v4967, %v3576
      %v4969 = vmax.f32 %v4968, %v3582
      %v4970 = vmax.f32 %v4969, %v3586
      %v4971 = vmax.f32 %v4970, %v3592
      %v4972 = vmax.f32 %v4971, %v3596
      %v4973 = vmax.f32 %v4972, %v3602
      %v4974 = vmax.f32 %v4973, %v3606
      %v4975 = vmax.f32 %v4974, %v3612
      %v4976 = vmax.f32 %v4975, %v3616
      %v4977 = vmax.f32 %v4976, %v3622
      %v4978 = vmax.f32 %v4977, %v3626
      %v4979 = vrot.slane %v4978, 4
      %v4980 = vmax.f32 %v4978, %v4979
      %v4981 = vrot.slane %v4980, 2
      %v4982 = vmax.f32 %v4980, %v4981
      %v4983 = vrot.slane %v4982, 1
      %v4984 = vmax.f32 %v4982, %v4983
      %v4985 = vmax.f32 %v3144, %v3148
      %v4986 = vmax.f32 %v4985, %v3154
      %v4987 = vmax.f32 %v4986, %v3158
      %v4988 = vmax.f32 %v4987, %v3164
      %v4989 = vmax.f32 %v4988, %v3168
      %v4990 = vmax.f32 %v4989, %v3174
      %v4991 = vmax.f32 %v4990, %v3178
      %v4992 = vmax.f32 %v4991, %v3184
      %v4993 = vmax.f32 %v4992, %v3188
      %v4994 = vmax.f32 %v4993, %v3194
      %v4995 = vmax.f32 %v4994, %v3198
      %v4996 = vmax.f32 %v4995, %v3204
      %v4997 = vmax.f32 %v4996, %v3208
      %v4998 = vmax.f32 %v4997, %v3214
      %v4999 = vmax.f32 %v4998, %v3218
      %v5000 = vmax.f32 %v4999, %v3224
      %v5001 = vmax.f32 %v5000, %v3228
      %v5002 = vmax.f32 %v5001, %v3234
      %v5003 = vmax.f32 %v5002, %v3238
      %v5004 = vmax.f32 %v5003, %v3244
      %v5005 = vmax.f32 %v5004, %v3248
      %v5006 = vmax.f32 %v5005, %v3254
      %v5007 = vmax.f32 %v5006, %v3258
      %v5008 = vmax.f32 %v5007, %v3264
      %v5009 = vmax.f32 %v5008, %v3268
      %v5010 = vmax.f32 %v5009, %v3274
      %v5011 = vmax.f32 %v5010, %v3278
      %v5012 = vmax.f32 %v5011, %v3284
      %v5013 = vmax.f32 %v5012, %v3288
      %v5014 = vmax.f32 %v5013, %v3294
      %v5015 = vmax.f32 %v5014, %v3298
      %v5016 = vmax.f32 %v5015, %v3304
      %v5017 = vmax.f32 %v5016, %v3308
      %v5018 = vmax.f32 %v5017, %v3314
      %v5019 = vmax.f32 %v5018, %v3318
      %v5020 = vmax.f32 %v5019, %v3324
      %v5021 = vmax.f32 %v5020, %v3328
      %v5022 = vmax.f32 %v5021, %v3334
      %v5023 = vmax.f32 %v5022, %v3338
      %v5024 = vmax.f32 %v5023, %v3344
      %v5025 = vmax.f32 %v5024, %v3348
      %v5026 = vmax.f32 %v5025, %v3354
      %v5027 = vmax.f32 %v5026, %v3358
      %v5028 = vmax.f32 %v5027, %v3364
      %v5029 = vmax.f32 %v5028, %v3368
      %v5030 = vmax.f32 %v5029, %v3374
      %v5031 = vmax.f32 %v5030, %v3378
      %v5032 = vmax.f32 %v5031, %v3384
      %v5033 = vmax.f32 %v5032, %v3388
      %v5034 = vmax.f32 %v5033, %v3394
      %v5035 = vmax.f32 %v5034, %v3398
      %v5036 = vmax.f32 %v5035, %v3404
      %v5037 = vmax.f32 %v5036, %v3408
      %v5038 = vmax.f32 %v5037, %v3414
      %v5039 = vmax.f32 %v5038, %v3418
      %v5040 = vmax.f32 %v5039, %v3424
      %v5041 = vmax.f32 %v5040, %v3428
      %v5042 = vmax.f32 %v5041, %v3434
      %v5043 = vmax.f32 %v5042, %v3438
      %v5044 = vmax.f32 %v5043, %v3444
      %v5045 = vmax.f32 %v5044, %v3448
      %v5046 = vmax.f32 %v5045, %v3454
      %v5047 = vmax.f32 %v5046, %v3458
      %v5048 = vmax.f32 %v5047, %v3464
      %v5049 = vmax.f32 %v5048, %v3468
      %v5050 = vmax.f32 %v5049, %v3474
      %v5051 = vmax.f32 %v5050, %v3478
      %v5052 = vmax.f32 %v5051, %v3484
      %v5053 = vmax.f32 %v5052, %v3488
      %v5054 = vmax.f32 %v5053, %v3494
      %v5055 = vmax.f32 %v5054, %v3498
      %v5056 = vmax.f32 %v5055, %v3504
      %v5057 = vmax.f32 %v5056, %v3508
      %v5058 = vmax.f32 %v5057, %v3514
      %v5059 = vmax.f32 %v5058, %v3518
      %v5060 = vmax.f32 %v5059, %v3524
      %v5061 = vmax.f32 %v5060, %v3528
      %v5062 = vmax.f32 %v5061, %v3534
      %v5063 = vmax.f32 %v5062, %v3538
      %v5064 = vmax.f32 %v5063, %v3544
      %v5065 = vmax.f32 %v5064, %v3548
      %v5066 = vmax.f32 %v5065, %v3554
      %v5067 = vmax.f32 %v5066, %v3558
      %v5068 = vmax.f32 %v5067, %v3564
      %v5069 = vmax.f32 %v5068, %v3568
      %v5070 = vmax.f32 %v5069, %v3574
      %v5071 = vmax.f32 %v5070, %v3578
      %v5072 = vmax.f32 %v5071, %v3584
      %v5073 = vmax.f32 %v5072, %v3588
      %v5074 = vmax.f32 %v5073, %v3594
      %v5075 = vmax.f32 %v5074, %v3598
      %v5076 = vmax.f32 %v5075, %v3604
      %v5077 = vmax.f32 %v5076, %v3608
      %v5078 = vmax.f32 %v5077, %v3614
      %v5079 = vmax.f32 %v5078, %v3618
      %v5080 = vmax.f32 %v5079, %v3624
      %v5081 = vmax.f32 %v5080, %v3628
      %v5082 = vrot.slane %v5081, 4
      %v5083 = vmax.f32 %v5081, %v5082
      %v5084 = vrot.slane %v5083, 2
      %v5085 = vmax.f32 %v5083, %v5084
      %v5086 = vrot.slane %v5085, 1
      %v5087 = vmax.f32 %v5085, %v5086
      %v5088 = vmax.f32 %v3665, %v3669
      %v5089 = vmax.f32 %v5088, %v3675
      %v5090 = vmax.f32 %v5089, %v3679
      %v5091 = vmax.f32 %v5090, %v3685
      %v5092 = vmax.f32 %v5091, %v3689
      %v5093 = vmax.f32 %v5092, %v3695
      %v5094 = vmax.f32 %v5093, %v3699
      %v5095 = vmax.f32 %v5094, %v3705
      %v5096 = vmax.f32 %v5095, %v3709
      %v5097 = vmax.f32 %v5096, %v3715
      %v5098 = vmax.f32 %v5097, %v3719
      %v5099 = vmax.f32 %v5098, %v3725
      %v5100 = vmax.f32 %v5099, %v3729
      %v5101 = vmax.f32 %v5100, %v3735
      %v5102 = vmax.f32 %v5101, %v3739
      %v5103 = vmax.f32 %v5102, %v3745
      %v5104 = vmax.f32 %v5103, %v3749
      %v5105 = vmax.f32 %v5104, %v3755
      %v5106 = vmax.f32 %v5105, %v3759
      %v5107 = vmax.f32 %v5106, %v3765
      %v5108 = vmax.f32 %v5107, %v3769
      %v5109 = vmax.f32 %v5108, %v3775
      %v5110 = vmax.f32 %v5109, %v3779
      %v5111 = vmax.f32 %v5110, %v3785
      %v5112 = vmax.f32 %v5111, %v3789
      %v5113 = vmax.f32 %v5112, %v3795
      %v5114 = vmax.f32 %v5113, %v3799
      %v5115 = vmax.f32 %v5114, %v3805
      %v5116 = vmax.f32 %v5115, %v3809
      %v5117 = vmax.f32 %v5116, %v3815
      %v5118 = vmax.f32 %v5117, %v3819
      %v5119 = vmax.f32 %v5118, %v3825
      %v5120 = vmax.f32 %v5119, %v3829
      %v5121 = vmax.f32 %v5120, %v3835
      %v5122 = vmax.f32 %v5121, %v3839
      %v5123 = vmax.f32 %v5122, %v3845
      %v5124 = vmax.f32 %v5123, %v3849
      %v5125 = vmax.f32 %v5124, %v3855
      %v5126 = vmax.f32 %v5125, %v3859
      %v5127 = vmax.f32 %v5126, %v3865
      %v5128 = vmax.f32 %v5127, %v3869
      %v5129 = vmax.f32 %v5128, %v3875
      %v5130 = vmax.f32 %v5129, %v3879
      %v5131 = vmax.f32 %v5130, %v3885
      %v5132 = vmax.f32 %v5131, %v3889
      %v5133 = vmax.f32 %v5132, %v3895
      %v5134 = vmax.f32 %v5133, %v3899
      %v5135 = vmax.f32 %v5134, %v3905
      %v5136 = vmax.f32 %v5135, %v3909
      %v5137 = vmax.f32 %v5136, %v3915
      %v5138 = vmax.f32 %v5137, %v3919
      %v5139 = vmax.f32 %v5138, %v3925
      %v5140 = vmax.f32 %v5139, %v3929
      %v5141 = vmax.f32 %v5140, %v3935
      %v5142 = vmax.f32 %v5141, %v3939
      %v5143 = vmax.f32 %v5142, %v3945
      %v5144 = vmax.f32 %v5143, %v3949
      %v5145 = vmax.f32 %v5144, %v3955
      %v5146 = vmax.f32 %v5145, %v3959
      %v5147 = vmax.f32 %v5146, %v3965
      %v5148 = vmax.f32 %v5147, %v3969
      %v5149 = vmax.f32 %v5148, %v3975
      %v5150 = vmax.f32 %v5149, %v3979
      %v5151 = vmax.f32 %v5150, %v3985
      %v5152 = vmax.f32 %v5151, %v3989
      %v5153 = vmax.f32 %v5152, %v3995
      %v5154 = vmax.f32 %v5153, %v3999
      %v5155 = vmax.f32 %v5154, %v4005
      %v5156 = vmax.f32 %v5155, %v4009
      %v5157 = vmax.f32 %v5156, %v4015
      %v5158 = vmax.f32 %v5157, %v4019
      %v5159 = vmax.f32 %v5158, %v4025
      %v5160 = vmax.f32 %v5159, %v4029
      %v5161 = vmax.f32 %v5160, %v4035
      %v5162 = vmax.f32 %v5161, %v4039
      %v5163 = vmax.f32 %v5162, %v4045
      %v5164 = vmax.f32 %v5163, %v4049
      %v5165 = vmax.f32 %v5164, %v4055
      %v5166 = vmax.f32 %v5165, %v4059
      %v5167 = vmax.f32 %v5166, %v4065
      %v5168 = vmax.f32 %v5167, %v4069
      %v5169 = vmax.f32 %v5168, %v4075
      %v5170 = vmax.f32 %v5169, %v4079
      %v5171 = vmax.f32 %v5170, %v4085
      %v5172 = vmax.f32 %v5171, %v4089
      %v5173 = vmax.f32 %v5172, %v4095
      %v5174 = vmax.f32 %v5173, %v4099
      %v5175 = vmax.f32 %v5174, %v4105
      %v5176 = vmax.f32 %v5175, %v4109
      %v5177 = vmax.f32 %v5176, %v4115
      %v5178 = vmax.f32 %v5177, %v4119
      %v5179 = vmax.f32 %v5178, %v4125
      %v5180 = vmax.f32 %v5179, %v4129
      %v5181 = vmax.f32 %v5180, %v4135
      %v5182 = vmax.f32 %v5181, %v4139
      %v5183 = vmax.f32 %v5182, %v4145
      %v5184 = vmax.f32 %v5183, %v4149
      %v5185 = vrot.slane %v5184, 4
      %v5186 = vmax.f32 %v5184, %v5185
      %v5187 = vrot.slane %v5186, 2
      %v5188 = vmax.f32 %v5186, %v5187
      %v5189 = vrot.slane %v5188, 1
      %v5190 = vmax.f32 %v5188, %v5189
      %v5191 = vmax.f32 %v3667, %v3671
      %v5192 = vmax.f32 %v5191, %v3677
      %v5193 = vmax.f32 %v5192, %v3681
      %v5194 = vmax.f32 %v5193, %v3687
      %v5195 = vmax.f32 %v5194, %v3691
      %v5196 = vmax.f32 %v5195, %v3697
      %v5197 = vmax.f32 %v5196, %v3701
      %v5198 = vmax.f32 %v5197, %v3707
      %v5199 = vmax.f32 %v5198, %v3711
      %v5200 = vmax.f32 %v5199, %v3717
      %v5201 = vmax.f32 %v5200, %v3721
      %v5202 = vmax.f32 %v5201, %v3727
      %v5203 = vmax.f32 %v5202, %v3731
      %v5204 = vmax.f32 %v5203, %v3737
      %v5205 = vmax.f32 %v5204, %v3741
      %v5206 = vmax.f32 %v5205, %v3747
      %v5207 = vmax.f32 %v5206, %v3751
      %v5208 = vmax.f32 %v5207, %v3757
      %v5209 = vmax.f32 %v5208, %v3761
      %v5210 = vmax.f32 %v5209, %v3767
      %v5211 = vmax.f32 %v5210, %v3771
      %v5212 = vmax.f32 %v5211, %v3777
      %v5213 = vmax.f32 %v5212, %v3781
      %v5214 = vmax.f32 %v5213, %v3787
      %v5215 = vmax.f32 %v5214, %v3791
      %v5216 = vmax.f32 %v5215, %v3797
      %v5217 = vmax.f32 %v5216, %v3801
      %v5218 = vmax.f32 %v5217, %v3807
      %v5219 = vmax.f32 %v5218, %v3811
      %v5220 = vmax.f32 %v5219, %v3817
      %v5221 = vmax.f32 %v5220, %v3821
      %v5222 = vmax.f32 %v5221, %v3827
      %v5223 = vmax.f32 %v5222, %v3831
      %v5224 = vmax.f32 %v5223, %v3837
      %v5225 = vmax.f32 %v5224, %v3841
      %v5226 = vmax.f32 %v5225, %v3847
      %v5227 = vmax.f32 %v5226, %v3851
      %v5228 = vmax.f32 %v5227, %v3857
      %v5229 = vmax.f32 %v5228, %v3861
      %v5230 = vmax.f32 %v5229, %v3867
      %v5231 = vmax.f32 %v5230, %v3871
      %v5232 = vmax.f32 %v5231, %v3877
      %v5233 = vmax.f32 %v5232, %v3881
      %v5234 = vmax.f32 %v5233, %v3887
      %v5235 = vmax.f32 %v5234, %v3891
      %v5236 = vmax.f32 %v5235, %v3897
      %v5237 = vmax.f32 %v5236, %v3901
      %v5238 = vmax.f32 %v5237, %v3907
      %v5239 = vmax.f32 %v5238, %v3911
      %v5240 = vmax.f32 %v5239, %v3917
      %v5241 = vmax.f32 %v5240, %v3921
      %v5242 = vmax.f32 %v5241, %v3927
      %v5243 = vmax.f32 %v5242, %v3931
      %v5244 = vmax.f32 %v5243, %v3937
      %v5245 = vmax.f32 %v5244, %v3941
      %v5246 = vmax.f32 %v5245, %v3947
      %v5247 = vmax.f32 %v5246, %v3951
      %v5248 = vmax.f32 %v5247, %v3957
      %v5249 = vmax.f32 %v5248, %v3961
      %v5250 = vmax.f32 %v5249, %v3967
      %v5251 = vmax.f32 %v5250, %v3971
      %v5252 = vmax.f32 %v5251, %v3977
      %v5253 = vmax.f32 %v5252, %v3981
      %v5254 = vmax.f32 %v5253, %v3987
      %v5255 = vmax.f32 %v5254, %v3991
      %v5256 = vmax.f32 %v5255, %v3997
      %v5257 = vmax.f32 %v5256, %v4001
      %v5258 = vmax.f32 %v5257, %v4007
      %v5259 = vmax.f32 %v5258, %v4011
      %v5260 = vmax.f32 %v5259, %v4017
      %v5261 = vmax.f32 %v5260, %v4021
      %v5262 = vmax.f32 %v5261, %v4027
      %v5263 = vmax.f32 %v5262, %v4031
      %v5264 = vmax.f32 %v5263, %v4037
      %v5265 = vmax.f32 %v5264, %v4041
      %v5266 = vmax.f32 %v5265, %v4047
      %v5267 = vmax.f32 %v5266, %v4051
      %v5268 = vmax.f32 %v5267, %v4057
      %v5269 = vmax.f32 %v5268, %v4061
      %v5270 = vmax.f32 %v5269, %v4067
      %v5271 = vmax.f32 %v5270, %v4071
      %v5272 = vmax.f32 %v5271, %v4077
      %v5273 = vmax.f32 %v5272, %v4081
      %v5274 = vmax.f32 %v5273, %v4087
      %v5275 = vmax.f32 %v5274, %v4091
      %v5276 = vmax.f32 %v5275, %v4097
      %v5277 = vmax.f32 %v5276, %v4101
      %v5278 = vmax.f32 %v5277, %v4107
      %v5279 = vmax.f32 %v5278, %v4111
      %v5280 = vmax.f32 %v5279, %v4117
      %v5281 = vmax.f32 %v5280, %v4121
      %v5282 = vmax.f32 %v5281, %v4127
      %v5283 = vmax.f32 %v5282, %v4131
      %v5284 = vmax.f32 %v5283, %v4137
      %v5285 = vmax.f32 %v5284, %v4141
      %v5286 = vmax.f32 %v5285, %v4147
      %v5287 = vmax.f32 %v5286, %v4151
      %v5288 = vrot.slane %v5287, 4
      %v5289 = vmax.f32 %v5287, %v5288
      %v5290 = vrot.slane %v5289, 2
      %v5291 = vmax.f32 %v5289, %v5290
      %v5292 = vrot.slane %v5291, 1
      %v5293 = vmax.f32 %v5291, %v5292
      %v5294 = vmax.f32 %v4188, %v4192
      %v5295 = vmax.f32 %v5294, %v4198
      %v5296 = vmax.f32 %v5295, %v4202
      %v5297 = vmax.f32 %v5296, %v4208
      %v5298 = vmax.f32 %v5297, %v4212
      %v5299 = vmax.f32 %v5298, %v4218
      %v5300 = vmax.f32 %v5299, %v4222
      %v5301 = vmax.f32 %v5300, %v4228
      %v5302 = vmax.f32 %v5301, %v4232
      %v5303 = vmax.f32 %v5302, %v4238
      %v5304 = vmax.f32 %v5303, %v4242
      %v5305 = vmax.f32 %v5304, %v4248
      %v5306 = vmax.f32 %v5305, %v4252
      %v5307 = vmax.f32 %v5306, %v4258
      %v5308 = vmax.f32 %v5307, %v4262
      %v5309 = vmax.f32 %v5308, %v4268
      %v5310 = vmax.f32 %v5309, %v4272
      %v5311 = vmax.f32 %v5310, %v4278
      %v5312 = vmax.f32 %v5311, %v4282
      %v5313 = vmax.f32 %v5312, %v4288
      %v5314 = vmax.f32 %v5313, %v4292
      %v5315 = vmax.f32 %v5314, %v4298
      %v5316 = vmax.f32 %v5315, %v4302
      %v5317 = vmax.f32 %v5316, %v4308
      %v5318 = vmax.f32 %v5317, %v4312
      %v5319 = vmax.f32 %v5318, %v4318
      %v5320 = vmax.f32 %v5319, %v4322
      %v5321 = vmax.f32 %v5320, %v4328
      %v5322 = vmax.f32 %v5321, %v4332
      %v5323 = vmax.f32 %v5322, %v4338
      %v5324 = vmax.f32 %v5323, %v4342
      %v5325 = vmax.f32 %v5324, %v4348
      %v5326 = vmax.f32 %v5325, %v4352
      %v5327 = vmax.f32 %v5326, %v4358
      %v5328 = vmax.f32 %v5327, %v4362
      %v5329 = vmax.f32 %v5328, %v4368
      %v5330 = vmax.f32 %v5329, %v4372
      %v5331 = vmax.f32 %v5330, %v4378
      %v5332 = vmax.f32 %v5331, %v4382
      %v5333 = vmax.f32 %v5332, %v4388
      %v5334 = vmax.f32 %v5333, %v4392
      %v5335 = vmax.f32 %v5334, %v4398
      %v5336 = vmax.f32 %v5335, %v4402
      %v5337 = vmax.f32 %v5336, %v4408
      %v5338 = vmax.f32 %v5337, %v4412
      %v5339 = vmax.f32 %v5338, %v4418
      %v5340 = vmax.f32 %v5339, %v4422
      %v5341 = vmax.f32 %v5340, %v4428
      %v5342 = vmax.f32 %v5341, %v4432
      %v5343 = vmax.f32 %v5342, %v4438
      %v5344 = vmax.f32 %v5343, %v4442
      %v5345 = vmax.f32 %v5344, %v4448
      %v5346 = vmax.f32 %v5345, %v4452
      %v5347 = vmax.f32 %v5346, %v4458
      %v5348 = vmax.f32 %v5347, %v4462
      %v5349 = vmax.f32 %v5348, %v4468
      %v5350 = vmax.f32 %v5349, %v4472
      %v5351 = vmax.f32 %v5350, %v4478
      %v5352 = vmax.f32 %v5351, %v4482
      %v5353 = vmax.f32 %v5352, %v4488
      %v5354 = vmax.f32 %v5353, %v4492
      %v5355 = vmax.f32 %v5354, %v4498
      %v5356 = vmax.f32 %v5355, %v4502
      %v5357 = vmax.f32 %v5356, %v4508
      %v5358 = vmax.f32 %v5357, %v4512
      %v5359 = vmax.f32 %v5358, %v4518
      %v5360 = vmax.f32 %v5359, %v4522
      %v5361 = vmax.f32 %v5360, %v4528
      %v5362 = vmax.f32 %v5361, %v4532
      %v5363 = vmax.f32 %v5362, %v4538
      %v5364 = vmax.f32 %v5363, %v4542
      %v5365 = vmax.f32 %v5364, %v4548
      %v5366 = vmax.f32 %v5365, %v4552
      %v5367 = vmax.f32 %v5366, %v4558
      %v5368 = vmax.f32 %v5367, %v4562
      %v5369 = vmax.f32 %v5368, %v4568
      %v5370 = vmax.f32 %v5369, %v4572
      %v5371 = vmax.f32 %v5370, %v4578
      %v5372 = vmax.f32 %v5371, %v4582
      %v5373 = vmax.f32 %v5372, %v4588
      %v5374 = vmax.f32 %v5373, %v4592
      %v5375 = vmax.f32 %v5374, %v4598
      %v5376 = vmax.f32 %v5375, %v4602
      %v5377 = vmax.f32 %v5376, %v4608
      %v5378 = vmax.f32 %v5377, %v4612
      %v5379 = vmax.f32 %v5378, %v4618
      %v5380 = vmax.f32 %v5379, %v4622
      %v5381 = vmax.f32 %v5380, %v4628
      %v5382 = vmax.f32 %v5381, %v4632
      %v5383 = vmax.f32 %v5382, %v4638
      %v5384 = vmax.f32 %v5383, %v4642
      %v5385 = vmax.f32 %v5384, %v4648
      %v5386 = vmax.f32 %v5385, %v4652
      %v5387 = vmax.f32 %v5386, %v4658
      %v5388 = vmax.f32 %v5387, %v4662
      %v5389 = vmax.f32 %v5388, %v4668
      %v5390 = vmax.f32 %v5389, %v4672
      %v5391 = vrot.slane %v5390, 4
      %v5392 = vmax.f32 %v5390, %v5391
      %v5393 = vrot.slane %v5392, 2
      %v5394 = vmax.f32 %v5392, %v5393
      %v5395 = vrot.slane %v5394, 1
      %v5396 = vmax.f32 %v5394, %v5395
      %v5397 = vmax.f32 %v4190, %v4194
      %v5398 = vmax.f32 %v5397, %v4200
      %v5399 = vmax.f32 %v5398, %v4204
      %v5400 = vmax.f32 %v5399, %v4210
      %v5401 = vmax.f32 %v5400, %v4214
      %v5402 = vmax.f32 %v5401, %v4220
      %v5403 = vmax.f32 %v5402, %v4224
      %v5404 = vmax.f32 %v5403, %v4230
      %v5405 = vmax.f32 %v5404, %v4234
      %v5406 = vmax.f32 %v5405, %v4240
      %v5407 = vmax.f32 %v5406, %v4244
      %v5408 = vmax.f32 %v5407, %v4250
      %v5409 = vmax.f32 %v5408, %v4254
      %v5410 = vmax.f32 %v5409, %v4260
      %v5411 = vmax.f32 %v5410, %v4264
      %v5412 = vmax.f32 %v5411, %v4270
      %v5413 = vmax.f32 %v5412, %v4274
      %v5414 = vmax.f32 %v5413, %v4280
      %v5415 = vmax.f32 %v5414, %v4284
      %v5416 = vmax.f32 %v5415, %v4290
      %v5417 = vmax.f32 %v5416, %v4294
      %v5418 = vmax.f32 %v5417, %v4300
      %v5419 = vmax.f32 %v5418, %v4304
      %v5420 = vmax.f32 %v5419, %v4310
      %v5421 = vmax.f32 %v5420, %v4314
      %v5422 = vmax.f32 %v5421, %v4320
      %v5423 = vmax.f32 %v5422, %v4324
      %v5424 = vmax.f32 %v5423, %v4330
      %v5425 = vmax.f32 %v5424, %v4334
      %v5426 = vmax.f32 %v5425, %v4340
      %v5427 = vmax.f32 %v5426, %v4344
      %v5428 = vmax.f32 %v5427, %v4350
      %v5429 = vmax.f32 %v5428, %v4354
      %v5430 = vmax.f32 %v5429, %v4360
      %v5431 = vmax.f32 %v5430, %v4364
      %v5432 = vmax.f32 %v5431, %v4370
      %v5433 = vmax.f32 %v5432, %v4374
      %v5434 = vmax.f32 %v5433, %v4380
      %v5435 = vmax.f32 %v5434, %v4384
      %v5436 = vmax.f32 %v5435, %v4390
      %v5437 = vmax.f32 %v5436, %v4394
      %v5438 = vmax.f32 %v5437, %v4400
      %v5439 = vmax.f32 %v5438, %v4404
      %v5440 = vmax.f32 %v5439, %v4410
      %v5441 = vmax.f32 %v5440, %v4414
      %v5442 = vmax.f32 %v5441, %v4420
      %v5443 = vmax.f32 %v5442, %v4424
      %v5444 = vmax.f32 %v5443, %v4430
      %v5445 = vmax.f32 %v5444, %v4434
      %v5446 = vmax.f32 %v5445, %v4440
      %v5447 = vmax.f32 %v5446, %v4444
      %v5448 = vmax.f32 %v5447, %v4450
      %v5449 = vmax.f32 %v5448, %v4454
      %v5450 = vmax.f32 %v5449, %v4460
      %v5451 = vmax.f32 %v5450, %v4464
      %v5452 = vmax.f32 %v5451, %v4470
      %v5453 = vmax.f32 %v5452, %v4474
      %v5454 = vmax.f32 %v5453, %v4480
      %v5455 = vmax.f32 %v5454, %v4484
      %v5456 = vmax.f32 %v5455, %v4490
      %v5457 = vmax.f32 %v5456, %v4494
      %v5458 = vmax.f32 %v5457, %v4500
      %v5459 = vmax.f32 %v5458, %v4504
      %v5460 = vmax.f32 %v5459, %v4510
      %v5461 = vmax.f32 %v5460, %v4514
      %v5462 = vmax.f32 %v5461, %v4520
      %v5463 = vmax.f32 %v5462, %v4524
      %v5464 = vmax.f32 %v5463, %v4530
      %v5465 = vmax.f32 %v5464, %v4534
      %v5466 = vmax.f32 %v5465, %v4540
      %v5467 = vmax.f32 %v5466, %v4544
      %v5468 = vmax.f32 %v5467, %v4550
      %v5469 = vmax.f32 %v5468, %v4554
      %v5470 = vmax.f32 %v5469, %v4560
      %v5471 = vmax.f32 %v5470, %v4564
      %v5472 = vmax.f32 %v5471, %v4570
      %v5473 = vmax.f32 %v5472, %v4574
      %v5474 = vmax.f32 %v5473, %v4580
      %v5475 = vmax.f32 %v5474, %v4584
      %v5476 = vmax.f32 %v5475, %v4590
      %v5477 = vmax.f32 %v5476, %v4594
      %v5478 = vmax.f32 %v5477, %v4600
      %v5479 = vmax.f32 %v5478, %v4604
      %v5480 = vmax.f32 %v5479, %v4610
      %v5481 = vmax.f32 %v5480, %v4614
      %v5482 = vmax.f32 %v5481, %v4620
      %v5483 = vmax.f32 %v5482, %v4624
      %v5484 = vmax.f32 %v5483, %v4630
      %v5485 = vmax.f32 %v5484, %v4634
      %v5486 = vmax.f32 %v5485, %v4640
      %v5487 = vmax.f32 %v5486, %v4644
      %v5488 = vmax.f32 %v5487, %v4650
      %v5489 = vmax.f32 %v5488, %v4654
      %v5490 = vmax.f32 %v5489, %v4660
      %v5491 = vmax.f32 %v5490, %v4664
      %v5492 = vmax.f32 %v5491, %v4670
      %v5493 = vmax.f32 %v5492, %v4674
      %v5494 = vrot.slane %v5493, 4
      %v5495 = vmax.f32 %v5493, %v5494
      %v5496 = vrot.slane %v5495, 2
      %v5497 = vmax.f32 %v5495, %v5496
      %v5498 = vrot.slane %v5497, 1
      %v5499 = vmax.f32 %v5497, %v5498
      %v5508 = vcombine.low %v4778, %v4881
      %v5509 = vcombine.low %v4984, %v5087
      %v5510 = vcombine.low %v5190, %v5293
      %v5511 = vcombine.low %v5396, %v5499
      %v5513 = vunpack.c.l.s4 1966171168
      %v5514 = vunpack.c.0.s8 %v5513
      %v5515 = vlaneseq
      %v5516 = vshrl.u32 %v5515, 7
      %v5517 = vsub.s32 %v5514, %v5516
      %v5518 = vrot.slane %v5508, %v5517
      %v5520 = vunpack.c.l.s4 1966171168
      %v5521 = vunpack.c.0.s8 %v5520
      %v5522 = vlaneseq
      %v5523 = vshrl.u32 %v5522, 7
      %v5524 = vsub.s32 %v5521, %v5523
      %v5525 = vrot.slane %v5509, %v5524
      %v5527 = vunpack.c.l.s4 1966171168
      %v5528 = vunpack.c.0.s8 %v5527
      %v5529 = vlaneseq
      %v5530 = vshrl.u32 %v5529, 7
      %v5531 = vsub.s32 %v5528, %v5530
      %v5532 = vrot.slane %v5510, %v5531
      %v5534 = vunpack.c.l.s4 1966171168
      %v5535 = vunpack.c.0.s8 %v5534
      %v5536 = vlaneseq
      %v5537 = vshrl.u32 %v5536, 7
      %v5538 = vsub.s32 %v5535, %v5537
      %v5539 = vrot.slane %v5511, %v5538
      %v5540 = vcombine.low %v5518, %v5525
      %v5541 = vcombine.low %v5532, %v5539
      %v5543 = vunpack.c.l.s4 1966171168
      %v5544 = vunpack.c.0.s8 %v5543
      %v5545 = vlaneseq
      %v5546 = vshrl.u32 %v5545, 7
      %v5547 = vsub.s32 %v5544, %v5546
      %v5548 = vrot.slane %v5540, %v5547
      %v5550 = vunpack.c.l.s4 1966171168
      %v5551 = vunpack.c.0.s8 %v5550
      %v5552 = vlaneseq
      %v5553 = vshrl.u32 %v5552, 7
      %v5554 = vsub.s32 %v5551, %v5553
      %v5555 = vrot.slane %v5541, %v5554
      %v5556 = vcombine.low %v5548, %v5555
      %5558 = vst [vmem:[%s290] sm:$0xff] %v5556
      %p5559 = scmp.lt.s32.totalorder %s18, 1
      %s5560 = scalar_select %p5559, %s18, 1
      %s5561 = smul.addr %s5560, 8
      %s5562 = scalar_lea.vmem %s7, %s5561
      // Predicated region
      $region49: #{hort_forward.2} parent=47 // pred_check
        %p5563 = pneg %p193
      $region50: #{hort_forward.2} parent=47 // pred_check_branch
        %5565 = sbr.rel (%p5563) target = $region52
      $region51: #{hort_forward.2} parent=47 // pred_region
        _
      $region52: #{hort_forward.2} parent=47 // pred_fallthru
        _
    $region48: #{hort_forward.2} parent=5 // pred_fallthru
      _
    %p5566 = scmp.le.s32.totalorder 2, %s13
    // Predicated region
    $region53: #{hort_forward.2} parent=5 // pred_check
      %p5567 = pneg %p5566
    $region54: #{hort_forward.2} parent=5 // pred_check_branch
      %5569 = sbr.rel (%p5567) target = $region56
    $region55: #{hort_forward.2} parent=5 // pred_region
      %s5570 = ssub.s32 %s13, 2
      // Predicated region
      $region57: #{hort_forward.2} parent=55 // pred_check
        %p5571 = pneg %p199
      $region58: #{hort_forward.2} parent=55 // pred_check_branch
        %5573 = sbr.rel (%p5571) target = $region60
      $region59: #{hort_forward.2} parent=55 // pred_region
        %p5574 = scmp.lt.s32.totalorder %s19, 1
        %s5575 = scalar_select %p5574, %s19, 1
        %s5576 = smul.addr %s5575, 8
        %s5577 = scalar_lea.vmem %s7, %s5576
      $region60: #{hort_forward.2} parent=55 // pred_fallthru
        _
    $region56: #{hort_forward.2} parent=5 // pred_fallthru
      _
  $region6: #{hort_forward.2} parent=0 // loop_footer
    %s17 = sadd.s32 1, %s13
  $region7: #{hort_forward.2} parent=0 // loop_footer_branch
    %12 = sbr.rel target = $region3
  $region8: #{hort_forward.2} parent=0 // loop_exit
    _

</llo_original>
